<compile_context>
chip_gen: v5e
topology: v5e:2x2
jax: 0.10.0
libtpu: 0.0.40
codegen_flags: <defaults>
</compile_context>

<pallas_src>
import functools

import jax
import jax.numpy as jnp
from jax.experimental import pallas as pl
from jax.experimental.pallas import tpu as pltpu

LANE = 128
EPS = 1e-5


# ----------------------------------------------------------------------------
# Pallas kernels
# ----------------------------------------------------------------------------

def _conv_stats_kernel(a_ref, w_ref, y_ref, ps_ref):
    # One M-tile of the im2col'd convolution: y = A @ W on the MXU (bf16 in,
    # f32 accumulate), plus per-channel partial sum / sum-of-squares for the
    # following training-mode BatchNorm (stats fused into the matmul epilogue).
    y = jnp.dot(a_ref[...], w_ref[...], preferred_element_type=jnp.float32)
    y_ref[...] = y
    s = jnp.sum(y, axis=0, keepdims=True)        # (1, Cp)
    sq = jnp.sum(y * y, axis=0, keepdims=True)   # (1, Cp)
    ps_ref[0] = jnp.concatenate([s, sq], axis=0)  # (2, Cp) partial stats


def _bn_apply_kernel(y_ref, stats_ref, g_ref, b_ref, *rest,
                     inv_m, relu, residual):
    # Training-mode BatchNorm apply on one row tile: normalize with the batch
    # stats, scale/shift, then optional ReLU or fused residual add.
    if residual:
        r_ref, o_ref = rest
    else:
        (o_ref,) = rest
    mean = stats_ref[0:1, :] * inv_m
    var = jnp.maximum(stats_ref[1:2, :] * inv_m - mean * mean, 0.0)
    scale = jax.lax.rsqrt(var + EPS) * g_ref[...]
    shift = b_ref[...] - mean * scale
    y = y_ref[...] * scale + shift
    if relu:
        y = jnp.maximum(y, 0.0)
    if residual:
        y = y + r_ref[...]
    o_ref[...] = y


# ----------------------------------------------------------------------------
# Pallas call wrappers
# ----------------------------------------------------------------------------

def _pad_axis(x, axis, mult):
    pad = (-x.shape[axis]) % mult
    if pad == 0:
        return x
    widths = [(0, 0)] * x.ndim
    widths[axis] = (0, pad)
    return jnp.pad(x, widths)


def _row_tile(m_padded):
    # Largest row tile in {256, 128} dividing the (128-padded) row count.
    # 256 keeps double-buffered A tiles comfortably under v7x's 64 MiB VMEM
    # even for the largest K here, while amortizing per-step overhead.
    for t in (256, 128):
        if m_padded % t == 0:
            return t
    return m_padded


def pallas_conv_matmul_stats(a_bf16, w_bf16):
    """a: (Mp, Kp) bf16, w: (Kp, Cp) bf16 -> (y f32 (Mp, Cp), stats f32 (2, Cp))."""
    mp, kp = a_bf16.shape
    cp = w_bf16.shape[1]
    tm = _row_tile(mp)
    nt = mp // tm
    y, partial = pl.pallas_call(
        _conv_stats_kernel,
        out_shape=(jax.ShapeDtypeStruct((mp, cp), jnp.float32),
                   jax.ShapeDtypeStruct((nt, 2, cp), jnp.float32)),
        grid=(nt,),
        in_specs=[pl.BlockSpec((tm, kp), lambda i: (i, 0)),
                  pl.BlockSpec((kp, cp), lambda i: (0, 0))],
        out_specs=(pl.BlockSpec((tm, cp), lambda i: (i, 0)),
                   pl.BlockSpec((1, 2, cp), lambda i: (i, 0, 0))),
        compiler_params=pltpu.CompilerParams(
            dimension_semantics=("parallel",)),
    )(a_bf16, w_bf16)
    # Tiny (nt, 2, Cp) cross-tile reduce; keeps the matmul grid axis fully
    # parallel (v7x megacore-shardable) instead of an "arbitrary" accumulator.
    stats = jnp.sum(partial, axis=0)
    return y, stats


def pallas_bn_apply(y, stats, gamma_p, beta_p, true_m, *, relu, residual=None):
    mp, cp = y.shape
    tm = _row_tile(mp)
    nt = mp // tm
    kernel = functools.partial(_bn_apply_kernel, inv_m=1.0 / float(true_m),
                               relu=relu, residual=residual is not None)
    args = [y, stats, gamma_p.reshape(1, cp), beta_p.reshape(1, cp)]
    in_specs = [pl.BlockSpec((tm, cp), lambda i: (i, 0)),
                pl.BlockSpec((2, cp), lambda i: (0, 0)),
                pl.BlockSpec((1, cp), lambda i: (0, 0)),
                pl.BlockSpec((1, cp), lambda i: (0, 0))]
    if residual is not None:
        args.append(residual)
        in_specs.append(pl.BlockSpec((tm, cp), lambda i: (i, 0)))
    return pl.pallas_call(
        kernel,
        out_shape=jax.ShapeDtypeStruct((mp, cp), jnp.float32),
        grid=(nt,),
        in_specs=in_specs,
        out_specs=pl.BlockSpec((tm, cp), lambda i: (i, 0)),
        compiler_params=pltpu.CompilerParams(
            dimension_semantics=("parallel",)),
    )(*args)


# ----------------------------------------------------------------------------
# Conv glue (reflection pad + im2col feeding the Pallas matmul)
# ----------------------------------------------------------------------------

def _im2col_3x3(xp_nhwc):
    # xp is reflection-padded NHWC; returns (N*H*W, 9*C) patches, tap order
    # (dy, dx, cin) to match the weight reordering below.
    n, hp, wp, c = xp_nhwc.shape
    h, w = hp - 2, wp - 2
    cols = [xp_nhwc[:, dy:dy + h, dx:dx + w, :]
            for dy in range(3) for dx in range(3)]
    return jnp.concatenate(cols, axis=-1).reshape(n * h * w, 9 * c)


def conv3x3_bn_stats(x_nhwc, w_oihw):
    """ReflectionPad2d(1) + Conv2d(3x3, stride 1) as a Pallas MXU matmul that
    also emits per-channel sum / sumsq for the following BatchNorm.
    Conv bias is omitted: under training-mode BN a per-channel constant is
    exactly cancelled by the per-batch mean subtraction."""
    n, h, w, c = x_nhwc.shape
    cout = w_oihw.shape[0]
    m = n * h * w

    xp = jnp.pad(x_nhwc, ((0, 0), (1, 1), (1, 1), (0, 0)), mode="reflect")
    a = _im2col_3x3(xp)                                            # (M, 9C)
    w2 = jnp.transpose(w_oihw, (2, 3, 1, 0)).reshape(9 * c, cout)  # (9C, Cout)

    # bf16 MXU inputs; pad M / K / Cout to 128 so feeds/stores are lane-dense.
    a = _pad_axis(_pad_axis(a.astype(jnp.bfloat16), 0, LANE), 1, LANE)
    w2 = _pad_axis(_pad_axis(w2.astype(jnp.bfloat16), 0, LANE), 1, LANE)

    y, stats = pallas_conv_matmul_stats(a, w2)
    return y, stats, m


# ----------------------------------------------------------------------------
# ResidualBlock forward
# ----------------------------------------------------------------------------

def residual_block_forward(params, x_nchw):
    x = jnp.transpose(x_nchw, (0, 2, 3, 1)).astype(jnp.float32)   # NCHW -> NHWC
    n, h, w, c = x.shape
    m = n * h * w

    def pad_c(vec):
        return _pad_axis(vec, 0, LANE)

    # conv1 (stats fused) -> BN apply + ReLU
    y1, s1, _ = conv3x3_bn_stats(x, params["w1"])
    h1 = pallas_bn_apply(y1, s1, pad_c(params["g1"]), pad_c(params["b1"]),
                         m, relu=True)
    h1 = h1[:m, :c].reshape(n, h, w, c)

    # conv2 (stats fused) -> BN apply + residual add (fused)
    y2, s2, _ = conv3x3_bn_stats(h1, params["w2"])
    res = _pad_axis(_pad_axis(x.reshape(m, c), 0, LANE), 1, LANE)
    out = pallas_bn_apply(y2, s2, pad_c(params["g2"]), pad_c(params["b2"]),
                          m, relu=False, residual=res)
    out = out[:m, :c].reshape(n, h, w, c)

    return jnp.transpose(out, (0, 3, 1, 2))                       # NHWC -> NCHW


# ----------------------------------------------------------------------------
# Params, pure-JAX reference, and self-test
# ----------------------------------------------------------------------------

def init_params(key, in_features):
    ks = jax.random.split(key, 6)
    bound = 1.0 / float((in_features * 9) ** 0.5)

    def conv_w(kk):
        return jax.random.uniform(kk, (in_features, in_features, 3, 3),
                                  jnp.float32, -bound, bound)

    # NOTE: nn.Conv2d biases exist in the PyTorch module but are mathematically
    # inert under training-mode BatchNorm, so they are not created / applied.
    return {
        "w1": conv_w(ks[0]),
        "w2": conv_w(ks[1]),
        "g1": 1.0 + 0.1 * jax.random.normal(ks[2], (in_features,), jnp.float32),
        "b1": 0.1 * jax.random.normal(ks[3], (in_features,), jnp.float32),
        "g2": 1.0 + 0.1 * jax.random.normal(ks[4], (in_features,), jnp.float32),
        "b2": 0.1 * jax.random.normal(ks[5], (in_features,), jnp.float32),
    }


def reference_forward(params, x_nchw):
    # Pure-JAX f32 reference (the Pallas path runs its matmuls in bf16).
    x = jnp.transpose(x_nchw, (0, 2, 3, 1)).astype(jnp.float32)

    def conv_bn(t, w_oihw, g, b, relu):
        tp = jnp.pad(t, ((0, 0), (1, 1), (1, 1), (0, 0)), mode="reflect")
        y = jax.lax.conv_general_dilated(
            tp, jnp.transpose(w_oihw, (2, 3, 1, 0)), (1, 1), "VALID",
            dimension_numbers=("NHWC", "HWIO", "NHWC"))
        mu = jnp.mean(y, axis=(0, 1, 2), keepdims=True)
        var = jnp.mean((y - mu) ** 2, axis=(0, 1, 2), keepdims=True)
        y = (y - mu) * jax.lax.rsqrt(var + EPS) * g + b
        return jnp.maximum(y, 0.0) if relu else y

    t = conv_bn(x, params["w1"], params["g1"], params["b1"], True)
    t = conv_bn(t, params["w2"], params["g2"], params["b2"], False)
    return jnp.transpose(x + t, (0, 3, 1, 2))


if __name__ == "__main__":
    key = jax.random.PRNGKey(0)
    pkey, xkey = jax.random.split(key)

    in_features = 128                     # typical CycleGAN residual-block width
    params = init_params(pkey, in_features)
    x = jax.random.normal(xkey, (2, in_features, 16, 16), jnp.float32)  # NCHW

    fwd = jax.jit(residual_block_forward)
    y = jax.block_until_ready(fwd(params, x))

    assert y.shape == x.shape, y.shape
    assert bool(jnp.all(jnp.isfinite(y)))

    y_ref = reference_forward(params, x)
    err = float(jnp.max(jnp.abs(y - y_ref)))
    assert err < 0.1, f"max abs err vs f32 reference: {err}"

    print("KERNEL_OK")
</pallas_src>

<mosaic_0001>
module attributes {stable_mosaic.version = 11 : i64} {
  func.func @_bn_apply_kernel(%arg0: i32, %arg1: memref<256x128xf32, #tpu.memory_space<vmem>>, %arg2: memref<2x128xf32, #tpu.memory_space<vmem>>, %arg3: memref<1x128xf32, #tpu.memory_space<vmem>>, %arg4: memref<1x128xf32, #tpu.memory_space<vmem>>, %arg5: memref<256x128xf32, #tpu.memory_space<vmem>>) attributes {dimension_semantics = [#tpu.dimension_semantics<parallel>], iteration_bounds = array<i64: 2>, scalar_prefetch = 0 : i64, scratch_operands = 0 : i64, tpu.core_type = #tpu.core_type<tc>, window_params = [{transform_indices = @transform_0, window_bounds = array<i64: 256, 128>}, {pipeline_mode = #tpu.pipeline_mode<synchronous>, transform_indices = @transform_1, window_bounds = array<i64: 2, 128>}, {pipeline_mode = #tpu.pipeline_mode<synchronous>, transform_indices = @transform_2, window_bounds = array<i64: 1, 128>}, {pipeline_mode = #tpu.pipeline_mode<synchronous>, transform_indices = @transform_3, window_bounds = array<i64: 1, 128>}, {transform_indices = @transform_4, window_bounds = array<i64: 256, 128>}]} {
    %c0 = arith.constant 0 : index
    %c0_0 = arith.constant 0 : index
    %0 = vector.load %arg2[%c0, %c0_0] : memref<2x128xf32, #tpu.memory_space<vmem>>, vector<1x128xf32>
    %cst = arith.constant 0.001953125 : f32
    %1 = vector.broadcast %cst : f32 to vector<1x128xf32>
    %2 = arith.mulf %0, %1 : vector<1x128xf32>
    %c1 = arith.constant 1 : index
    %c0_1 = arith.constant 0 : index
    %3 = vector.load %arg2[%c1, %c0_1] : memref<2x128xf32, #tpu.memory_space<vmem>>, vector<1x128xf32>
    %cst_2 = arith.constant 0.001953125 : f32
    %4 = vector.broadcast %cst_2 : f32 to vector<1x128xf32>
    %5 = arith.mulf %3, %4 : vector<1x128xf32>
    %6 = arith.mulf %2, %2 : vector<1x128xf32>
    %7 = arith.subf %5, %6 : vector<1x128xf32>
    %cst_3 = arith.constant 0.000000e+00 : f32
    %8 = vector.broadcast %cst_3 : f32 to vector<1x128xf32>
    %9 = arith.maximumf %7, %8 : vector<1x128xf32>
    %cst_4 = arith.constant 9.99999974E-6 : f32
    %10 = vector.broadcast %cst_4 : f32 to vector<1x128xf32>
    %11 = arith.addf %9, %10 : vector<1x128xf32>
    %12 = math.rsqrt %11 : vector<1x128xf32>
    %c0_5 = arith.constant 0 : index
    %c0_6 = arith.constant 0 : index
    %13 = vector.load %arg3[%c0_5, %c0_6] : memref<1x128xf32, #tpu.memory_space<vmem>>, vector<1x128xf32>
    %14 = arith.mulf %12, %13 : vector<1x128xf32>
    %c0_7 = arith.constant 0 : index
    %c0_8 = arith.constant 0 : index
    %15 = vector.load %arg4[%c0_7, %c0_8] : memref<1x128xf32, #tpu.memory_space<vmem>>, vector<1x128xf32>
    %16 = arith.mulf %2, %14 : vector<1x128xf32>
    %17 = arith.subf %15, %16 : vector<1x128xf32>
    %c0_9 = arith.constant 0 : index
    %c0_10 = arith.constant 0 : index
    %18 = vector.load %arg1[%c0_9, %c0_10] : memref<256x128xf32, #tpu.memory_space<vmem>>, vector<256x128xf32>
    %19 = vector.broadcast %14 : vector<1x128xf32> to vector<256x128xf32>
    %20 = arith.mulf %18, %19 : vector<256x128xf32>
    %21 = vector.broadcast %17 : vector<1x128xf32> to vector<256x128xf32>
    %22 = arith.addf %20, %21 : vector<256x128xf32>
    %cst_11 = arith.constant 0.000000e+00 : f32
    %23 = vector.broadcast %cst_11 : f32 to vector<256x128xf32>
    %24 = arith.maximumf %22, %23 : vector<256x128xf32>
    %c0_12 = arith.constant 0 : index
    %c0_13 = arith.constant 0 : index
    %25 = vector.load %arg5[%c0_12, %c0_13] : memref<256x128xf32, #tpu.memory_space<vmem>>, vector<256x128xf32>
    tpu.vector_store %arg5[%c0_12, %c0_13], %24 {strides = array<i32>} : memref<256x128xf32, #tpu.memory_space<vmem>>, vector<256x128xf32>,
    return
  }
  func.func @transform_0(%arg0: i32) -> (i32, i32) {
    %c0_i32 = arith.constant 0 : i32
    %c0_i32_0 = arith.constant 0 : i32
    return %arg0, %c0_i32 : i32, i32
  }
  func.func @transform_1(%arg0: i32) -> (i32, i32) {
    %c0_i32 = arith.constant 0 : i32
    %c0_i32_0 = arith.constant 0 : i32
    %c0_i32_1 = arith.constant 0 : i32
    return %c0_i32, %c0_i32_0 : i32, i32
  }
  func.func @transform_2(%arg0: i32) -> (i32, i32) {
    %c0_i32 = arith.constant 0 : i32
    %c0_i32_0 = arith.constant 0 : i32
    %c0_i32_1 = arith.constant 0 : i32
    return %c0_i32, %c0_i32_0 : i32, i32
  }
  func.func @transform_3(%arg0: i32) -> (i32, i32) {
    %c0_i32 = arith.constant 0 : i32
    %c0_i32_0 = arith.constant 0 : i32
    %c0_i32_1 = arith.constant 0 : i32
    return %c0_i32, %c0_i32_0 : i32, i32
  }
  func.func @transform_4(%arg0: i32) -> (i32, i32) {
    %c0_i32 = arith.constant 0 : i32
    %c0_i32_0 = arith.constant 0 : i32
    return %arg0, %c0_i32 : i32, i32
  }
}

module attributes {stable_mosaic.version = 11 : i64} {
  func.func @_conv_stats_kernel(%arg0: i32, %arg1: memref<256x1152xbf16, #tpu.memory_space<vmem>>, %arg2: memref<1152x128xbf16, #tpu.memory_space<vmem>>, %arg3: memref<256x128xf32, #tpu.memory_space<vmem>>, %arg4: memref<1x2x128xf32, #tpu.memory_space<vmem>>) attributes {dimension_semantics = [#tpu.dimension_semantics<parallel>], iteration_bounds = array<i64: 2>, scalar_prefetch = 0 : i64, scratch_operands = 0 : i64, tpu.core_type = #tpu.core_type<tc>, window_params = [{transform_indices = @transform_0, window_bounds = array<i64: 256, 1152>}, {pipeline_mode = #tpu.pipeline_mode<synchronous>, transform_indices = @transform_1, window_bounds = array<i64: 1152, 128>}, {transform_indices = @transform_2, window_bounds = array<i64: 256, 128>}, {transform_indices = @transform_3, window_bounds = array<i64: 1, 2, 128>}]} {
    %c0 = arith.constant 0 : index
    %c0_0 = arith.constant 0 : index
    %0 = vector.load %arg1[%c0, %c0_0] : memref<256x1152xbf16, #tpu.memory_space<vmem>>, vector<256x1152xbf16>
    %c0_1 = arith.constant 0 : index
    %c0_2 = arith.constant 0 : index
    %1 = vector.load %arg2[%c0_1, %c0_2] : memref<1152x128xbf16, #tpu.memory_space<vmem>>, vector<1152x128xbf16>
    %cst = arith.constant dense<0.000000e+00> : vector<256x128xf32>
    %2 = tpu.matmul %0, %1, %cst {dimension_numbers = #tpu.dot_dimension_numbers<[1], [0], [0], [1], [0, 0, 1, 1], [], []>} : vector<256x1152xbf16>, vector<1152x128xbf16>, vector<256x128xf32> -> vector<256x128xf32>
    %c0_3 = arith.constant 0 : index
    %c0_4 = arith.constant 0 : index
    %3 = vector.load %arg3[%c0_3, %c0_4] : memref<256x128xf32, #tpu.memory_space<vmem>>, vector<256x128xf32>
    tpu.vector_store %arg3[%c0_3, %c0_4], %2 {strides = array<i32>} : memref<256x128xf32, #tpu.memory_space<vmem>>, vector<256x128xf32>,
    %cst_5 = arith.constant dense<0.000000e+00> : vector<128xf32>
    %4 = vector.multi_reduction <add>, %2, %cst_5 [0] : vector<256x128xf32> to vector<128xf32>
    %5 = vector.shape_cast %4 : vector<128xf32> to vector<1x128xf32>
    %6 = arith.mulf %2, %2 : vector<256x128xf32>
    %cst_6 = arith.constant dense<0.000000e+00> : vector<128xf32>
    %7 = vector.multi_reduction <add>, %6, %cst_6 [0] : vector<256x128xf32> to vector<128xf32>
    %8 = vector.shape_cast %7 : vector<128xf32> to vector<1x128xf32>
    %9 = tpu.concatenate %5, %8 in 0 : vector<1x128xf32>, vector<1x128xf32> -> vector<2x128xf32>
    %c0_7 = arith.constant 0 : index
    %c0_8 = arith.constant 0 : index
    %c0_9 = arith.constant 0 : index
    %10 = vector.load %arg4[%c0_7, %c0_8, %c0_9] : memref<1x2x128xf32, #tpu.memory_space<vmem>>, vector<1x2x128xf32>
    %11 = vector.shape_cast %10 : vector<1x2x128xf32> to vector<2x128xf32>
    %12 = vector.shape_cast %9 : vector<2x128xf32> to vector<1x2x128xf32>
    tpu.vector_store %arg4[%c0_7, %c0_8, %c0_9], %12 {strides = array<i32>} : memref<1x2x128xf32, #tpu.memory_space<vmem>>, vector<1x2x128xf32>,
    return
  }
  func.func @transform_0(%arg0: i32) -> (i32, i32) {
    %c0_i32 = arith.constant 0 : i32
    %c0_i32_0 = arith.constant 0 : i32
    return %arg0, %c0_i32 : i32, i32
  }
  func.func @transform_1(%arg0: i32) -> (i32, i32) {
    %c0_i32 = arith.constant 0 : i32
    %c0_i32_0 = arith.constant 0 : i32
    %c0_i32_1 = arith.constant 0 : i32
    return %c0_i32, %c0_i32_0 : i32, i32
  }
  func.func @transform_2(%arg0: i32) -> (i32, i32) {
    %c0_i32 = arith.constant 0 : i32
    %c0_i32_0 = arith.constant 0 : i32
    return %arg0, %c0_i32 : i32, i32
  }
  func.func @transform_3(%arg0: i32) -> (i32, i32, i32) {
    %c0_i32 = arith.constant 0 : i32
    %c0_i32_0 = arith.constant 0 : i32
    %c0_i32_1 = arith.constant 0 : i32
    return %arg0, %c0_i32, %c0_i32_0 : i32, i32, i32
  }
}

module attributes {stable_mosaic.version = 11 : i64} {
  func.func @_bn_apply_kernel(%arg0: i32, %arg1: memref<256x128xf32, #tpu.memory_space<vmem>>, %arg2: memref<2x128xf32, #tpu.memory_space<vmem>>, %arg3: memref<1x128xf32, #tpu.memory_space<vmem>>, %arg4: memref<1x128xf32, #tpu.memory_space<vmem>>, %arg5: memref<256x128xf32, #tpu.memory_space<vmem>>, %arg6: memref<256x128xf32, #tpu.memory_space<vmem>>) attributes {dimension_semantics = [#tpu.dimension_semantics<parallel>], iteration_bounds = array<i64: 2>, scalar_prefetch = 0 : i64, scratch_operands = 0 : i64, tpu.core_type = #tpu.core_type<tc>, window_params = [{transform_indices = @transform_0, window_bounds = array<i64: 256, 128>}, {pipeline_mode = #tpu.pipeline_mode<synchronous>, transform_indices = @transform_1, window_bounds = array<i64: 2, 128>}, {pipeline_mode = #tpu.pipeline_mode<synchronous>, transform_indices = @transform_2, window_bounds = array<i64: 1, 128>}, {pipeline_mode = #tpu.pipeline_mode<synchronous>, transform_indices = @transform_3, window_bounds = array<i64: 1, 128>}, {transform_indices = @transform_4, window_bounds = array<i64: 256, 128>}, {transform_indices = @transform_5, window_bounds = array<i64: 256, 128>}]} {
    %c0 = arith.constant 0 : index
    %c0_0 = arith.constant 0 : index
    %0 = vector.load %arg2[%c0, %c0_0] : memref<2x128xf32, #tpu.memory_space<vmem>>, vector<1x128xf32>
    %cst = arith.constant 0.001953125 : f32
    %1 = vector.broadcast %cst : f32 to vector<1x128xf32>
    %2 = arith.mulf %0, %1 : vector<1x128xf32>
    %c1 = arith.constant 1 : index
    %c0_1 = arith.constant 0 : index
    %3 = vector.load %arg2[%c1, %c0_1] : memref<2x128xf32, #tpu.memory_space<vmem>>, vector<1x128xf32>
    %cst_2 = arith.constant 0.001953125 : f32
    %4 = vector.broadcast %cst_2 : f32 to vector<1x128xf32>
    %5 = arith.mulf %3, %4 : vector<1x128xf32>
    %6 = arith.mulf %2, %2 : vector<1x128xf32>
    %7 = arith.subf %5, %6 : vector<1x128xf32>
    %cst_3 = arith.constant 0.000000e+00 : f32
    %8 = vector.broadcast %cst_3 : f32 to vector<1x128xf32>
    %9 = arith.maximumf %7, %8 : vector<1x128xf32>
    %cst_4 = arith.constant 9.99999974E-6 : f32
    %10 = vector.broadcast %cst_4 : f32 to vector<1x128xf32>
    %11 = arith.addf %9, %10 : vector<1x128xf32>
    %12 = math.rsqrt %11 : vector<1x128xf32>
    %c0_5 = arith.constant 0 : index
    %c0_6 = arith.constant 0 : index
    %13 = vector.load %arg3[%c0_5, %c0_6] : memref<1x128xf32, #tpu.memory_space<vmem>>, vector<1x128xf32>
    %14 = arith.mulf %12, %13 : vector<1x128xf32>
    %c0_7 = arith.constant 0 : index
    %c0_8 = arith.constant 0 : index
    %15 = vector.load %arg4[%c0_7, %c0_8] : memref<1x128xf32, #tpu.memory_space<vmem>>, vector<1x128xf32>
    %16 = arith.mulf %2, %14 : vector<1x128xf32>
    %17 = arith.subf %15, %16 : vector<1x128xf32>
    %c0_9 = arith.constant 0 : index
    %c0_10 = arith.constant 0 : index
    %18 = vector.load %arg1[%c0_9, %c0_10] : memref<256x128xf32, #tpu.memory_space<vmem>>, vector<256x128xf32>
    %19 = vector.broadcast %14 : vector<1x128xf32> to vector<256x128xf32>
    %20 = arith.mulf %18, %19 : vector<256x128xf32>
    %21 = vector.broadcast %17 : vector<1x128xf32> to vector<256x128xf32>
    %22 = arith.addf %20, %21 : vector<256x128xf32>
    %c0_11 = arith.constant 0 : index
    %c0_12 = arith.constant 0 : index
    %23 = vector.load %arg5[%c0_11, %c0_12] : memref<256x128xf32, #tpu.memory_space<vmem>>, vector<256x128xf32>
    %24 = arith.addf %22, %23 : vector<256x128xf32>
    %c0_13 = arith.constant 0 : index
    %c0_14 = arith.constant 0 : index
    %25 = vector.load %arg6[%c0_13, %c0_14] : memref<256x128xf32, #tpu.memory_space<vmem>>, vector<256x128xf32>
    tpu.vector_store %arg6[%c0_13, %c0_14], %24 {strides = array<i32>} : memref<256x128xf32, #tpu.memory_space<vmem>>, vector<256x128xf32>,
    return
  }
  func.func @transform_0(%arg0: i32) -> (i32, i32) {
    %c0_i32 = arith.constant 0 : i32
    %c0_i32_0 = arith.constant 0 : i32
    return %arg0, %c0_i32 : i32, i32
  }
  func.func @transform_1(%arg0: i32) -> (i32, i32) {
    %c0_i32 = arith.constant 0 : i32
    %c0_i32_0 = arith.constant 0 : i32
    %c0_i32_1 = arith.constant 0 : i32
    return %c0_i32, %c0_i32_0 : i32, i32
  }
  func.func @transform_2(%arg0: i32) -> (i32, i32) {
    %c0_i32 = arith.constant 0 : i32
    %c0_i32_0 = arith.constant 0 : i32
    %c0_i32_1 = arith.constant 0 : i32
    return %c0_i32, %c0_i32_0 : i32, i32
  }
  func.func @transform_3(%arg0: i32) -> (i32, i32) {
    %c0_i32 = arith.constant 0 : i32
    %c0_i32_0 = arith.constant 0 : i32
    %c0_i32_1 = arith.constant 0 : i32
    return %c0_i32, %c0_i32_0 : i32, i32
  }
  func.func @transform_4(%arg0: i32) -> (i32, i32) {
    %c0_i32 = arith.constant 0 : i32
    %c0_i32_0 = arith.constant 0 : i32
    return %arg0, %c0_i32 : i32, i32
  }
  func.func @transform_5(%arg0: i32) -> (i32, i32) {
    %c0_i32 = arith.constant 0 : i32
    %c0_i32_0 = arith.constant 0 : i32
    return %arg0, %c0_i32 : i32, i32
  }
}

</mosaic_0001>

<llo_original>
// kernel: residual_block_forward.5
$region0: #{residual_block_forward.5}
  #allocation0 [shape = 'u32[]', space=smem, size = 0x4, offset = 0x4, fixed_abs, tag = 'smem constant byte address 0x4 - core index']
  #allocation1 [shape = 'u32[72,128]{1,0:T(1,128)}', space=vmem, size = 0x9000, scoped, tag = 'internal scratch']
  %s0 = inlined_call_operand.vmem [shape: f32[512,128], index: 0, kind: input, shape index: {}]
  %s1 = inlined_call_operand.vmem [shape: f32[2,128], index: 1, kind: input, shape index: {}]
  %s2 = inlined_call_operand.vmem [shape: f32[1,128], index: 2, kind: input, shape index: {}]
  %s3 = inlined_call_operand.vmem [shape: f32[1,128], index: 3, kind: input, shape index: {}]
  %s4 = inlined_call_operand.vmem [shape: f32[512,128], index: 4, kind: output, shape index: {}]
  %s5 = sld [smem:[#allocation0]]
  $region49: #{residual_block_forward.5} parent=0
    _
  %s7 = ssub.s32 1, %s5
  %s8 = scalar_select 0, %s7, %s5
  loop: start=0, step=1, limit=4
  $region2: #{residual_block_forward.5} parent=0 // loop_pre_header
    _
  $region3: #{residual_block_forward.5} parent=0 // loop_header
    %s10 = sphi 0, %s14
    %p11 = scmp.ge.s32.totalorder %s10, 4
    %s20 = sphi 0, %s22
    %s23 = sphi 0, %s20
    %s24 = sphi 0, %s23
    %s40 = sphi 0, %s24
    %s44 = sphi 0, %s44
    %s46 = sphi 0, %s44
    %s47 = sphi 0, %s46
    %s61 = sphi 0, %s47
    %s65 = sphi 0, %s65
    %s67 = sphi 0, %s65
    %s68 = sphi 0, %s67
    %s82 = sphi 0, %s68
    %s86 = sphi 0, %s86
    %s88 = sphi 0, %s86
    %s89 = sphi 0, %s88
    %s103 = sphi 0, %s89
    %s109 = sphi 0, %s111
    %s112 = sphi 0, %s109
    %s113 = sphi 0, %s112
    %s129 = sphi 0, %s113
  $region4: #{residual_block_forward.5} parent=0 // loop_header_branch
    %13 = sbr.rel (%p11) target = $region8
  $region5: #{residual_block_forward.5} parent=0 // loop_body
    %s15 = ssub.s32 %s10, 1
    %s16 = ssub.s32 %s10, 2
    %s17 = sadd.s32 %s10, 1
    %s18 = ssub.s32 %s10, %s17
    %p19 = scmp.eq.s32.totalorder %s18, 0
    %s21 = sadd.s32 %s20, 1
    %s22 = scalar_select %p19, %s20, %s21
    %p25 = pneg %p19
    %p26 = scmp.eq.s32.totalorder %s10, 1
    %p27 = por %p25, %p26
    %p28 = scmp.ne.s32.totalorder %s20, %s23
    %p29 = scmp.eq.s32.totalorder %s10, 0
    %p30 = por %p28, %p29
    %p31 = scmp.ne.s32.totalorder %s20, %s23
    %p32 = scmp.eq.s32.totalorder %s15, 1
    %p33 = por %p31, %p32
    %p34 = scmp.ne.s32.totalorder %s23, %s24
    %p35 = scmp.eq.s32.totalorder %s15, 0
    %p36 = por %p34, %p35
    %p37 = scmp.ne.s32.totalorder %s23, %s24
    %p38 = scmp.eq.s32.totalorder %s16, 1
    %p39 = por %p37, %p38
    %p41 = scmp.ne.s32.totalorder %s24, %s40
    %p42 = scmp.eq.s32.totalorder %s16, 0
    %p43 = por %p41, %p42
    %s45 = sadd.s32 %s44, 1
    %p48 = scmp.eq.s32.totalorder %s10, 1
    %p49 = scmp.ne.s32.totalorder %s44, %s46
    %p50 = scmp.eq.s32.totalorder %s10, 0
    %p51 = por %p49, %p50
    %p52 = scmp.ne.s32.totalorder %s44, %s46
    %p53 = scmp.eq.s32.totalorder %s15, 1
    %p54 = por %p52, %p53
    %p55 = scmp.ne.s32.totalorder %s46, %s47
    %p56 = scmp.eq.s32.totalorder %s15, 0
    %p57 = por %p55, %p56
    %p58 = scmp.ne.s32.totalorder %s46, %s47
    %p59 = scmp.eq.s32.totalorder %s16, 1
    %p60 = por %p58, %p59
    %p62 = scmp.ne.s32.totalorder %s47, %s61
    %p63 = scmp.eq.s32.totalorder %s16, 0
    %p64 = por %p62, %p63
    %s66 = sadd.s32 %s65, 1
    %p69 = scmp.eq.s32.totalorder %s10, 1
    %p70 = scmp.ne.s32.totalorder %s65, %s67
    %p71 = scmp.eq.s32.totalorder %s10, 0
    %p72 = por %p70, %p71
    %p73 = scmp.ne.s32.totalorder %s65, %s67
    %p74 = scmp.eq.s32.totalorder %s15, 1
    %p75 = por %p73, %p74
    %p76 = scmp.ne.s32.totalorder %s67, %s68
    %p77 = scmp.eq.s32.totalorder %s15, 0
    %p78 = por %p76, %p77
    %p79 = scmp.ne.s32.totalorder %s67, %s68
    %p80 = scmp.eq.s32.totalorder %s16, 1
    %p81 = por %p79, %p80
    %p83 = scmp.ne.s32.totalorder %s68, %s82
    %p84 = scmp.eq.s32.totalorder %s16, 0
    %p85 = por %p83, %p84
    %s87 = sadd.s32 %s86, 1
    %p90 = scmp.eq.s32.totalorder %s10, 1
    %p91 = scmp.ne.s32.totalorder %s86, %s88
    %p92 = scmp.eq.s32.totalorder %s10, 0
    %p93 = por %p91, %p92
    %p94 = scmp.ne.s32.totalorder %s86, %s88
    %p95 = scmp.eq.s32.totalorder %s15, 1
    %p96 = por %p94, %p95
    %p97 = scmp.ne.s32.totalorder %s88, %s89
    %p98 = scmp.eq.s32.totalorder %s15, 0
    %p99 = por %p97, %p98
    %p100 = scmp.ne.s32.totalorder %s88, %s89
    %p101 = scmp.eq.s32.totalorder %s16, 1
    %p102 = por %p100, %p101
    %p104 = scmp.ne.s32.totalorder %s89, %s103
    %p105 = scmp.eq.s32.totalorder %s16, 0
    %p106 = por %p104, %p105
    %s107 = ssub.s32 %s10, %s17
    %p108 = scmp.eq.s32.totalorder %s107, 0
    %s110 = sadd.s32 %s109, 1
    %s111 = scalar_select %p108, %s109, %s110
    %p114 = pneg %p108
    %p115 = scmp.eq.s32.totalorder %s10, 1
    %p116 = por %p114, %p115
    %p117 = scmp.ne.s32.totalorder %s109, %s112
    %p118 = scmp.eq.s32.totalorder %s10, 0
    %p119 = por %p117, %p118
    %p120 = scmp.ne.s32.totalorder %s109, %s112
    %p121 = scmp.eq.s32.totalorder %s15, 1
    %p122 = por %p120, %p121
    %p123 = scmp.ne.s32.totalorder %s112, %s113
    %p124 = scmp.eq.s32.totalorder %s15, 0
    %p125 = por %p123, %p124
    %p126 = scmp.ne.s32.totalorder %s112, %s113
    %p127 = scmp.eq.s32.totalorder %s16, 1
    %p128 = por %p126, %p127
    %p130 = scmp.ne.s32.totalorder %s113, %s129
    %p131 = scmp.eq.s32.totalorder %s16, 0
    %p132 = por %p130, %p131
    %p133 = scmp.le.s32.totalorder 1, %s10
    %p134 = scmp.lt.s32.totalorder %s10, 3
    %p135 = pnand %p133, %p134
    %p136 = pneg %p135
    // Predicated region
    $region9: #{residual_block_forward.5} parent=5 // pred_check
      _
    $region10: #{residual_block_forward.5} parent=5 // pred_check_branch
      %138 = sbr.rel (%p135) target = $region12
    $region11: #{residual_block_forward.5} parent=5 // pred_region
      %s139 = ssub.s32 %s10, 1
      // Predicated region
      $region13: #{residual_block_forward.5} parent=11 // pred_check
        %p140 = pneg %p57
      $region14: #{residual_block_forward.5} parent=11 // pred_check_branch
        %142 = sbr.rel (%p140) target = $region16
      $region15: #{residual_block_forward.5} parent=11 // pred_region
        _
      $region16: #{residual_block_forward.5} parent=11 // pred_fallthru
        _
      // Predicated region
      $region17: #{residual_block_forward.5} parent=11 // pred_check
        %p143 = pneg %p78
      $region18: #{residual_block_forward.5} parent=11 // pred_check_branch
        %145 = sbr.rel (%p143) target = $region20
      $region19: #{residual_block_forward.5} parent=11 // pred_region
        _
      $region20: #{residual_block_forward.5} parent=11 // pred_fallthru
        _
      // Predicated region
      $region21: #{residual_block_forward.5} parent=11 // pred_check
        %p146 = pneg %p99
      $region22: #{residual_block_forward.5} parent=11 // pred_check_branch
        %148 = sbr.rel (%p146) target = $region24
      $region23: #{residual_block_forward.5} parent=11 // pred_region
        _
      $region24: #{residual_block_forward.5} parent=11 // pred_fallthru
        _
    $region12: #{residual_block_forward.5} parent=5 // pred_fallthru
      _
    %p149 = scmp.lt.s32.totalorder %s10, 2
    // Predicated region
    $region25: #{residual_block_forward.5} parent=5 // pred_check
      %p150 = pneg %p149
    $region26: #{residual_block_forward.5} parent=5 // pred_check_branch
      %152 = sbr.rel (%p150) target = $region28
    $region27: #{residual_block_forward.5} parent=5 // pred_region
      // Predicated region
      $region29: #{residual_block_forward.5} parent=27 // pred_check
        %p153 = pneg %p30
      $region30: #{residual_block_forward.5} parent=27 // pred_check_branch
        %155 = sbr.rel (%p153) target = $region32
      $region31: #{residual_block_forward.5} parent=27 // pred_region
        %s156 = smul.u32 32, %s10
        %p157 = scmp.lt.s32.totalorder %s156, 63
        %s158 = scalar_select %p157, %s156, 63
        %s159 = smul.addr %s158, 8
        %s160 = scalar_lea.vmem %s0, %s159
        %s161 = smul.u32 32, %s10
      $region32: #{residual_block_forward.5} parent=27 // pred_fallthru
        _
    $region28: #{residual_block_forward.5} parent=5 // pred_fallthru
      _
    %p162 = scmp.le.s32.totalorder 1, %s10
    %p163 = scmp.lt.s32.totalorder %s10, 3
    %p164 = pnand %p162, %p163
    %p165 = pneg %p164
    // Predicated region
    $region33: #{residual_block_forward.5} parent=5 // pred_check
      _
    $region34: #{residual_block_forward.5} parent=5 // pred_check_branch
      %167 = sbr.rel (%p164) target = $region36
    $region35: #{residual_block_forward.5} parent=5 // pred_region
      %s168 = ssub.s32 %s10, 1
      %s169 = smul.u32 32, %s15
      %p170 = scmp.lt.s32.totalorder %s169, 63
      %s171 = scalar_select %p170, %s169, 63
      %s172 = smul.addr %s171, 8
      %s173 = scalar_lea.vmem %s0, %s172
      %p174 = pneg %p36
      %p175 = pneg %p33
      %p176 = pneg %p57
      %p177 = pneg %p54
      %p178 = pneg %p78
      %p179 = pneg %p75
      %p180 = pneg %p99
      %p181 = pneg %p96
      %p182 = pneg %p125
      %p183 = pneg %p122
      %s184 = smul.u32 32, %s15
      %p185 = scmp.lt.s32.totalorder %s184, 63
      %s186 = scalar_select %p185, %s184, 63
      %s187 = smul.addr %s186, 8
      %s188 = scalar_lea.vmem %s4, %s187
      %s189 = smul.u32 32, %s15
      %p190 = scmp.lt.s32.totalorder %s189, 63
      %s191 = scalar_select %p190, %s189, 63
      %s192 = smul.addr %s191, 8
      %s193 = scalar_lea.vmem %s0, %s192
      %s194 = smul.u32 32, %s15
      %s195 = smul.u32 32, %s15
      %p196 = scmp.lt.s32.totalorder %s195, 63
      %s197 = scalar_select %p196, %s195, 63
      %s198 = smul.addr %s197, 8
      %s199 = scalar_lea.vmem %s4, %s198
      %s200 = smul.u32 32, %s15
      %v201 = vld [vmem:[%s1] sm:$0x1]
      %v202 = vmul.f32 %v201, 0.001953125
      %v203 = vld [vmem:[%s1 + $0x1] sm:$0x1]
      %v204 = vmul.f32 %v203, 0.001953125
      %v205 = vmul.f32 %v202, %v202
      %v206 = vsub.f32 %v204, %v205
      %v207 = vmax.f32 %v206, 0.0
      %v208 = vadd.f32 %v207, 1e-05
      %v209 = vrsqrt.pop %v208
      %v210 = vmul.f32 %v209, %v208
      %v211 = vmul.f32 %v210, %v209
      %v212 = vmul.f32 0.5, %v211
      %v213 = vsub.f32 1.5, %v212
      %v214 = vmul.f32 %v209, %v213
      %vm215 = vweird.f32 %v208
      %vm216 = vweird.f32 %v209
      %vm217 = vmor %vm215, %vm216
      %v218 = vsel %vm217, %v209, %v214
      %v219 = vld [vmem:[%s2] sm:$0x1]
      %v220 = vmul.f32 %v218, %v219
      %v221 = vld [vmem:[%s3] sm:$0x1]
      %v222 = vmul.f32 %v202, %v220
      %v223 = vsub.f32 %v221, %v222
      %v224 = vld [vmem:[%s193] sm:$0xff]
      %v225 = vld [vmem:[%s193 + $0x8] sm:$0xff]
      %v226 = vld [vmem:[%s193 + $0x10] sm:$0xff]
      %v227 = vld [vmem:[%s193 + $0x18] sm:$0xff]
      %v228 = vld [vmem:[%s193 + $0x20] sm:$0xff]
      %v229 = vld [vmem:[%s193 + $0x28] sm:$0xff]
      %v230 = vld [vmem:[%s193 + $0x30] sm:$0xff]
      %v231 = vld [vmem:[%s193 + $0x38] sm:$0xff]
      %v232 = vld [vmem:[%s193 + $0x40] sm:$0xff]
      %v233 = vld [vmem:[%s193 + $0x48] sm:$0xff]
      %v234 = vld [vmem:[%s193 + $0x50] sm:$0xff]
      %v235 = vld [vmem:[%s193 + $0x58] sm:$0xff]
      %v236 = vld [vmem:[%s193 + $0x60] sm:$0xff]
      %v237 = vld [vmem:[%s193 + $0x68] sm:$0xff]
      %v238 = vld [vmem:[%s193 + $0x70] sm:$0xff]
      %v239 = vld [vmem:[%s193 + $0x78] sm:$0xff]
      %v240 = vld [vmem:[%s193 + $0x80] sm:$0xff]
      %v241 = vld [vmem:[%s193 + $0x88] sm:$0xff]
      %v242 = vld [vmem:[%s193 + $0x90] sm:$0xff]
      %v243 = vld [vmem:[%s193 + $0x98] sm:$0xff]
      %v244 = vld [vmem:[%s193 + $0xa0] sm:$0xff]
      %v245 = vld [vmem:[%s193 + $0xa8] sm:$0xff]
      %v246 = vld [vmem:[%s193 + $0xb0] sm:$0xff]
      %v247 = vld [vmem:[%s193 + $0xb8] sm:$0xff]
      %v248 = vld [vmem:[%s193 + $0xc0] sm:$0xff]
      %v249 = vld [vmem:[%s193 + $0xc8] sm:$0xff]
      %v250 = vld [vmem:[%s193 + $0xd0] sm:$0xff]
      %v251 = vld [vmem:[%s193 + $0xd8] sm:$0xff]
      %v252 = vld [vmem:[%s193 + $0xe0] sm:$0xff]
      %v253 = vld [vmem:[%s193 + $0xe8] sm:$0xff]
      %v254 = vld [vmem:[%s193 + $0xf0] sm:$0xff]
      %v255 = vld [vmem:[%s193 + $0xf8] sm:$0xff]
      %v256 = vperm.slane %v220, 0
      %v257 = vmul.f32 %v224, %v256
      %v258 = vmul.f32 %v225, %v256
      %v259 = vmul.f32 %v226, %v256
      %v260 = vmul.f32 %v227, %v256
      %v261 = vmul.f32 %v228, %v256
      %v262 = vmul.f32 %v229, %v256
      %v263 = vmul.f32 %v230, %v256
      %v264 = vmul.f32 %v231, %v256
      %v265 = vmul.f32 %v232, %v256
      %v266 = vmul.f32 %v233, %v256
      %v267 = vmul.f32 %v234, %v256
      %v268 = vmul.f32 %v235, %v256
      %v269 = vmul.f32 %v236, %v256
      %v270 = vmul.f32 %v237, %v256
      %v271 = vmul.f32 %v238, %v256
      %v272 = vmul.f32 %v239, %v256
      %v273 = vmul.f32 %v240, %v256
      %v274 = vmul.f32 %v241, %v256
      %v275 = vmul.f32 %v242, %v256
      %v276 = vmul.f32 %v243, %v256
      %v277 = vmul.f32 %v244, %v256
      %v278 = vmul.f32 %v245, %v256
      %v279 = vmul.f32 %v246, %v256
      %v280 = vmul.f32 %v247, %v256
      %v281 = vmul.f32 %v248, %v256
      %v282 = vmul.f32 %v249, %v256
      %v283 = vmul.f32 %v250, %v256
      %v284 = vmul.f32 %v251, %v256
      %v285 = vmul.f32 %v252, %v256
      %v286 = vmul.f32 %v253, %v256
      %v287 = vmul.f32 %v254, %v256
      %v288 = vmul.f32 %v255, %v256
      %v290 = vperm.slane %v223, 0
      %v292 = vadd.f32 %v257, %v290
      %v293 = vadd.f32 %v258, %v290
      %v294 = vadd.f32 %v259, %v290
      %v295 = vadd.f32 %v260, %v290
      %v296 = vadd.f32 %v261, %v290
      %v297 = vadd.f32 %v262, %v290
      %v298 = vadd.f32 %v263, %v290
      %v299 = vadd.f32 %v264, %v290
      %v300 = vadd.f32 %v265, %v290
      %v301 = vadd.f32 %v266, %v290
      %v302 = vadd.f32 %v267, %v290
      %v303 = vadd.f32 %v268, %v290
      %v304 = vadd.f32 %v269, %v290
      %v305 = vadd.f32 %v270, %v290
      %v306 = vadd.f32 %v271, %v290
      %v307 = vadd.f32 %v272, %v290
      %v308 = vadd.f32 %v273, %v290
      %v309 = vadd.f32 %v274, %v290
      %v310 = vadd.f32 %v275, %v290
      %v311 = vadd.f32 %v276, %v290
      %v312 = vadd.f32 %v277, %v290
      %v313 = vadd.f32 %v278, %v290
      %v314 = vadd.f32 %v279, %v290
      %v315 = vadd.f32 %v280, %v290
      %v316 = vadd.f32 %v281, %v290
      %v317 = vadd.f32 %v282, %v290
      %v318 = vadd.f32 %v283, %v290
      %v319 = vadd.f32 %v284, %v290
      %v320 = vadd.f32 %v285, %v290
      %v321 = vadd.f32 %v286, %v290
      %v322 = vadd.f32 %v287, %v290
      %v323 = vadd.f32 %v288, %v290
      %v324 = vmax.f32 %v292, 0.0
      %v325 = vmax.f32 %v293, 0.0
      %v326 = vmax.f32 %v294, 0.0
      %v327 = vmax.f32 %v295, 0.0
      %v328 = vmax.f32 %v296, 0.0
      %v329 = vmax.f32 %v297, 0.0
      %v330 = vmax.f32 %v298, 0.0
      %v331 = vmax.f32 %v299, 0.0
      %v332 = vmax.f32 %v300, 0.0
      %v333 = vmax.f32 %v301, 0.0
      %v334 = vmax.f32 %v302, 0.0
      %v335 = vmax.f32 %v303, 0.0
      %v336 = vmax.f32 %v304, 0.0
      %v337 = vmax.f32 %v305, 0.0
      %v338 = vmax.f32 %v306, 0.0
      %v339 = vmax.f32 %v307, 0.0
      %v340 = vmax.f32 %v308, 0.0
      %v341 = vmax.f32 %v309, 0.0
      %v342 = vmax.f32 %v310, 0.0
      %v343 = vmax.f32 %v311, 0.0
      %v344 = vmax.f32 %v312, 0.0
      %v345 = vmax.f32 %v313, 0.0
      %v346 = vmax.f32 %v314, 0.0
      %v347 = vmax.f32 %v315, 0.0
      %v348 = vmax.f32 %v316, 0.0
      %v349 = vmax.f32 %v317, 0.0
      %v350 = vmax.f32 %v318, 0.0
      %v351 = vmax.f32 %v319, 0.0
      %v352 = vmax.f32 %v320, 0.0
      %v353 = vmax.f32 %v321, 0.0
      %v354 = vmax.f32 %v322, 0.0
      %v355 = vmax.f32 %v323, 0.0
      %356 = vst [vmem:[%s199] sm:$0xff] %v324
      %357 = vst [vmem:[%s199 + $0x8] sm:$0xff] %v325
      %358 = vst [vmem:[%s199 + $0x10] sm:$0xff] %v326
      %359 = vst [vmem:[%s199 + $0x18] sm:$0xff] %v327
      %360 = vst [vmem:[%s199 + $0x20] sm:$0xff] %v328
      %361 = vst [vmem:[%s199 + $0x28] sm:$0xff] %v329
      %362 = vst [vmem:[%s199 + $0x30] sm:$0xff] %v330
      %363 = vst [vmem:[%s199 + $0x38] sm:$0xff] %v331
      %364 = vst [vmem:[%s199 + $0x40] sm:$0xff] %v332
      %365 = vst [vmem:[%s199 + $0x48] sm:$0xff] %v333
      %366 = vst [vmem:[%s199 + $0x50] sm:$0xff] %v334
      %367 = vst [vmem:[%s199 + $0x58] sm:$0xff] %v335
      %368 = vst [vmem:[%s199 + $0x60] sm:$0xff] %v336
      %369 = vst [vmem:[%s199 + $0x68] sm:$0xff] %v337
      %370 = vst [vmem:[%s199 + $0x70] sm:$0xff] %v338
      %371 = vst [vmem:[%s199 + $0x78] sm:$0xff] %v339
      %372 = vst [vmem:[%s199 + $0x80] sm:$0xff] %v340
      %373 = vst [vmem:[%s199 + $0x88] sm:$0xff] %v341
      %374 = vst [vmem:[%s199 + $0x90] sm:$0xff] %v342
      %375 = vst [vmem:[%s199 + $0x98] sm:$0xff] %v343
      %376 = vst [vmem:[%s199 + $0xa0] sm:$0xff] %v344
      %377 = vst [vmem:[%s199 + $0xa8] sm:$0xff] %v345
      %378 = vst [vmem:[%s199 + $0xb0] sm:$0xff] %v346
      %379 = vst [vmem:[%s199 + $0xb8] sm:$0xff] %v347
      %380 = vst [vmem:[%s199 + $0xc0] sm:$0xff] %v348
      %381 = vst [vmem:[%s199 + $0xc8] sm:$0xff] %v349
      %382 = vst [vmem:[%s199 + $0xd0] sm:$0xff] %v350
      %383 = vst [vmem:[%s199 + $0xd8] sm:$0xff] %v351
      %384 = vst [vmem:[%s199 + $0xe0] sm:$0xff] %v352
      %385 = vst [vmem:[%s199 + $0xe8] sm:$0xff] %v353
      %386 = vst [vmem:[%s199 + $0xf0] sm:$0xff] %v354
      %387 = vst [vmem:[%s199 + $0xf8] sm:$0xff] %v355
      %s388 = smul.u32 32, %s15
      %p389 = scmp.lt.s32.totalorder %s388, 63
      %s390 = scalar_select %p389, %s388, 63
      %s391 = smul.addr %s390, 8
      %s392 = scalar_lea.vmem %s4, %s391
      // Predicated region
      $region37: #{residual_block_forward.5} parent=35 // pred_check
        %p393 = pneg %p122
      $region38: #{residual_block_forward.5} parent=35 // pred_check_branch
        %395 = sbr.rel (%p393) target = $region40
      $region39: #{residual_block_forward.5} parent=35 // pred_region
        %s396 = smul.u32 32, %s15
      $region40: #{residual_block_forward.5} parent=35 // pred_fallthru
        _
    $region36: #{residual_block_forward.5} parent=5 // pred_fallthru
      _
    %p397 = scmp.le.s32.totalorder 2, %s10
    // Predicated region
    $region41: #{residual_block_forward.5} parent=5 // pred_check
      %p398 = pneg %p397
    $region42: #{residual_block_forward.5} parent=5 // pred_check_branch
      %400 = sbr.rel (%p398) target = $region44
    $region43: #{residual_block_forward.5} parent=5 // pred_region
      %s401 = ssub.s32 %s10, 2
      // Predicated region
      $region45: #{residual_block_forward.5} parent=43 // pred_check
        %p402 = pneg %p128
      $region46: #{residual_block_forward.5} parent=43 // pred_check_branch
        %404 = sbr.rel (%p402) target = $region48
      $region47: #{residual_block_forward.5} parent=43 // pred_region
        %s405 = smul.u32 32, %s16
        %p406 = scmp.lt.s32.totalorder %s405, 63
        %s407 = scalar_select %p406, %s405, 63
        %s408 = smul.addr %s407, 8
        %s409 = scalar_lea.vmem %s4, %s408
      $region48: #{residual_block_forward.5} parent=43 // pred_fallthru
        _
    $region44: #{residual_block_forward.5} parent=5 // pred_fallthru
      _
  $region6: #{residual_block_forward.5} parent=0 // loop_footer
    %s14 = sadd.s32 1, %s10
  $region7: #{residual_block_forward.5} parent=0 // loop_footer_branch
    %9 = sbr.rel target = $region3
  $region8: #{residual_block_forward.5} parent=0 // loop_exit
    _

// kernel: residual_block_forward.4
$region0: #{residual_block_forward.4}
  #allocation0 [shape = 'u32[]', space=smem, size = 0x4, offset = 0x4, fixed_abs, tag = 'smem constant byte address 0x4 - core index']
  #allocation1 [shape = 'u32[72,128]{1,0:T(1,128)}', space=vmem, size = 0x9000, scoped, tag = 'internal scratch']
  %s0 = inlined_call_operand.vmem [shape: bf16[512,1152], index: 0, kind: input, shape index: {}]
  %s1 = inlined_call_operand.vmem [shape: bf16[1152,128], index: 1, kind: input, shape index: {}]
  %s2 = inlined_call_operand.vmem [shape: f32[512,128], index: 2, kind: output, shape index: {0}]
  %s3 = inlined_call_operand.vmem [shape: f32[2,2,128], index: 3, kind: output, shape index: {1}]
  %4 = xla_tuple %s2, %s3
  %s5 = sld [smem:[#allocation0]]
  $region49: #{residual_block_forward.4} parent=0
    _
  %s7 = ssub.s32 1, %s5
  %s8 = scalar_select 0, %s7, %s5
  loop: start=0, step=1, limit=4
  $region2: #{residual_block_forward.4} parent=0 // loop_pre_header
    _
  $region3: #{residual_block_forward.4} parent=0 // loop_header
    %s10 = sphi 0, %s14
    %p11 = scmp.ge.s32.totalorder %s10, 4
    %s20 = sphi 0, %s22
    %s23 = sphi 0, %s20
    %s24 = sphi 0, %s23
    %s40 = sphi 0, %s24
    %s44 = sphi 0, %s44
    %s46 = sphi 0, %s44
    %s47 = sphi 0, %s46
    %s61 = sphi 0, %s47
    %s67 = sphi 0, %s69
    %s70 = sphi 0, %s67
    %s71 = sphi 0, %s70
    %s87 = sphi 0, %s71
    %s93 = sphi 0, %s95
    %s96 = sphi 0, %s93
    %s97 = sphi 0, %s96
    %s113 = sphi 0, %s97
  $region4: #{residual_block_forward.4} parent=0 // loop_header_branch
    %13 = sbr.rel (%p11) target = $region8
  $region5: #{residual_block_forward.4} parent=0 // loop_body
    %s15 = ssub.s32 %s10, 1
    %s16 = ssub.s32 %s10, 2
    %s17 = sadd.s32 %s10, 1
    %s18 = ssub.s32 %s10, %s17
    %p19 = scmp.eq.s32.totalorder %s18, 0
    %s21 = sadd.s32 %s20, 1
    %s22 = scalar_select %p19, %s20, %s21
    %p25 = pneg %p19
    %p26 = scmp.eq.s32.totalorder %s10, 1
    %p27 = por %p25, %p26
    %p28 = scmp.ne.s32.totalorder %s20, %s23
    %p29 = scmp.eq.s32.totalorder %s10, 0
    %p30 = por %p28, %p29
    %p31 = scmp.ne.s32.totalorder %s20, %s23
    %p32 = scmp.eq.s32.totalorder %s15, 1
    %p33 = por %p31, %p32
    %p34 = scmp.ne.s32.totalorder %s23, %s24
    %p35 = scmp.eq.s32.totalorder %s15, 0
    %p36 = por %p34, %p35
    %p37 = scmp.ne.s32.totalorder %s23, %s24
    %p38 = scmp.eq.s32.totalorder %s16, 1
    %p39 = por %p37, %p38
    %p41 = scmp.ne.s32.totalorder %s24, %s40
    %p42 = scmp.eq.s32.totalorder %s16, 0
    %p43 = por %p41, %p42
    %s45 = sadd.s32 %s44, 1
    %p48 = scmp.eq.s32.totalorder %s10, 1
    %p49 = scmp.ne.s32.totalorder %s44, %s46
    %p50 = scmp.eq.s32.totalorder %s10, 0
    %p51 = por %p49, %p50
    %p52 = scmp.ne.s32.totalorder %s44, %s46
    %p53 = scmp.eq.s32.totalorder %s15, 1
    %p54 = por %p52, %p53
    %p55 = scmp.ne.s32.totalorder %s46, %s47
    %p56 = scmp.eq.s32.totalorder %s15, 0
    %p57 = por %p55, %p56
    %p58 = scmp.ne.s32.totalorder %s46, %s47
    %p59 = scmp.eq.s32.totalorder %s16, 1
    %p60 = por %p58, %p59
    %p62 = scmp.ne.s32.totalorder %s47, %s61
    %p63 = scmp.eq.s32.totalorder %s16, 0
    %p64 = por %p62, %p63
    %s65 = ssub.s32 %s10, %s17
    %p66 = scmp.eq.s32.totalorder %s65, 0
    %s68 = sadd.s32 %s67, 1
    %s69 = scalar_select %p66, %s67, %s68
    %p72 = pneg %p66
    %p73 = scmp.eq.s32.totalorder %s10, 1
    %p74 = por %p72, %p73
    %p75 = scmp.ne.s32.totalorder %s67, %s70
    %p76 = scmp.eq.s32.totalorder %s10, 0
    %p77 = por %p75, %p76
    %p78 = scmp.ne.s32.totalorder %s67, %s70
    %p79 = scmp.eq.s32.totalorder %s15, 1
    %p80 = por %p78, %p79
    %p81 = scmp.ne.s32.totalorder %s70, %s71
    %p82 = scmp.eq.s32.totalorder %s15, 0
    %p83 = por %p81, %p82
    %p84 = scmp.ne.s32.totalorder %s70, %s71
    %p85 = scmp.eq.s32.totalorder %s16, 1
    %p86 = por %p84, %p85
    %p88 = scmp.ne.s32.totalorder %s71, %s87
    %p89 = scmp.eq.s32.totalorder %s16, 0
    %p90 = por %p88, %p89
    %s91 = ssub.s32 %s10, %s17
    %p92 = scmp.eq.s32.totalorder %s91, 0
    %s94 = sadd.s32 %s93, 1
    %s95 = scalar_select %p92, %s93, %s94
    %p98 = pneg %p92
    %p99 = scmp.eq.s32.totalorder %s10, 1
    %p100 = por %p98, %p99
    %p101 = scmp.ne.s32.totalorder %s93, %s96
    %p102 = scmp.eq.s32.totalorder %s10, 0
    %p103 = por %p101, %p102
    %p104 = scmp.ne.s32.totalorder %s93, %s96
    %p105 = scmp.eq.s32.totalorder %s15, 1
    %p106 = por %p104, %p105
    %p107 = scmp.ne.s32.totalorder %s96, %s97
    %p108 = scmp.eq.s32.totalorder %s15, 0
    %p109 = por %p107, %p108
    %p110 = scmp.ne.s32.totalorder %s96, %s97
    %p111 = scmp.eq.s32.totalorder %s16, 1
    %p112 = por %p110, %p111
    %p114 = scmp.ne.s32.totalorder %s97, %s113
    %p115 = scmp.eq.s32.totalorder %s16, 0
    %p116 = por %p114, %p115
    %p117 = scmp.le.s32.totalorder 1, %s10
    %p118 = scmp.lt.s32.totalorder %s10, 3
    %p119 = pnand %p117, %p118
    %p120 = pneg %p119
    // Predicated region
    $region9: #{residual_block_forward.4} parent=5 // pred_check
      _
    $region10: #{residual_block_forward.4} parent=5 // pred_check_branch
      %122 = sbr.rel (%p119) target = $region12
    $region11: #{residual_block_forward.4} parent=5 // pred_region
      %s123 = ssub.s32 %s10, 1
      // Predicated region
      $region13: #{residual_block_forward.4} parent=11 // pred_check
        %p124 = pneg %p57
      $region14: #{residual_block_forward.4} parent=11 // pred_check_branch
        %126 = sbr.rel (%p124) target = $region16
      $region15: #{residual_block_forward.4} parent=11 // pred_region
        _
      $region16: #{residual_block_forward.4} parent=11 // pred_fallthru
        _
    $region12: #{residual_block_forward.4} parent=5 // pred_fallthru
      _
    %p127 = scmp.lt.s32.totalorder %s10, 2
    // Predicated region
    $region17: #{residual_block_forward.4} parent=5 // pred_check
      %p128 = pneg %p127
    $region18: #{residual_block_forward.4} parent=5 // pred_check_branch
      %130 = sbr.rel (%p128) target = $region20
    $region19: #{residual_block_forward.4} parent=5 // pred_region
      // Predicated region
      $region21: #{residual_block_forward.4} parent=19 // pred_check
        %p131 = pneg %p30
      $region22: #{residual_block_forward.4} parent=19 // pred_check_branch
        %133 = sbr.rel (%p131) target = $region24
      $region23: #{residual_block_forward.4} parent=19 // pred_region
        %s134 = smul.u32 32, %s10
        %p135 = scmp.lt.s32.totalorder %s134, 63
        %s136 = scalar_select %p135, %s134, 63
        %s137 = smul.addr %s136, 9
        %s138 = smul.addr %s137, 4
        %s139 = scalar_lea.vmem %s0, %s138
        %s140 = smul.u32 32, %s10
      $region24: #{residual_block_forward.4} parent=19 // pred_fallthru
        _
    $region20: #{residual_block_forward.4} parent=5 // pred_fallthru
      _
    %p141 = scmp.le.s32.totalorder 1, %s10
    %p142 = scmp.lt.s32.totalorder %s10, 3
    %p143 = pnand %p141, %p142
    %p144 = pneg %p143
    // Predicated region
    $region25: #{residual_block_forward.4} parent=5 // pred_check
      _
    $region26: #{residual_block_forward.4} parent=5 // pred_check_branch
      %146 = sbr.rel (%p143) target = $region28
    $region27: #{residual_block_forward.4} parent=5 // pred_region
      %s147 = ssub.s32 %s10, 1
      %s148 = smul.u32 32, %s15
      %p149 = scmp.lt.s32.totalorder %s148, 63
      %s150 = scalar_select %p149, %s148, 63
      %s151 = smul.addr %s150, 9
      %s152 = smul.addr %s151, 4
      %s153 = scalar_lea.vmem %s0, %s152
      %p154 = pneg %p36
      %p155 = pneg %p33
      %p156 = pneg %p57
      %p157 = pneg %p54
      %p158 = pneg %p83
      %p159 = pneg %p80
      %s160 = smul.u32 32, %s15
      %p161 = scmp.lt.s32.totalorder %s160, 63
      %s162 = scalar_select %p161, %s160, 63
      %s163 = smul.addr %s162, 8
      %s164 = scalar_lea.vmem %s2, %s163
      %p165 = pneg %p109
      %p166 = pneg %p106
      %p167 = scmp.lt.s32.totalorder %s15, 1
      %s168 = scalar_select %p167, %s15, 1
      %s169 = smul.addr %s168, 2
      %s170 = scalar_lea.vmem %s3, %s169
      %s171 = smul.u32 32, %s15
      %p172 = scmp.lt.s32.totalorder %s171, 63
      %s173 = scalar_select %p172, %s171, 63
      %s174 = smul.addr %s173, 9
      %s175 = smul.addr %s174, 4
      %s176 = scalar_lea.vmem %s0, %s175
      %s177 = smul.u32 32, %s15
      %s178 = smul.u32 32, %s15
      %p179 = scmp.lt.s32.totalorder %s178, 63
      %s180 = scalar_select %p179, %s178, 63
      %s181 = smul.addr %s180, 8
      %s182 = scalar_lea.vmem %s2, %s181
      %s183 = smul.u32 32, %s15
      %p184 = scmp.lt.s32.totalorder %s15, 1
      %s185 = scalar_select %p184, %s15, 1
      %s186 = smul.addr %s185, 2
      %s187 = scalar_lea.vmem %s3, %s186
      %v188 = vld [vmem:[%s176] sm:$0xff]
      %v189 = vld [vmem:[%s176 + $0x8] sm:$0xff]
      %v190 = vld [vmem:[%s176 + $0x10] sm:$0xff]
      %v191 = vld [vmem:[%s176 + $0x18] sm:$0xff]
      %v192 = vld [vmem:[%s176 + $0x20] sm:$0xf]
      %v193 = vld [vmem:[%s176 + $0x24] sm:$0xff]
      %v194 = vld [vmem:[%s176 + $0x2c] sm:$0xff]
      %v195 = vld [vmem:[%s176 + $0x34] sm:$0xff]
      %v196 = vld [vmem:[%s176 + $0x3c] sm:$0xff]
      %v197 = vld [vmem:[%s176 + $0x44] sm:$0xf]
      %v198 = vld [vmem:[%s176 + $0x48] sm:$0xff]
      %v199 = vld [vmem:[%s176 + $0x50] sm:$0xff]
      %v200 = vld [vmem:[%s176 + $0x58] sm:$0xff]
      %v201 = vld [vmem:[%s176 + $0x60] sm:$0xff]
      %v202 = vld [vmem:[%s176 + $0x68] sm:$0xf]
      %v203 = vld [vmem:[%s176 + $0x6c] sm:$0xff]
      %v204 = vld [vmem:[%s176 + $0x74] sm:$0xff]
      %v205 = vld [vmem:[%s176 + $0x7c] sm:$0xff]
      %v206 = vld [vmem:[%s176 + $0x84] sm:$0xff]
      %v207 = vld [vmem:[%s176 + $0x8c] sm:$0xf]
      %v208 = vld [vmem:[%s176 + $0x90] sm:$0xff]
      %v209 = vld [vmem:[%s176 + $0x98] sm:$0xff]
      %v210 = vld [vmem:[%s176 + $0xa0] sm:$0xff]
      %v211 = vld [vmem:[%s176 + $0xa8] sm:$0xff]
      %v212 = vld [vmem:[%s176 + $0xb0] sm:$0xf]
      %v213 = vld [vmem:[%s176 + $0xb4] sm:$0xff]
      %v214 = vld [vmem:[%s176 + $0xbc] sm:$0xff]
      %v215 = vld [vmem:[%s176 + $0xc4] sm:$0xff]
      %v216 = vld [vmem:[%s176 + $0xcc] sm:$0xff]
      %v217 = vld [vmem:[%s176 + $0xd4] sm:$0xf]
      %v218 = vld [vmem:[%s176 + $0xd8] sm:$0xff]
      %v219 = vld [vmem:[%s176 + $0xe0] sm:$0xff]
      %v220 = vld [vmem:[%s176 + $0xe8] sm:$0xff]
      %v221 = vld [vmem:[%s176 + $0xf0] sm:$0xff]
      %v222 = vld [vmem:[%s176 + $0xf8] sm:$0xf]
      %v223 = vld [vmem:[%s176 + $0xfc] sm:$0xff]
      %v224 = vld [vmem:[%s176 + $0x104] sm:$0xff]
      %v225 = vld [vmem:[%s176 + $0x10c] sm:$0xff]
      %v226 = vld [vmem:[%s176 + $0x114] sm:$0xff]
      %v227 = vld [vmem:[%s176 + $0x11c] sm:$0xf]
      %v228 = vld [vmem:[%s176 + $0x120] sm:$0xff]
      %v229 = vld [vmem:[%s176 + $0x128] sm:$0xff]
      %v230 = vld [vmem:[%s176 + $0x130] sm:$0xff]
      %v231 = vld [vmem:[%s176 + $0x138] sm:$0xff]
      %v232 = vld [vmem:[%s176 + $0x140] sm:$0xf]
      %v233 = vld [vmem:[%s176 + $0x144] sm:$0xff]
      %v234 = vld [vmem:[%s176 + $0x14c] sm:$0xff]
      %v235 = vld [vmem:[%s176 + $0x154] sm:$0xff]
      %v236 = vld [vmem:[%s176 + $0x15c] sm:$0xff]
      %v237 = vld [vmem:[%s176 + $0x164] sm:$0xf]
      %v238 = vld [vmem:[%s176 + $0x168] sm:$0xff]
      %v239 = vld [vmem:[%s176 + $0x170] sm:$0xff]
      %v240 = vld [vmem:[%s176 + $0x178] sm:$0xff]
      %v241 = vld [vmem:[%s176 + $0x180] sm:$0xff]
      %v242 = vld [vmem:[%s176 + $0x188] sm:$0xf]
      %v243 = vld [vmem:[%s176 + $0x18c] sm:$0xff]
      %v244 = vld [vmem:[%s176 + $0x194] sm:$0xff]
      %v245 = vld [vmem:[%s176 + $0x19c] sm:$0xff]
      %v246 = vld [vmem:[%s176 + $0x1a4] sm:$0xff]
      %v247 = vld [vmem:[%s176 + $0x1ac] sm:$0xf]
      %v248 = vld [vmem:[%s176 + $0x1b0] sm:$0xff]
      %v249 = vld [vmem:[%s176 + $0x1b8] sm:$0xff]
      %v250 = vld [vmem:[%s176 + $0x1c0] sm:$0xff]
      %v251 = vld [vmem:[%s176 + $0x1c8] sm:$0xff]
      %v252 = vld [vmem:[%s176 + $0x1d0] sm:$0xf]
      %v253 = vld [vmem:[%s176 + $0x1d4] sm:$0xff]
      %v254 = vld [vmem:[%s176 + $0x1dc] sm:$0xff]
      %v255 = vld [vmem:[%s176 + $0x1e4] sm:$0xff]
      %v256 = vld [vmem:[%s176 + $0x1ec] sm:$0xff]
      %v257 = vld [vmem:[%s176 + $0x1f4] sm:$0xf]
      %v258 = vld [vmem:[%s176 + $0x1f8] sm:$0xff]
      %v259 = vld [vmem:[%s176 + $0x200] sm:$0xff]
      %v260 = vld [vmem:[%s176 + $0x208] sm:$0xff]
      %v261 = vld [vmem:[%s176 + $0x210] sm:$0xff]
      %v262 = vld [vmem:[%s176 + $0x218] sm:$0xf]
      %v263 = vld [vmem:[%s176 + $0x21c] sm:$0xff]
      %v264 = vld [vmem:[%s176 + $0x224] sm:$0xff]
      %v265 = vld [vmem:[%s176 + $0x22c] sm:$0xff]
      %v266 = vld [vmem:[%s176 + $0x234] sm:$0xff]
      %v267 = vld [vmem:[%s176 + $0x23c] sm:$0xf]
      %v268 = vld [vmem:[%s176 + $0x240] sm:$0xff]
      %v269 = vld [vmem:[%s176 + $0x248] sm:$0xff]
      %v270 = vld [vmem:[%s176 + $0x250] sm:$0xff]
      %v271 = vld [vmem:[%s176 + $0x258] sm:$0xff]
      %v272 = vld [vmem:[%s176 + $0x260] sm:$0xf]
      %v273 = vld [vmem:[%s176 + $0x264] sm:$0xff]
      %v274 = vld [vmem:[%s176 + $0x26c] sm:$0xff]
      %v275 = vld [vmem:[%s176 + $0x274] sm:$0xff]
      %v276 = vld [vmem:[%s176 + $0x27c] sm:$0xff]
      %v277 = vld [vmem:[%s176 + $0x284] sm:$0xf]
      %v278 = vld [vmem:[%s176 + $0x288] sm:$0xff]
      %v279 = vld [vmem:[%s176 + $0x290] sm:$0xff]
      %v280 = vld [vmem:[%s176 + $0x298] sm:$0xff]
      %v281 = vld [vmem:[%s176 + $0x2a0] sm:$0xff]
      %v282 = vld [vmem:[%s176 + $0x2a8] sm:$0xf]
      %v283 = vld [vmem:[%s176 + $0x2ac] sm:$0xff]
      %v284 = vld [vmem:[%s176 + $0x2b4] sm:$0xff]
      %v285 = vld [vmem:[%s176 + $0x2bc] sm:$0xff]
      %v286 = vld [vmem:[%s176 + $0x2c4] sm:$0xff]
      %v287 = vld [vmem:[%s176 + $0x2cc] sm:$0xf]
      %v288 = vld [vmem:[%s176 + $0x2d0] sm:$0xff]
      %v289 = vld [vmem:[%s176 + $0x2d8] sm:$0xff]
      %v290 = vld [vmem:[%s176 + $0x2e0] sm:$0xff]
      %v291 = vld [vmem:[%s176 + $0x2e8] sm:$0xff]
      %v292 = vld [vmem:[%s176 + $0x2f0] sm:$0xf]
      %v293 = vld [vmem:[%s176 + $0x2f4] sm:$0xff]
      %v294 = vld [vmem:[%s176 + $0x2fc] sm:$0xff]
      %v295 = vld [vmem:[%s176 + $0x304] sm:$0xff]
      %v296 = vld [vmem:[%s176 + $0x30c] sm:$0xff]
      %v297 = vld [vmem:[%s176 + $0x314] sm:$0xf]
      %v298 = vld [vmem:[%s176 + $0x318] sm:$0xff]
      %v299 = vld [vmem:[%s176 + $0x320] sm:$0xff]
      %v300 = vld [vmem:[%s176 + $0x328] sm:$0xff]
      %v301 = vld [vmem:[%s176 + $0x330] sm:$0xff]
      %v302 = vld [vmem:[%s176 + $0x338] sm:$0xf]
      %v303 = vld [vmem:[%s176 + $0x33c] sm:$0xff]
      %v304 = vld [vmem:[%s176 + $0x344] sm:$0xff]
      %v305 = vld [vmem:[%s176 + $0x34c] sm:$0xff]
      %v306 = vld [vmem:[%s176 + $0x354] sm:$0xff]
      %v307 = vld [vmem:[%s176 + $0x35c] sm:$0xf]
      %v308 = vld [vmem:[%s176 + $0x360] sm:$0xff]
      %v309 = vld [vmem:[%s176 + $0x368] sm:$0xff]
      %v310 = vld [vmem:[%s176 + $0x370] sm:$0xff]
      %v311 = vld [vmem:[%s176 + $0x378] sm:$0xff]
      %v312 = vld [vmem:[%s176 + $0x380] sm:$0xf]
      %v313 = vld [vmem:[%s176 + $0x384] sm:$0xff]
      %v314 = vld [vmem:[%s176 + $0x38c] sm:$0xff]
      %v315 = vld [vmem:[%s176 + $0x394] sm:$0xff]
      %v316 = vld [vmem:[%s176 + $0x39c] sm:$0xff]
      %v317 = vld [vmem:[%s176 + $0x3a4] sm:$0xf]
      %v318 = vld [vmem:[%s176 + $0x3a8] sm:$0xff]
      %v319 = vld [vmem:[%s176 + $0x3b0] sm:$0xff]
      %v320 = vld [vmem:[%s176 + $0x3b8] sm:$0xff]
      %v321 = vld [vmem:[%s176 + $0x3c0] sm:$0xff]
      %v322 = vld [vmem:[%s176 + $0x3c8] sm:$0xf]
      %v323 = vld [vmem:[%s176 + $0x3cc] sm:$0xff]
      %v324 = vld [vmem:[%s176 + $0x3d4] sm:$0xff]
      %v325 = vld [vmem:[%s176 + $0x3dc] sm:$0xff]
      %v326 = vld [vmem:[%s176 + $0x3e4] sm:$0xff]
      %v327 = vld [vmem:[%s176 + $0x3ec] sm:$0xf]
      %v328 = vld [vmem:[%s176 + $0x3f0] sm:$0xff]
      %v329 = vld [vmem:[%s176 + $0x3f8] sm:$0xff]
      %v330 = vld [vmem:[%s176 + $0x400] sm:$0xff]
      %v331 = vld [vmem:[%s176 + $0x408] sm:$0xff]
      %v332 = vld [vmem:[%s176 + $0x410] sm:$0xf]
      %v333 = vld [vmem:[%s176 + $0x414] sm:$0xff]
      %v334 = vld [vmem:[%s176 + $0x41c] sm:$0xff]
      %v335 = vld [vmem:[%s176 + $0x424] sm:$0xff]
      %v336 = vld [vmem:[%s176 + $0x42c] sm:$0xff]
      %v337 = vld [vmem:[%s176 + $0x434] sm:$0xf]
      %v338 = vld [vmem:[%s176 + $0x438] sm:$0xff]
      %v339 = vld [vmem:[%s176 + $0x440] sm:$0xff]
      %v340 = vld [vmem:[%s176 + $0x448] sm:$0xff]
      %v341 = vld [vmem:[%s176 + $0x450] sm:$0xff]
      %v342 = vld [vmem:[%s176 + $0x458] sm:$0xf]
      %v343 = vld [vmem:[%s176 + $0x45c] sm:$0xff]
      %v344 = vld [vmem:[%s176 + $0x464] sm:$0xff]
      %v345 = vld [vmem:[%s176 + $0x46c] sm:$0xff]
      %v346 = vld [vmem:[%s176 + $0x474] sm:$0xff]
      %v347 = vld [vmem:[%s176 + $0x47c] sm:$0xf]
      %v348 = vld [vmem:[%s1] sm:$0xf]
      %v349 = vld [vmem:[%s1 + $0x4] sm:$0xf]
      %v350 = vld [vmem:[%s1 + $0x8] sm:$0xf]
      %v351 = vld [vmem:[%s1 + $0xc] sm:$0xf]
      %v352 = vld [vmem:[%s1 + $0x10] sm:$0xf]
      %v353 = vld [vmem:[%s1 + $0x14] sm:$0xf]
      %v354 = vld [vmem:[%s1 + $0x18] sm:$0xf]
      %v355 = vld [vmem:[%s1 + $0x1c] sm:$0xf]
      %v356 = vld [vmem:[%s1 + $0x20] sm:$0xf]
      %v357 = vld [vmem:[%s1 + $0x24] sm:$0xf]
      %v358 = vld [vmem:[%s1 + $0x28] sm:$0xf]
      %v359 = vld [vmem:[%s1 + $0x2c] sm:$0xf]
      %v360 = vld [vmem:[%s1 + $0x30] sm:$0xf]
      %v361 = vld [vmem:[%s1 + $0x34] sm:$0xf]
      %v362 = vld [vmem:[%s1 + $0x38] sm:$0xf]
      %v363 = vld [vmem:[%s1 + $0x3c] sm:$0xf]
      %v364 = vld [vmem:[%s1 + $0x40] sm:$0xf]
      %v365 = vld [vmem:[%s1 + $0x44] sm:$0xf]
      %v366 = vld [vmem:[%s1 + $0x48] sm:$0xf]
      %v367 = vld [vmem:[%s1 + $0x4c] sm:$0xf]
      %v368 = vld [vmem:[%s1 + $0x50] sm:$0xf]
      %v369 = vld [vmem:[%s1 + $0x54] sm:$0xf]
      %v370 = vld [vmem:[%s1 + $0x58] sm:$0xf]
      %v371 = vld [vmem:[%s1 + $0x5c] sm:$0xf]
      %v372 = vld [vmem:[%s1 + $0x60] sm:$0xf]
      %v373 = vld [vmem:[%s1 + $0x64] sm:$0xf]
      %v374 = vld [vmem:[%s1 + $0x68] sm:$0xf]
      %v375 = vld [vmem:[%s1 + $0x6c] sm:$0xf]
      %v376 = vld [vmem:[%s1 + $0x70] sm:$0xf]
      %v377 = vld [vmem:[%s1 + $0x74] sm:$0xf]
      %v378 = vld [vmem:[%s1 + $0x78] sm:$0xf]
      %v379 = vld [vmem:[%s1 + $0x7c] sm:$0xf]
      %v380 = vld [vmem:[%s1 + $0x80] sm:$0xf]
      %v381 = vld [vmem:[%s1 + $0x84] sm:$0xf]
      %v382 = vld [vmem:[%s1 + $0x88] sm:$0xf]
      %v383 = vld [vmem:[%s1 + $0x8c] sm:$0xf]
      %v384 = vld [vmem:[%s1 + $0x90] sm:$0xf]
      %v385 = vld [vmem:[%s1 + $0x94] sm:$0xf]
      %v386 = vld [vmem:[%s1 + $0x98] sm:$0xf]
      %v387 = vld [vmem:[%s1 + $0x9c] sm:$0xf]
      %v388 = vld [vmem:[%s1 + $0xa0] sm:$0xf]
      %v389 = vld [vmem:[%s1 + $0xa4] sm:$0xf]
      %v390 = vld [vmem:[%s1 + $0xa8] sm:$0xf]
      %v391 = vld [vmem:[%s1 + $0xac] sm:$0xf]
      %v392 = vld [vmem:[%s1 + $0xb0] sm:$0xf]
      %v393 = vld [vmem:[%s1 + $0xb4] sm:$0xf]
      %v394 = vld [vmem:[%s1 + $0xb8] sm:$0xf]
      %v395 = vld [vmem:[%s1 + $0xbc] sm:$0xf]
      %v396 = vld [vmem:[%s1 + $0xc0] sm:$0xf]
      %v397 = vld [vmem:[%s1 + $0xc4] sm:$0xf]
      %v398 = vld [vmem:[%s1 + $0xc8] sm:$0xf]
      %v399 = vld [vmem:[%s1 + $0xcc] sm:$0xf]
      %v400 = vld [vmem:[%s1 + $0xd0] sm:$0xf]
      %v401 = vld [vmem:[%s1 + $0xd4] sm:$0xf]
      %v402 = vld [vmem:[%s1 + $0xd8] sm:$0xf]
      %v403 = vld [vmem:[%s1 + $0xdc] sm:$0xf]
      %v404 = vld [vmem:[%s1 + $0xe0] sm:$0xf]
      %v405 = vld [vmem:[%s1 + $0xe4] sm:$0xf]
      %v406 = vld [vmem:[%s1 + $0xe8] sm:$0xf]
      %v407 = vld [vmem:[%s1 + $0xec] sm:$0xf]
      %v408 = vld [vmem:[%s1 + $0xf0] sm:$0xf]
      %v409 = vld [vmem:[%s1 + $0xf4] sm:$0xf]
      %v410 = vld [vmem:[%s1 + $0xf8] sm:$0xf]
      %v411 = vld [vmem:[%s1 + $0xfc] sm:$0xf]
      %v412 = vld [vmem:[%s1 + $0x100] sm:$0xf]
      %v413 = vld [vmem:[%s1 + $0x104] sm:$0xf]
      %v414 = vld [vmem:[%s1 + $0x108] sm:$0xf]
      %v415 = vld [vmem:[%s1 + $0x10c] sm:$0xf]
      %v416 = vld [vmem:[%s1 + $0x110] sm:$0xf]
      %v417 = vld [vmem:[%s1 + $0x114] sm:$0xf]
      %v418 = vld [vmem:[%s1 + $0x118] sm:$0xf]
      %v419 = vld [vmem:[%s1 + $0x11c] sm:$0xf]
      %v420 = vld [vmem:[%s1 + $0x120] sm:$0xf]
      %v421 = vld [vmem:[%s1 + $0x124] sm:$0xf]
      %v422 = vld [vmem:[%s1 + $0x128] sm:$0xf]
      %v423 = vld [vmem:[%s1 + $0x12c] sm:$0xf]
      %v424 = vld [vmem:[%s1 + $0x130] sm:$0xf]
      %v425 = vld [vmem:[%s1 + $0x134] sm:$0xf]
      %v426 = vld [vmem:[%s1 + $0x138] sm:$0xf]
      %v427 = vld [vmem:[%s1 + $0x13c] sm:$0xf]
      %v428 = vld [vmem:[%s1 + $0x140] sm:$0xf]
      %v429 = vld [vmem:[%s1 + $0x144] sm:$0xf]
      %v430 = vld [vmem:[%s1 + $0x148] sm:$0xf]
      %v431 = vld [vmem:[%s1 + $0x14c] sm:$0xf]
      %v432 = vld [vmem:[%s1 + $0x150] sm:$0xf]
      %v433 = vld [vmem:[%s1 + $0x154] sm:$0xf]
      %v434 = vld [vmem:[%s1 + $0x158] sm:$0xf]
      %v435 = vld [vmem:[%s1 + $0x15c] sm:$0xf]
      %v436 = vld [vmem:[%s1 + $0x160] sm:$0xf]
      %v437 = vld [vmem:[%s1 + $0x164] sm:$0xf]
      %v438 = vld [vmem:[%s1 + $0x168] sm:$0xf]
      %v439 = vld [vmem:[%s1 + $0x16c] sm:$0xf]
      %v440 = vld [vmem:[%s1 + $0x170] sm:$0xf]
      %v441 = vld [vmem:[%s1 + $0x174] sm:$0xf]
      %v442 = vld [vmem:[%s1 + $0x178] sm:$0xf]
      %v443 = vld [vmem:[%s1 + $0x17c] sm:$0xf]
      %v444 = vld [vmem:[%s1 + $0x180] sm:$0xf]
      %v445 = vld [vmem:[%s1 + $0x184] sm:$0xf]
      %v446 = vld [vmem:[%s1 + $0x188] sm:$0xf]
      %v447 = vld [vmem:[%s1 + $0x18c] sm:$0xf]
      %v448 = vld [vmem:[%s1 + $0x190] sm:$0xf]
      %v449 = vld [vmem:[%s1 + $0x194] sm:$0xf]
      %v450 = vld [vmem:[%s1 + $0x198] sm:$0xf]
      %v451 = vld [vmem:[%s1 + $0x19c] sm:$0xf]
      %v452 = vld [vmem:[%s1 + $0x1a0] sm:$0xf]
      %v453 = vld [vmem:[%s1 + $0x1a4] sm:$0xf]
      %v454 = vld [vmem:[%s1 + $0x1a8] sm:$0xf]
      %v455 = vld [vmem:[%s1 + $0x1ac] sm:$0xf]
      %v456 = vld [vmem:[%s1 + $0x1b0] sm:$0xf]
      %v457 = vld [vmem:[%s1 + $0x1b4] sm:$0xf]
      %v458 = vld [vmem:[%s1 + $0x1b8] sm:$0xf]
      %v459 = vld [vmem:[%s1 + $0x1bc] sm:$0xf]
      %v460 = vld [vmem:[%s1 + $0x1c0] sm:$0xf]
      %v461 = vld [vmem:[%s1 + $0x1c4] sm:$0xf]
      %v462 = vld [vmem:[%s1 + $0x1c8] sm:$0xf]
      %v463 = vld [vmem:[%s1 + $0x1cc] sm:$0xf]
      %v464 = vld [vmem:[%s1 + $0x1d0] sm:$0xf]
      %v465 = vld [vmem:[%s1 + $0x1d4] sm:$0xf]
      %v466 = vld [vmem:[%s1 + $0x1d8] sm:$0xf]
      %v467 = vld [vmem:[%s1 + $0x1dc] sm:$0xf]
      %v468 = vld [vmem:[%s1 + $0x1e0] sm:$0xf]
      %v469 = vld [vmem:[%s1 + $0x1e4] sm:$0xf]
      %v470 = vld [vmem:[%s1 + $0x1e8] sm:$0xf]
      %v471 = vld [vmem:[%s1 + $0x1ec] sm:$0xf]
      %v472 = vld [vmem:[%s1 + $0x1f0] sm:$0xf]
      %v473 = vld [vmem:[%s1 + $0x1f4] sm:$0xf]
      %v474 = vld [vmem:[%s1 + $0x1f8] sm:$0xf]
      %v475 = vld [vmem:[%s1 + $0x1fc] sm:$0xf]
      %v476 = vld [vmem:[%s1 + $0x200] sm:$0xf]
      %v477 = vld [vmem:[%s1 + $0x204] sm:$0xf]
      %v478 = vld [vmem:[%s1 + $0x208] sm:$0xf]
      %v479 = vld [vmem:[%s1 + $0x20c] sm:$0xf]
      %v480 = vld [vmem:[%s1 + $0x210] sm:$0xf]
      %v481 = vld [vmem:[%s1 + $0x214] sm:$0xf]
      %v482 = vld [vmem:[%s1 + $0x218] sm:$0xf]
      %v483 = vld [vmem:[%s1 + $0x21c] sm:$0xf]
      %v484 = vld [vmem:[%s1 + $0x220] sm:$0xf]
      %v485 = vld [vmem:[%s1 + $0x224] sm:$0xf]
      %v486 = vld [vmem:[%s1 + $0x228] sm:$0xf]
      %v487 = vld [vmem:[%s1 + $0x22c] sm:$0xf]
      %v488 = vld [vmem:[%s1 + $0x230] sm:$0xf]
      %v489 = vld [vmem:[%s1 + $0x234] sm:$0xf]
      %v490 = vld [vmem:[%s1 + $0x238] sm:$0xf]
      %v491 = vld [vmem:[%s1 + $0x23c] sm:$0xf]
      %v652 = vunpack.c.l.b16 %v188
      %v653 = vunpack.c.h.b16 %v188
      %v654 = vunpack.c.l.b16 %v189
      %v655 = vunpack.c.h.b16 %v189
      %v656 = vunpack.c.l.b16 %v190
      %v657 = vunpack.c.h.b16 %v190
      %v658 = vunpack.c.l.b16 %v191
      %v659 = vunpack.c.h.b16 %v191
      %v660 = vunpack.c.l.b16 %v192
      %v661 = vunpack.c.l.b16 %v193
      %v662 = vunpack.c.h.b16 %v193
      %v663 = vunpack.c.l.b16 %v194
      %v664 = vunpack.c.h.b16 %v194
      %v665 = vunpack.c.l.b16 %v195
      %v666 = vunpack.c.h.b16 %v195
      %v667 = vunpack.c.l.b16 %v196
      %v668 = vunpack.c.h.b16 %v196
      %v669 = vunpack.c.l.b16 %v197
      %v670 = vunpack.c.l.b16 %v198
      %v671 = vunpack.c.h.b16 %v198
      %v672 = vunpack.c.l.b16 %v199
      %v673 = vunpack.c.h.b16 %v199
      %v674 = vunpack.c.l.b16 %v200
      %v675 = vunpack.c.h.b16 %v200
      %v676 = vunpack.c.l.b16 %v201
      %v677 = vunpack.c.h.b16 %v201
      %v678 = vunpack.c.l.b16 %v202
      %v679 = vunpack.c.l.b16 %v203
      %v680 = vunpack.c.h.b16 %v203
      %v681 = vunpack.c.l.b16 %v204
      %v682 = vunpack.c.h.b16 %v204
      %v683 = vunpack.c.l.b16 %v205
      %v684 = vunpack.c.h.b16 %v205
      %v685 = vunpack.c.l.b16 %v206
      %v686 = vunpack.c.h.b16 %v206
      %v687 = vunpack.c.l.b16 %v207
      %v688 = vunpack.c.l.b16 %v208
      %v689 = vunpack.c.h.b16 %v208
      %v690 = vunpack.c.l.b16 %v209
      %v691 = vunpack.c.h.b16 %v209
      %v692 = vunpack.c.l.b16 %v210
      %v693 = vunpack.c.h.b16 %v210
      %v694 = vunpack.c.l.b16 %v211
      %v695 = vunpack.c.h.b16 %v211
      %v696 = vunpack.c.l.b16 %v212
      %v697 = vunpack.c.l.b16 %v213
      %v698 = vunpack.c.h.b16 %v213
      %v699 = vunpack.c.l.b16 %v214
      %v700 = vunpack.c.h.b16 %v214
      %v701 = vunpack.c.l.b16 %v215
      %v702 = vunpack.c.h.b16 %v215
      %v703 = vunpack.c.l.b16 %v216
      %v704 = vunpack.c.h.b16 %v216
      %v705 = vunpack.c.l.b16 %v217
      %v706 = vunpack.c.l.b16 %v218
      %v707 = vunpack.c.h.b16 %v218
      %v708 = vunpack.c.l.b16 %v219
      %v709 = vunpack.c.h.b16 %v219
      %v710 = vunpack.c.l.b16 %v220
      %v711 = vunpack.c.h.b16 %v220
      %v712 = vunpack.c.l.b16 %v221
      %v713 = vunpack.c.h.b16 %v221
      %v714 = vunpack.c.l.b16 %v222
      %v715 = vunpack.c.l.b16 %v223
      %v716 = vunpack.c.h.b16 %v223
      %v717 = vunpack.c.l.b16 %v224
      %v718 = vunpack.c.h.b16 %v224
      %v719 = vunpack.c.l.b16 %v225
      %v720 = vunpack.c.h.b16 %v225
      %v721 = vunpack.c.l.b16 %v226
      %v722 = vunpack.c.h.b16 %v226
      %v723 = vunpack.c.l.b16 %v227
      %v724 = vunpack.c.l.b16 %v228
      %v725 = vunpack.c.h.b16 %v228
      %v726 = vunpack.c.l.b16 %v229
      %v727 = vunpack.c.h.b16 %v229
      %v728 = vunpack.c.l.b16 %v230
      %v729 = vunpack.c.h.b16 %v230
      %v730 = vunpack.c.l.b16 %v231
      %v731 = vunpack.c.h.b16 %v231
      %v732 = vunpack.c.l.b16 %v232
      %v733 = vunpack.c.l.b16 %v233
      %v734 = vunpack.c.h.b16 %v233
      %v735 = vunpack.c.l.b16 %v234
      %v736 = vunpack.c.h.b16 %v234
      %v737 = vunpack.c.l.b16 %v235
      %v738 = vunpack.c.h.b16 %v235
      %v739 = vunpack.c.l.b16 %v236
      %v740 = vunpack.c.h.b16 %v236
      %v741 = vunpack.c.l.b16 %v237
      %v742 = vunpack.c.l.b16 %v238
      %v743 = vunpack.c.h.b16 %v238
      %v744 = vunpack.c.l.b16 %v239
      %v745 = vunpack.c.h.b16 %v239
      %v746 = vunpack.c.l.b16 %v240
      %v747 = vunpack.c.h.b16 %v240
      %v748 = vunpack.c.l.b16 %v241
      %v749 = vunpack.c.h.b16 %v241
      %v750 = vunpack.c.l.b16 %v242
      %v751 = vunpack.c.l.b16 %v243
      %v752 = vunpack.c.h.b16 %v243
      %v753 = vunpack.c.l.b16 %v244
      %v754 = vunpack.c.h.b16 %v244
      %v755 = vunpack.c.l.b16 %v245
      %v756 = vunpack.c.h.b16 %v245
      %v757 = vunpack.c.l.b16 %v246
      %v758 = vunpack.c.h.b16 %v246
      %v759 = vunpack.c.l.b16 %v247
      %v760 = vunpack.c.l.b16 %v248
      %v761 = vunpack.c.h.b16 %v248
      %v762 = vunpack.c.l.b16 %v249
      %v763 = vunpack.c.h.b16 %v249
      %v764 = vunpack.c.l.b16 %v250
      %v765 = vunpack.c.h.b16 %v250
      %v766 = vunpack.c.l.b16 %v251
      %v767 = vunpack.c.h.b16 %v251
      %v768 = vunpack.c.l.b16 %v252
      %v769 = vunpack.c.l.b16 %v253
      %v770 = vunpack.c.h.b16 %v253
      %v771 = vunpack.c.l.b16 %v254
      %v772 = vunpack.c.h.b16 %v254
      %v773 = vunpack.c.l.b16 %v255
      %v774 = vunpack.c.h.b16 %v255
      %v775 = vunpack.c.l.b16 %v256
      %v776 = vunpack.c.h.b16 %v256
      %v777 = vunpack.c.l.b16 %v257
      %v778 = vunpack.c.l.b16 %v258
      %v779 = vunpack.c.h.b16 %v258
      %v780 = vunpack.c.l.b16 %v259
      %v781 = vunpack.c.h.b16 %v259
      %v782 = vunpack.c.l.b16 %v260
      %v783 = vunpack.c.h.b16 %v260
      %v784 = vunpack.c.l.b16 %v261
      %v785 = vunpack.c.h.b16 %v261
      %v786 = vunpack.c.l.b16 %v262
      %v787 = vunpack.c.l.b16 %v263
      %v788 = vunpack.c.h.b16 %v263
      %v789 = vunpack.c.l.b16 %v264
      %v790 = vunpack.c.h.b16 %v264
      %v791 = vunpack.c.l.b16 %v265
      %v792 = vunpack.c.h.b16 %v265
      %v793 = vunpack.c.l.b16 %v266
      %v794 = vunpack.c.h.b16 %v266
      %v795 = vunpack.c.l.b16 %v267
      %v796 = vunpack.c.l.b16 %v268
      %v797 = vunpack.c.h.b16 %v268
      %v798 = vunpack.c.l.b16 %v269
      %v799 = vunpack.c.h.b16 %v269
      %v800 = vunpack.c.l.b16 %v270
      %v801 = vunpack.c.h.b16 %v270
      %v802 = vunpack.c.l.b16 %v271
      %v803 = vunpack.c.h.b16 %v271
      %v804 = vunpack.c.l.b16 %v272
      %v805 = vunpack.c.l.b16 %v273
      %v806 = vunpack.c.h.b16 %v273
      %v807 = vunpack.c.l.b16 %v274
      %v808 = vunpack.c.h.b16 %v274
      %v809 = vunpack.c.l.b16 %v275
      %v810 = vunpack.c.h.b16 %v275
      %v811 = vunpack.c.l.b16 %v276
      %v812 = vunpack.c.h.b16 %v276
      %v813 = vunpack.c.l.b16 %v277
      %v814 = vunpack.c.l.b16 %v278
      %v815 = vunpack.c.h.b16 %v278
      %v816 = vunpack.c.l.b16 %v279
      %v817 = vunpack.c.h.b16 %v279
      %v818 = vunpack.c.l.b16 %v280
      %v819 = vunpack.c.h.b16 %v280
      %v820 = vunpack.c.l.b16 %v281
      %v821 = vunpack.c.h.b16 %v281
      %v822 = vunpack.c.l.b16 %v282
      %v823 = vunpack.c.l.b16 %v283
      %v824 = vunpack.c.h.b16 %v283
      %v825 = vunpack.c.l.b16 %v284
      %v826 = vunpack.c.h.b16 %v284
      %v827 = vunpack.c.l.b16 %v285
      %v828 = vunpack.c.h.b16 %v285
      %v829 = vunpack.c.l.b16 %v286
      %v830 = vunpack.c.h.b16 %v286
      %v831 = vunpack.c.l.b16 %v287
      %v832 = vunpack.c.l.b16 %v288
      %v833 = vunpack.c.h.b16 %v288
      %v834 = vunpack.c.l.b16 %v289
      %v835 = vunpack.c.h.b16 %v289
      %v836 = vunpack.c.l.b16 %v290
      %v837 = vunpack.c.h.b16 %v290
      %v838 = vunpack.c.l.b16 %v291
      %v839 = vunpack.c.h.b16 %v291
      %v840 = vunpack.c.l.b16 %v292
      %v841 = vunpack.c.l.b16 %v293
      %v842 = vunpack.c.h.b16 %v293
      %v843 = vunpack.c.l.b16 %v294
      %v844 = vunpack.c.h.b16 %v294
      %v845 = vunpack.c.l.b16 %v295
      %v846 = vunpack.c.h.b16 %v295
      %v847 = vunpack.c.l.b16 %v296
      %v848 = vunpack.c.h.b16 %v296
      %v849 = vunpack.c.l.b16 %v297
      %v850 = vunpack.c.l.b16 %v298
      %v851 = vunpack.c.h.b16 %v298
      %v852 = vunpack.c.l.b16 %v299
      %v853 = vunpack.c.h.b16 %v299
      %v854 = vunpack.c.l.b16 %v300
      %v855 = vunpack.c.h.b16 %v300
      %v856 = vunpack.c.l.b16 %v301
      %v857 = vunpack.c.h.b16 %v301
      %v858 = vunpack.c.l.b16 %v302
      %v859 = vunpack.c.l.b16 %v303
      %v860 = vunpack.c.h.b16 %v303
      %v861 = vunpack.c.l.b16 %v304
      %v862 = vunpack.c.h.b16 %v304
      %v863 = vunpack.c.l.b16 %v305
      %v864 = vunpack.c.h.b16 %v305
      %v865 = vunpack.c.l.b16 %v306
      %v866 = vunpack.c.h.b16 %v306
      %v867 = vunpack.c.l.b16 %v307
      %v868 = vunpack.c.l.b16 %v308
      %v869 = vunpack.c.h.b16 %v308
      %v870 = vunpack.c.l.b16 %v309
      %v871 = vunpack.c.h.b16 %v309
      %v872 = vunpack.c.l.b16 %v310
      %v873 = vunpack.c.h.b16 %v310
      %v874 = vunpack.c.l.b16 %v311
      %v875 = vunpack.c.h.b16 %v311
      %v876 = vunpack.c.l.b16 %v312
      %v877 = vunpack.c.l.b16 %v313
      %v878 = vunpack.c.h.b16 %v313
      %v879 = vunpack.c.l.b16 %v314
      %v880 = vunpack.c.h.b16 %v314
      %v881 = vunpack.c.l.b16 %v315
      %v882 = vunpack.c.h.b16 %v315
      %v883 = vunpack.c.l.b16 %v316
      %v884 = vunpack.c.h.b16 %v316
      %v885 = vunpack.c.l.b16 %v317
      %v886 = vunpack.c.l.b16 %v318
      %v887 = vunpack.c.h.b16 %v318
      %v888 = vunpack.c.l.b16 %v319
      %v889 = vunpack.c.h.b16 %v319
      %v890 = vunpack.c.l.b16 %v320
      %v891 = vunpack.c.h.b16 %v320
      %v892 = vunpack.c.l.b16 %v321
      %v893 = vunpack.c.h.b16 %v321
      %v894 = vunpack.c.l.b16 %v322
      %v895 = vunpack.c.l.b16 %v323
      %v896 = vunpack.c.h.b16 %v323
      %v897 = vunpack.c.l.b16 %v324
      %v898 = vunpack.c.h.b16 %v324
      %v899 = vunpack.c.l.b16 %v325
      %v900 = vunpack.c.h.b16 %v325
      %v901 = vunpack.c.l.b16 %v326
      %v902 = vunpack.c.h.b16 %v326
      %v903 = vunpack.c.l.b16 %v327
      %v904 = vunpack.c.l.b16 %v328
      %v905 = vunpack.c.h.b16 %v328
      %v906 = vunpack.c.l.b16 %v329
      %v907 = vunpack.c.h.b16 %v329
      %v908 = vunpack.c.l.b16 %v330
      %v909 = vunpack.c.h.b16 %v330
      %v910 = vunpack.c.l.b16 %v331
      %v911 = vunpack.c.h.b16 %v331
      %v912 = vunpack.c.l.b16 %v332
      %v913 = vunpack.c.l.b16 %v333
      %v914 = vunpack.c.h.b16 %v333
      %v915 = vunpack.c.l.b16 %v334
      %v916 = vunpack.c.h.b16 %v334
      %v917 = vunpack.c.l.b16 %v335
      %v918 = vunpack.c.h.b16 %v335
      %v919 = vunpack.c.l.b16 %v336
      %v920 = vunpack.c.h.b16 %v336
      %v921 = vunpack.c.l.b16 %v337
      %v922 = vunpack.c.l.b16 %v338
      %v923 = vunpack.c.h.b16 %v338
      %v924 = vunpack.c.l.b16 %v339
      %v925 = vunpack.c.h.b16 %v339
      %v926 = vunpack.c.l.b16 %v340
      %v927 = vunpack.c.h.b16 %v340
      %v928 = vunpack.c.l.b16 %v341
      %v929 = vunpack.c.h.b16 %v341
      %v930 = vunpack.c.l.b16 %v342
      %v931 = vunpack.c.l.b16 %v343
      %v932 = vunpack.c.h.b16 %v343
      %v933 = vunpack.c.l.b16 %v344
      %v934 = vunpack.c.h.b16 %v344
      %v935 = vunpack.c.l.b16 %v345
      %v936 = vunpack.c.h.b16 %v345
      %v937 = vunpack.c.l.b16 %v346
      %v938 = vunpack.c.h.b16 %v346
      %v939 = vunpack.c.l.b16 %v347
      %v940 = vpack.c.b16 %v661, %v652
      %v941 = vpack.c.b16 %v662, %v653
      %v942 = vpack.c.b16 %v663, %v654
      %v943 = vpack.c.b16 %v664, %v655
      %v944 = vpack.c.b16 %v665, %v656
      %v945 = vpack.c.b16 %v666, %v657
      %v946 = vpack.c.b16 %v667, %v658
      %v947 = vpack.c.b16 %v668, %v659
      %v948 = vpack.c.b16 %v669, %v660
      %v949 = vpack.c.b16 %v679, %v670
      %v950 = vpack.c.b16 %v680, %v671
      %v951 = vpack.c.b16 %v681, %v672
      %v952 = vpack.c.b16 %v682, %v673
      %v953 = vpack.c.b16 %v683, %v674
      %v954 = vpack.c.b16 %v684, %v675
      %v955 = vpack.c.b16 %v685, %v676
      %v956 = vpack.c.b16 %v686, %v677
      %v957 = vpack.c.b16 %v687, %v678
      %v958 = vpack.c.b16 %v697, %v688
      %v959 = vpack.c.b16 %v698, %v689
      %v960 = vpack.c.b16 %v699, %v690
      %v961 = vpack.c.b16 %v700, %v691
      %v962 = vpack.c.b16 %v701, %v692
      %v963 = vpack.c.b16 %v702, %v693
      %v964 = vpack.c.b16 %v703, %v694
      %v965 = vpack.c.b16 %v704, %v695
      %v966 = vpack.c.b16 %v705, %v696
      %v967 = vpack.c.b16 %v715, %v706
      %v968 = vpack.c.b16 %v716, %v707
      %v969 = vpack.c.b16 %v717, %v708
      %v970 = vpack.c.b16 %v718, %v709
      %v971 = vpack.c.b16 %v719, %v710
      %v972 = vpack.c.b16 %v720, %v711
      %v973 = vpack.c.b16 %v721, %v712
      %v974 = vpack.c.b16 %v722, %v713
      %v975 = vpack.c.b16 %v723, %v714
      %v976 = vpack.c.b16 %v733, %v724
      %v977 = vpack.c.b16 %v734, %v725
      %v978 = vpack.c.b16 %v735, %v726
      %v979 = vpack.c.b16 %v736, %v727
      %v980 = vpack.c.b16 %v737, %v728
      %v981 = vpack.c.b16 %v738, %v729
      %v982 = vpack.c.b16 %v739, %v730
      %v983 = vpack.c.b16 %v740, %v731
      %v984 = vpack.c.b16 %v741, %v732
      %v985 = vpack.c.b16 %v751, %v742
      %v986 = vpack.c.b16 %v752, %v743
      %v987 = vpack.c.b16 %v753, %v744
      %v988 = vpack.c.b16 %v754, %v745
      %v989 = vpack.c.b16 %v755, %v746
      %v990 = vpack.c.b16 %v756, %v747
      %v991 = vpack.c.b16 %v757, %v748
      %v992 = vpack.c.b16 %v758, %v749
      %v993 = vpack.c.b16 %v759, %v750
      %v994 = vpack.c.b16 %v769, %v760
      %v995 = vpack.c.b16 %v770, %v761
      %v996 = vpack.c.b16 %v771, %v762
      %v997 = vpack.c.b16 %v772, %v763
      %v998 = vpack.c.b16 %v773, %v764
      %v999 = vpack.c.b16 %v774, %v765
      %v1000 = vpack.c.b16 %v775, %v766
      %v1001 = vpack.c.b16 %v776, %v767
      %v1002 = vpack.c.b16 %v777, %v768
      %v1003 = vpack.c.b16 %v787, %v778
      %v1004 = vpack.c.b16 %v788, %v779
      %v1005 = vpack.c.b16 %v789, %v780
      %v1006 = vpack.c.b16 %v790, %v781
      %v1007 = vpack.c.b16 %v791, %v782
      %v1008 = vpack.c.b16 %v792, %v783
      %v1009 = vpack.c.b16 %v793, %v784
      %v1010 = vpack.c.b16 %v794, %v785
      %v1011 = vpack.c.b16 %v795, %v786
      %v1012 = vpack.c.b16 %v805, %v796
      %v1013 = vpack.c.b16 %v806, %v797
      %v1014 = vpack.c.b16 %v807, %v798
      %v1015 = vpack.c.b16 %v808, %v799
      %v1016 = vpack.c.b16 %v809, %v800
      %v1017 = vpack.c.b16 %v810, %v801
      %v1018 = vpack.c.b16 %v811, %v802
      %v1019 = vpack.c.b16 %v812, %v803
      %v1020 = vpack.c.b16 %v813, %v804
      %v1021 = vpack.c.b16 %v823, %v814
      %v1022 = vpack.c.b16 %v824, %v815
      %v1023 = vpack.c.b16 %v825, %v816
      %v1024 = vpack.c.b16 %v826, %v817
      %v1025 = vpack.c.b16 %v827, %v818
      %v1026 = vpack.c.b16 %v828, %v819
      %v1027 = vpack.c.b16 %v829, %v820
      %v1028 = vpack.c.b16 %v830, %v821
      %v1029 = vpack.c.b16 %v831, %v822
      %v1030 = vpack.c.b16 %v841, %v832
      %v1031 = vpack.c.b16 %v842, %v833
      %v1032 = vpack.c.b16 %v843, %v834
      %v1033 = vpack.c.b16 %v844, %v835
      %v1034 = vpack.c.b16 %v845, %v836
      %v1035 = vpack.c.b16 %v846, %v837
      %v1036 = vpack.c.b16 %v847, %v838
      %v1037 = vpack.c.b16 %v848, %v839
      %v1038 = vpack.c.b16 %v849, %v840
      %v1039 = vpack.c.b16 %v859, %v850
      %v1040 = vpack.c.b16 %v860, %v851
      %v1041 = vpack.c.b16 %v861, %v852
      %v1042 = vpack.c.b16 %v862, %v853
      %v1043 = vpack.c.b16 %v863, %v854
      %v1044 = vpack.c.b16 %v864, %v855
      %v1045 = vpack.c.b16 %v865, %v856
      %v1046 = vpack.c.b16 %v866, %v857
      %v1047 = vpack.c.b16 %v867, %v858
      %v1048 = vpack.c.b16 %v877, %v868
      %v1049 = vpack.c.b16 %v878, %v869
      %v1050 = vpack.c.b16 %v879, %v870
      %v1051 = vpack.c.b16 %v880, %v871
      %v1052 = vpack.c.b16 %v881, %v872
      %v1053 = vpack.c.b16 %v882, %v873
      %v1054 = vpack.c.b16 %v883, %v874
      %v1055 = vpack.c.b16 %v884, %v875
      %v1056 = vpack.c.b16 %v885, %v876
      %v1057 = vpack.c.b16 %v895, %v886
      %v1058 = vpack.c.b16 %v896, %v887
      %v1059 = vpack.c.b16 %v897, %v888
      %v1060 = vpack.c.b16 %v898, %v889
      %v1061 = vpack.c.b16 %v899, %v890
      %v1062 = vpack.c.b16 %v900, %v891
      %v1063 = vpack.c.b16 %v901, %v892
      %v1064 = vpack.c.b16 %v902, %v893
      %v1065 = vpack.c.b16 %v903, %v894
      %v1066 = vpack.c.b16 %v913, %v904
      %v1067 = vpack.c.b16 %v914, %v905
      %v1068 = vpack.c.b16 %v915, %v906
      %v1069 = vpack.c.b16 %v916, %v907
      %v1070 = vpack.c.b16 %v917, %v908
      %v1071 = vpack.c.b16 %v918, %v909
      %v1072 = vpack.c.b16 %v919, %v910
      %v1073 = vpack.c.b16 %v920, %v911
      %v1074 = vpack.c.b16 %v921, %v912
      %v1075 = vpack.c.b16 %v931, %v922
      %v1076 = vpack.c.b16 %v932, %v923
      %v1077 = vpack.c.b16 %v933, %v924
      %v1078 = vpack.c.b16 %v934, %v925
      %v1079 = vpack.c.b16 %v935, %v926
      %v1080 = vpack.c.b16 %v936, %v927
      %v1081 = vpack.c.b16 %v937, %v928
      %v1082 = vpack.c.b16 %v938, %v929
      %v1083 = vpack.c.b16 %v939, %v930
      %v1372 = vunpack.c.l.b16 %v348
      %v1373 = vunpack.c.l.b16 %v349
      %v1374 = vunpack.c.l.b16 %v350
      %v1375 = vunpack.c.l.b16 %v351
      %v1376 = vunpack.c.l.b16 %v352
      %v1377 = vunpack.c.l.b16 %v353
      %v1378 = vunpack.c.l.b16 %v354
      %v1379 = vunpack.c.l.b16 %v355
      %v1380 = vunpack.c.l.b16 %v356
      %v1381 = vunpack.c.l.b16 %v357
      %v1382 = vunpack.c.l.b16 %v358
      %v1383 = vunpack.c.l.b16 %v359
      %v1384 = vunpack.c.l.b16 %v360
      %v1385 = vunpack.c.l.b16 %v361
      %v1386 = vunpack.c.l.b16 %v362
      %v1387 = vunpack.c.l.b16 %v363
      %v1388 = vunpack.c.l.b16 %v364
      %v1389 = vunpack.c.l.b16 %v365
      %v1390 = vunpack.c.l.b16 %v366
      %v1391 = vunpack.c.l.b16 %v367
      %v1392 = vunpack.c.l.b16 %v368
      %v1393 = vunpack.c.l.b16 %v369
      %v1394 = vunpack.c.l.b16 %v370
      %v1395 = vunpack.c.l.b16 %v371
      %v1396 = vunpack.c.l.b16 %v372
      %v1397 = vunpack.c.l.b16 %v373
      %v1398 = vunpack.c.l.b16 %v374
      %v1399 = vunpack.c.l.b16 %v375
      %v1400 = vunpack.c.l.b16 %v376
      %v1401 = vunpack.c.l.b16 %v377
      %v1402 = vunpack.c.l.b16 %v378
      %v1403 = vunpack.c.l.b16 %v379
      %v1404 = vunpack.c.l.b16 %v380
      %v1405 = vunpack.c.l.b16 %v381
      %v1406 = vunpack.c.l.b16 %v382
      %v1407 = vunpack.c.l.b16 %v383
      %v1408 = vunpack.c.l.b16 %v384
      %v1409 = vunpack.c.l.b16 %v385
      %v1410 = vunpack.c.l.b16 %v386
      %v1411 = vunpack.c.l.b16 %v387
      %v1412 = vunpack.c.l.b16 %v388
      %v1413 = vunpack.c.l.b16 %v389
      %v1414 = vunpack.c.l.b16 %v390
      %v1415 = vunpack.c.l.b16 %v391
      %v1416 = vunpack.c.l.b16 %v392
      %v1417 = vunpack.c.l.b16 %v393
      %v1418 = vunpack.c.l.b16 %v394
      %v1419 = vunpack.c.l.b16 %v395
      %v1420 = vunpack.c.l.b16 %v396
      %v1421 = vunpack.c.l.b16 %v397
      %v1422 = vunpack.c.l.b16 %v398
      %v1423 = vunpack.c.l.b16 %v399
      %v1424 = vunpack.c.l.b16 %v400
      %v1425 = vunpack.c.l.b16 %v401
      %v1426 = vunpack.c.l.b16 %v402
      %v1427 = vunpack.c.l.b16 %v403
      %v1428 = vunpack.c.l.b16 %v404
      %v1429 = vunpack.c.l.b16 %v405
      %v1430 = vunpack.c.l.b16 %v406
      %v1431 = vunpack.c.l.b16 %v407
      %v1432 = vunpack.c.l.b16 %v408
      %v1433 = vunpack.c.l.b16 %v409
      %v1434 = vunpack.c.l.b16 %v410
      %v1435 = vunpack.c.l.b16 %v411
      %v1436 = vunpack.c.l.b16 %v412
      %v1437 = vunpack.c.l.b16 %v413
      %v1438 = vunpack.c.l.b16 %v414
      %v1439 = vunpack.c.l.b16 %v415
      %v1440 = vunpack.c.l.b16 %v416
      %v1441 = vunpack.c.l.b16 %v417
      %v1442 = vunpack.c.l.b16 %v418
      %v1443 = vunpack.c.l.b16 %v419
      %v1444 = vunpack.c.l.b16 %v420
      %v1445 = vunpack.c.l.b16 %v421
      %v1446 = vunpack.c.l.b16 %v422
      %v1447 = vunpack.c.l.b16 %v423
      %v1448 = vunpack.c.l.b16 %v424
      %v1449 = vunpack.c.l.b16 %v425
      %v1450 = vunpack.c.l.b16 %v426
      %v1451 = vunpack.c.l.b16 %v427
      %v1452 = vunpack.c.l.b16 %v428
      %v1453 = vunpack.c.l.b16 %v429
      %v1454 = vunpack.c.l.b16 %v430
      %v1455 = vunpack.c.l.b16 %v431
      %v1456 = vunpack.c.l.b16 %v432
      %v1457 = vunpack.c.l.b16 %v433
      %v1458 = vunpack.c.l.b16 %v434
      %v1459 = vunpack.c.l.b16 %v435
      %v1460 = vunpack.c.l.b16 %v436
      %v1461 = vunpack.c.l.b16 %v437
      %v1462 = vunpack.c.l.b16 %v438
      %v1463 = vunpack.c.l.b16 %v439
      %v1464 = vunpack.c.l.b16 %v440
      %v1465 = vunpack.c.l.b16 %v441
      %v1466 = vunpack.c.l.b16 %v442
      %v1467 = vunpack.c.l.b16 %v443
      %v1468 = vunpack.c.l.b16 %v444
      %v1469 = vunpack.c.l.b16 %v445
      %v1470 = vunpack.c.l.b16 %v446
      %v1471 = vunpack.c.l.b16 %v447
      %v1472 = vunpack.c.l.b16 %v448
      %v1473 = vunpack.c.l.b16 %v449
      %v1474 = vunpack.c.l.b16 %v450
      %v1475 = vunpack.c.l.b16 %v451
      %v1476 = vunpack.c.l.b16 %v452
      %v1477 = vunpack.c.l.b16 %v453
      %v1478 = vunpack.c.l.b16 %v454
      %v1479 = vunpack.c.l.b16 %v455
      %v1480 = vunpack.c.l.b16 %v456
      %v1481 = vunpack.c.l.b16 %v457
      %v1482 = vunpack.c.l.b16 %v458
      %v1483 = vunpack.c.l.b16 %v459
      %v1484 = vunpack.c.l.b16 %v460
      %v1485 = vunpack.c.l.b16 %v461
      %v1486 = vunpack.c.l.b16 %v462
      %v1487 = vunpack.c.l.b16 %v463
      %v1488 = vunpack.c.l.b16 %v464
      %v1489 = vunpack.c.l.b16 %v465
      %v1490 = vunpack.c.l.b16 %v466
      %v1491 = vunpack.c.l.b16 %v467
      %v1492 = vunpack.c.l.b16 %v468
      %v1493 = vunpack.c.l.b16 %v469
      %v1494 = vunpack.c.l.b16 %v470
      %v1495 = vunpack.c.l.b16 %v471
      %v1496 = vunpack.c.l.b16 %v472
      %v1497 = vunpack.c.l.b16 %v473
      %v1498 = vunpack.c.l.b16 %v474
      %v1499 = vunpack.c.l.b16 %v475
      %v1500 = vunpack.c.l.b16 %v476
      %v1501 = vunpack.c.l.b16 %v477
      %v1502 = vunpack.c.l.b16 %v478
      %v1503 = vunpack.c.l.b16 %v479
      %v1504 = vunpack.c.l.b16 %v480
      %v1505 = vunpack.c.l.b16 %v481
      %v1506 = vunpack.c.l.b16 %v482
      %v1507 = vunpack.c.l.b16 %v483
      %v1508 = vunpack.c.l.b16 %v484
      %v1509 = vunpack.c.l.b16 %v485
      %v1510 = vunpack.c.l.b16 %v486
      %v1511 = vunpack.c.l.b16 %v487
      %v1512 = vunpack.c.l.b16 %v488
      %v1513 = vunpack.c.l.b16 %v489
      %v1514 = vunpack.c.l.b16 %v490
      %v1515 = vunpack.c.l.b16 %v491
      %v1516 = vpack.c.b16 %v1373, %v1372
      %v1517 = vpack.c.b16 %v1375, %v1374
      %v1518 = vpack.c.b16 %v1377, %v1376
      %v1519 = vpack.c.b16 %v1379, %v1378
      %v1520 = vpack.c.b16 %v1381, %v1380
      %v1521 = vpack.c.b16 %v1383, %v1382
      %v1522 = vpack.c.b16 %v1385, %v1384
      %v1523 = vpack.c.b16 %v1387, %v1386
      %v1524 = vpack.c.b16 %v1389, %v1388
      %v1525 = vpack.c.b16 %v1391, %v1390
      %v1526 = vpack.c.b16 %v1393, %v1392
      %v1527 = vpack.c.b16 %v1395, %v1394
      %v1528 = vpack.c.b16 %v1397, %v1396
      %v1529 = vpack.c.b16 %v1399, %v1398
      %v1530 = vpack.c.b16 %v1401, %v1400
      %v1531 = vpack.c.b16 %v1403, %v1402
      %v1532 = vpack.c.b16 %v1405, %v1404
      %v1533 = vpack.c.b16 %v1407, %v1406
      %v1534 = vpack.c.b16 %v1409, %v1408
      %v1535 = vpack.c.b16 %v1411, %v1410
      %v1536 = vpack.c.b16 %v1413, %v1412
      %v1537 = vpack.c.b16 %v1415, %v1414
      %v1538 = vpack.c.b16 %v1417, %v1416
      %v1539 = vpack.c.b16 %v1419, %v1418
      %v1540 = vpack.c.b16 %v1421, %v1420
      %v1541 = vpack.c.b16 %v1423, %v1422
      %v1542 = vpack.c.b16 %v1425, %v1424
      %v1543 = vpack.c.b16 %v1427, %v1426
      %v1544 = vpack.c.b16 %v1429, %v1428
      %v1545 = vpack.c.b16 %v1431, %v1430
      %v1546 = vpack.c.b16 %v1433, %v1432
      %v1547 = vpack.c.b16 %v1435, %v1434
      %v1548 = vpack.c.b16 %v1437, %v1436
      %v1549 = vpack.c.b16 %v1439, %v1438
      %v1550 = vpack.c.b16 %v1441, %v1440
      %v1551 = vpack.c.b16 %v1443, %v1442
      %v1552 = vpack.c.b16 %v1445, %v1444
      %v1553 = vpack.c.b16 %v1447, %v1446
      %v1554 = vpack.c.b16 %v1449, %v1448
      %v1555 = vpack.c.b16 %v1451, %v1450
      %v1556 = vpack.c.b16 %v1453, %v1452
      %v1557 = vpack.c.b16 %v1455, %v1454
      %v1558 = vpack.c.b16 %v1457, %v1456
      %v1559 = vpack.c.b16 %v1459, %v1458
      %v1560 = vpack.c.b16 %v1461, %v1460
      %v1561 = vpack.c.b16 %v1463, %v1462
      %v1562 = vpack.c.b16 %v1465, %v1464
      %v1563 = vpack.c.b16 %v1467, %v1466
      %v1564 = vpack.c.b16 %v1469, %v1468
      %v1565 = vpack.c.b16 %v1471, %v1470
      %v1566 = vpack.c.b16 %v1473, %v1472
      %v1567 = vpack.c.b16 %v1475, %v1474
      %v1568 = vpack.c.b16 %v1477, %v1476
      %v1569 = vpack.c.b16 %v1479, %v1478
      %v1570 = vpack.c.b16 %v1481, %v1480
      %v1571 = vpack.c.b16 %v1483, %v1482
      %v1572 = vpack.c.b16 %v1485, %v1484
      %v1573 = vpack.c.b16 %v1487, %v1486
      %v1574 = vpack.c.b16 %v1489, %v1488
      %v1575 = vpack.c.b16 %v1491, %v1490
      %v1576 = vpack.c.b16 %v1493, %v1492
      %v1577 = vpack.c.b16 %v1495, %v1494
      %v1578 = vpack.c.b16 %v1497, %v1496
      %v1579 = vpack.c.b16 %v1499, %v1498
      %v1580 = vpack.c.b16 %v1501, %v1500
      %v1581 = vpack.c.b16 %v1503, %v1502
      %v1582 = vpack.c.b16 %v1505, %v1504
      %v1583 = vpack.c.b16 %v1507, %v1506
      %v1584 = vpack.c.b16 %v1509, %v1508
      %v1585 = vpack.c.b16 %v1511, %v1510
      %v1586 = vpack.c.b16 %v1513, %v1512
      %v1587 = vpack.c.b16 %v1515, %v1514
      %1660 = vmatpush.bf16.msra.mxu0 %v1523
      %1661 = vmatpush.bf16.msra.mxu0 %v1522
      %1662 = vmatpush.bf16.msra.mxu0 %v1521
      %1663 = vmatpush.bf16.msra.mxu0 %v1520
      %1664 = vmatpush.bf16.msra.mxu0 %v1519
      %1665 = vmatpush.bf16.msra.mxu0 %v1518
      %1666 = vmatpush.bf16.msra.mxu0 %v1517
      %1667 = vmatpush.bf16.msra.mxu0 %v1516
      %1668 = vmatmul.bf16.gmra.mxu0 %v940
      %v1669 = vpop.f32.mrf.mxu0
      %v1670 = vadd.f32 0.0, %v1669
      %v1671 = vpop.f32.mrf.mxu0
      %v1672 = vadd.f32 0.0, %v1671
      %1673 = vmatmul.bf16.gmra.mxu0 %v949
      %v1674 = vpop.f32.mrf.mxu0
      %v1675 = vadd.f32 0.0, %v1674
      %v1676 = vpop.f32.mrf.mxu0
      %v1677 = vadd.f32 0.0, %v1676
      %1678 = vmatmul.bf16.gmra.mxu0 %v958
      %v1679 = vpop.f32.mrf.mxu0
      %v1680 = vadd.f32 0.0, %v1679
      %v1681 = vpop.f32.mrf.mxu0
      %v1682 = vadd.f32 0.0, %v1681
      %1683 = vmatmul.bf16.gmra.mxu0 %v967
      %v1684 = vpop.f32.mrf.mxu0
      %v1685 = vadd.f32 0.0, %v1684
      %v1686 = vpop.f32.mrf.mxu0
      %v1687 = vadd.f32 0.0, %v1686
      %1688 = vmatmul.bf16.gmra.mxu0 %v976
      %v1689 = vpop.f32.mrf.mxu0
      %v1690 = vadd.f32 0.0, %v1689
      %v1691 = vpop.f32.mrf.mxu0
      %v1692 = vadd.f32 0.0, %v1691
      %1693 = vmatmul.bf16.gmra.mxu0 %v985
      %v1694 = vpop.f32.mrf.mxu0
      %v1695 = vadd.f32 0.0, %v1694
      %v1696 = vpop.f32.mrf.mxu0
      %v1697 = vadd.f32 0.0, %v1696
      %1698 = vmatmul.bf16.gmra.mxu0 %v994
      %v1699 = vpop.f32.mrf.mxu0
      %v1700 = vadd.f32 0.0, %v1699
      %v1701 = vpop.f32.mrf.mxu0
      %v1702 = vadd.f32 0.0, %v1701
      %1703 = vmatmul.bf16.gmra.mxu0 %v1003
      %v1704 = vpop.f32.mrf.mxu0
      %v1705 = vadd.f32 0.0, %v1704
      %v1706 = vpop.f32.mrf.mxu0
      %v1707 = vadd.f32 0.0, %v1706
      %1708 = vmatmul.bf16.gmra.mxu0 %v1012
      %v1709 = vpop.f32.mrf.mxu0
      %v1710 = vadd.f32 0.0, %v1709
      %v1711 = vpop.f32.mrf.mxu0
      %v1712 = vadd.f32 0.0, %v1711
      %1713 = vmatmul.bf16.gmra.mxu0 %v1021
      %v1714 = vpop.f32.mrf.mxu0
      %v1715 = vadd.f32 0.0, %v1714
      %v1716 = vpop.f32.mrf.mxu0
      %v1717 = vadd.f32 0.0, %v1716
      %1718 = vmatmul.bf16.gmra.mxu0 %v1030
      %v1719 = vpop.f32.mrf.mxu0
      %v1720 = vadd.f32 0.0, %v1719
      %v1721 = vpop.f32.mrf.mxu0
      %v1722 = vadd.f32 0.0, %v1721
      %1723 = vmatmul.bf16.gmra.mxu0 %v1039
      %v1724 = vpop.f32.mrf.mxu0
      %v1725 = vadd.f32 0.0, %v1724
      %v1726 = vpop.f32.mrf.mxu0
      %v1727 = vadd.f32 0.0, %v1726
      %1728 = vmatmul.bf16.gmra.mxu0 %v1048
      %v1729 = vpop.f32.mrf.mxu0
      %v1730 = vadd.f32 0.0, %v1729
      %v1731 = vpop.f32.mrf.mxu0
      %v1732 = vadd.f32 0.0, %v1731
      %1733 = vmatmul.bf16.gmra.mxu0 %v1057
      %v1734 = vpop.f32.mrf.mxu0
      %v1735 = vadd.f32 0.0, %v1734
      %v1736 = vpop.f32.mrf.mxu0
      %v1737 = vadd.f32 0.0, %v1736
      %1738 = vmatmul.bf16.gmra.mxu0 %v1066
      %v1739 = vpop.f32.mrf.mxu0
      %v1740 = vadd.f32 0.0, %v1739
      %v1741 = vpop.f32.mrf.mxu0
      %v1742 = vadd.f32 0.0, %v1741
      %1743 = vmatmul.bf16.gmra.mxu0 %v1075
      %v1744 = vpop.f32.mrf.mxu0
      %v1745 = vadd.f32 0.0, %v1744
      %v1746 = vpop.f32.mrf.mxu0
      %v1747 = vadd.f32 0.0, %v1746
      %1748 = vdwg.mxu0
      %1749 = vmatpush.bf16.msra.mxu0 %v1531
      %1750 = vmatpush.bf16.msra.mxu0 %v1530
      %1751 = vmatpush.bf16.msra.mxu0 %v1529
      %1752 = vmatpush.bf16.msra.mxu0 %v1528
      %1753 = vmatpush.bf16.msra.mxu0 %v1527
      %1754 = vmatpush.bf16.msra.mxu0 %v1526
      %1755 = vmatpush.bf16.msra.mxu0 %v1525
      %1756 = vmatpush.bf16.msra.mxu0 %v1524
      %1757 = vmatmul.bf16.gmra.mxu0 %v941
      %v1758 = vpop.f32.mrf.mxu0
      %v1759 = vadd.f32 %v1670, %v1758
      %v1760 = vpop.f32.mrf.mxu0
      %v1761 = vadd.f32 %v1672, %v1760
      %1762 = vmatmul.bf16.gmra.mxu0 %v950
      %v1763 = vpop.f32.mrf.mxu0
      %v1764 = vadd.f32 %v1675, %v1763
      %v1765 = vpop.f32.mrf.mxu0
      %v1766 = vadd.f32 %v1677, %v1765
      %1767 = vmatmul.bf16.gmra.mxu0 %v959
      %v1768 = vpop.f32.mrf.mxu0
      %v1769 = vadd.f32 %v1680, %v1768
      %v1770 = vpop.f32.mrf.mxu0
      %v1771 = vadd.f32 %v1682, %v1770
      %1772 = vmatmul.bf16.gmra.mxu0 %v968
      %v1773 = vpop.f32.mrf.mxu0
      %v1774 = vadd.f32 %v1685, %v1773
      %v1775 = vpop.f32.mrf.mxu0
      %v1776 = vadd.f32 %v1687, %v1775
      %1777 = vmatmul.bf16.gmra.mxu0 %v977
      %v1778 = vpop.f32.mrf.mxu0
      %v1779 = vadd.f32 %v1690, %v1778
      %v1780 = vpop.f32.mrf.mxu0
      %v1781 = vadd.f32 %v1692, %v1780
      %1782 = vmatmul.bf16.gmra.mxu0 %v986
      %v1783 = vpop.f32.mrf.mxu0
      %v1784 = vadd.f32 %v1695, %v1783
      %v1785 = vpop.f32.mrf.mxu0
      %v1786 = vadd.f32 %v1697, %v1785
      %1787 = vmatmul.bf16.gmra.mxu0 %v995
      %v1788 = vpop.f32.mrf.mxu0
      %v1789 = vadd.f32 %v1700, %v1788
      %v1790 = vpop.f32.mrf.mxu0
      %v1791 = vadd.f32 %v1702, %v1790
      %1792 = vmatmul.bf16.gmra.mxu0 %v1004
      %v1793 = vpop.f32.mrf.mxu0
      %v1794 = vadd.f32 %v1705, %v1793
      %v1795 = vpop.f32.mrf.mxu0
      %v1796 = vadd.f32 %v1707, %v1795
      %1797 = vmatmul.bf16.gmra.mxu0 %v1013
      %v1798 = vpop.f32.mrf.mxu0
      %v1799 = vadd.f32 %v1710, %v1798
      %v1800 = vpop.f32.mrf.mxu0
      %v1801 = vadd.f32 %v1712, %v1800
      %1802 = vmatmul.bf16.gmra.mxu0 %v1022
      %v1803 = vpop.f32.mrf.mxu0
      %v1804 = vadd.f32 %v1715, %v1803
      %v1805 = vpop.f32.mrf.mxu0
      %v1806 = vadd.f32 %v1717, %v1805
      %1807 = vmatmul.bf16.gmra.mxu0 %v1031
      %v1808 = vpop.f32.mrf.mxu0
      %v1809 = vadd.f32 %v1720, %v1808
      %v1810 = vpop.f32.mrf.mxu0
      %v1811 = vadd.f32 %v1722, %v1810
      %1812 = vmatmul.bf16.gmra.mxu0 %v1040
      %v1813 = vpop.f32.mrf.mxu0
      %v1814 = vadd.f32 %v1725, %v1813
      %v1815 = vpop.f32.mrf.mxu0
      %v1816 = vadd.f32 %v1727, %v1815
      %1817 = vmatmul.bf16.gmra.mxu0 %v1049
      %v1818 = vpop.f32.mrf.mxu0
      %v1819 = vadd.f32 %v1730, %v1818
      %v1820 = vpop.f32.mrf.mxu0
      %v1821 = vadd.f32 %v1732, %v1820
      %1822 = vmatmul.bf16.gmra.mxu0 %v1058
      %v1823 = vpop.f32.mrf.mxu0
      %v1824 = vadd.f32 %v1735, %v1823
      %v1825 = vpop.f32.mrf.mxu0
      %v1826 = vadd.f32 %v1737, %v1825
      %1827 = vmatmul.bf16.gmra.mxu0 %v1067
      %v1828 = vpop.f32.mrf.mxu0
      %v1829 = vadd.f32 %v1740, %v1828
      %v1830 = vpop.f32.mrf.mxu0
      %v1831 = vadd.f32 %v1742, %v1830
      %1832 = vmatmul.bf16.gmra.mxu0 %v1076
      %v1833 = vpop.f32.mrf.mxu0
      %v1834 = vadd.f32 %v1745, %v1833
      %v1835 = vpop.f32.mrf.mxu0
      %v1836 = vadd.f32 %v1747, %v1835
      %1837 = vdwg.mxu0
      %1838 = vmatpush.bf16.msra.mxu0 %v1539
      %1839 = vmatpush.bf16.msra.mxu0 %v1538
      %1840 = vmatpush.bf16.msra.mxu0 %v1537
      %1841 = vmatpush.bf16.msra.mxu0 %v1536
      %1842 = vmatpush.bf16.msra.mxu0 %v1535
      %1843 = vmatpush.bf16.msra.mxu0 %v1534
      %1844 = vmatpush.bf16.msra.mxu0 %v1533
      %1845 = vmatpush.bf16.msra.mxu0 %v1532
      %1846 = vmatmul.bf16.gmra.mxu0 %v942
      %v1847 = vpop.f32.mrf.mxu0
      %v1848 = vadd.f32 %v1759, %v1847
      %v1849 = vpop.f32.mrf.mxu0
      %v1850 = vadd.f32 %v1761, %v1849
      %1851 = vmatmul.bf16.gmra.mxu0 %v951
      %v1852 = vpop.f32.mrf.mxu0
      %v1853 = vadd.f32 %v1764, %v1852
      %v1854 = vpop.f32.mrf.mxu0
      %v1855 = vadd.f32 %v1766, %v1854
      %1856 = vmatmul.bf16.gmra.mxu0 %v960
      %v1857 = vpop.f32.mrf.mxu0
      %v1858 = vadd.f32 %v1769, %v1857
      %v1859 = vpop.f32.mrf.mxu0
      %v1860 = vadd.f32 %v1771, %v1859
      %1861 = vmatmul.bf16.gmra.mxu0 %v969
      %v1862 = vpop.f32.mrf.mxu0
      %v1863 = vadd.f32 %v1774, %v1862
      %v1864 = vpop.f32.mrf.mxu0
      %v1865 = vadd.f32 %v1776, %v1864
      %1866 = vmatmul.bf16.gmra.mxu0 %v978
      %v1867 = vpop.f32.mrf.mxu0
      %v1868 = vadd.f32 %v1779, %v1867
      %v1869 = vpop.f32.mrf.mxu0
      %v1870 = vadd.f32 %v1781, %v1869
      %1871 = vmatmul.bf16.gmra.mxu0 %v987
      %v1872 = vpop.f32.mrf.mxu0
      %v1873 = vadd.f32 %v1784, %v1872
      %v1874 = vpop.f32.mrf.mxu0
      %v1875 = vadd.f32 %v1786, %v1874
      %1876 = vmatmul.bf16.gmra.mxu0 %v996
      %v1877 = vpop.f32.mrf.mxu0
      %v1878 = vadd.f32 %v1789, %v1877
      %v1879 = vpop.f32.mrf.mxu0
      %v1880 = vadd.f32 %v1791, %v1879
      %1881 = vmatmul.bf16.gmra.mxu0 %v1005
      %v1882 = vpop.f32.mrf.mxu0
      %v1883 = vadd.f32 %v1794, %v1882
      %v1884 = vpop.f32.mrf.mxu0
      %v1885 = vadd.f32 %v1796, %v1884
      %1886 = vmatmul.bf16.gmra.mxu0 %v1014
      %v1887 = vpop.f32.mrf.mxu0
      %v1888 = vadd.f32 %v1799, %v1887
      %v1889 = vpop.f32.mrf.mxu0
      %v1890 = vadd.f32 %v1801, %v1889
      %1891 = vmatmul.bf16.gmra.mxu0 %v1023
      %v1892 = vpop.f32.mrf.mxu0
      %v1893 = vadd.f32 %v1804, %v1892
      %v1894 = vpop.f32.mrf.mxu0
      %v1895 = vadd.f32 %v1806, %v1894
      %1896 = vmatmul.bf16.gmra.mxu0 %v1032
      %v1897 = vpop.f32.mrf.mxu0
      %v1898 = vadd.f32 %v1809, %v1897
      %v1899 = vpop.f32.mrf.mxu0
      %v1900 = vadd.f32 %v1811, %v1899
      %1901 = vmatmul.bf16.gmra.mxu0 %v1041
      %v1902 = vpop.f32.mrf.mxu0
      %v1903 = vadd.f32 %v1814, %v1902
      %v1904 = vpop.f32.mrf.mxu0
      %v1905 = vadd.f32 %v1816, %v1904
      %1906 = vmatmul.bf16.gmra.mxu0 %v1050
      %v1907 = vpop.f32.mrf.mxu0
      %v1908 = vadd.f32 %v1819, %v1907
      %v1909 = vpop.f32.mrf.mxu0
      %v1910 = vadd.f32 %v1821, %v1909
      %1911 = vmatmul.bf16.gmra.mxu0 %v1059
      %v1912 = vpop.f32.mrf.mxu0
      %v1913 = vadd.f32 %v1824, %v1912
      %v1914 = vpop.f32.mrf.mxu0
      %v1915 = vadd.f32 %v1826, %v1914
      %1916 = vmatmul.bf16.gmra.mxu0 %v1068
      %v1917 = vpop.f32.mrf.mxu0
      %v1918 = vadd.f32 %v1829, %v1917
      %v1919 = vpop.f32.mrf.mxu0
      %v1920 = vadd.f32 %v1831, %v1919
      %1921 = vmatmul.bf16.gmra.mxu0 %v1077
      %v1922 = vpop.f32.mrf.mxu0
      %v1923 = vadd.f32 %v1834, %v1922
      %v1924 = vpop.f32.mrf.mxu0
      %v1925 = vadd.f32 %v1836, %v1924
      %1926 = vdwg.mxu0
      %1927 = vmatpush.bf16.msra.mxu0 %v1547
      %1928 = vmatpush.bf16.msra.mxu0 %v1546
      %1929 = vmatpush.bf16.msra.mxu0 %v1545
      %1930 = vmatpush.bf16.msra.mxu0 %v1544
      %1931 = vmatpush.bf16.msra.mxu0 %v1543
      %1932 = vmatpush.bf16.msra.mxu0 %v1542
      %1933 = vmatpush.bf16.msra.mxu0 %v1541
      %1934 = vmatpush.bf16.msra.mxu0 %v1540
      %1935 = vmatmul.bf16.gmra.mxu0 %v943
      %v1936 = vpop.f32.mrf.mxu0
      %v1937 = vadd.f32 %v1848, %v1936
      %v1938 = vpop.f32.mrf.mxu0
      %v1939 = vadd.f32 %v1850, %v1938
      %1940 = vmatmul.bf16.gmra.mxu0 %v952
      %v1941 = vpop.f32.mrf.mxu0
      %v1942 = vadd.f32 %v1853, %v1941
      %v1943 = vpop.f32.mrf.mxu0
      %v1944 = vadd.f32 %v1855, %v1943
      %1945 = vmatmul.bf16.gmra.mxu0 %v961
      %v1946 = vpop.f32.mrf.mxu0
      %v1947 = vadd.f32 %v1858, %v1946
      %v1948 = vpop.f32.mrf.mxu0
      %v1949 = vadd.f32 %v1860, %v1948
      %1950 = vmatmul.bf16.gmra.mxu0 %v970
      %v1951 = vpop.f32.mrf.mxu0
      %v1952 = vadd.f32 %v1863, %v1951
      %v1953 = vpop.f32.mrf.mxu0
      %v1954 = vadd.f32 %v1865, %v1953
      %1955 = vmatmul.bf16.gmra.mxu0 %v979
      %v1956 = vpop.f32.mrf.mxu0
      %v1957 = vadd.f32 %v1868, %v1956
      %v1958 = vpop.f32.mrf.mxu0
      %v1959 = vadd.f32 %v1870, %v1958
      %1960 = vmatmul.bf16.gmra.mxu0 %v988
      %v1961 = vpop.f32.mrf.mxu0
      %v1962 = vadd.f32 %v1873, %v1961
      %v1963 = vpop.f32.mrf.mxu0
      %v1964 = vadd.f32 %v1875, %v1963
      %1965 = vmatmul.bf16.gmra.mxu0 %v997
      %v1966 = vpop.f32.mrf.mxu0
      %v1967 = vadd.f32 %v1878, %v1966
      %v1968 = vpop.f32.mrf.mxu0
      %v1969 = vadd.f32 %v1880, %v1968
      %1970 = vmatmul.bf16.gmra.mxu0 %v1006
      %v1971 = vpop.f32.mrf.mxu0
      %v1972 = vadd.f32 %v1883, %v1971
      %v1973 = vpop.f32.mrf.mxu0
      %v1974 = vadd.f32 %v1885, %v1973
      %1975 = vmatmul.bf16.gmra.mxu0 %v1015
      %v1976 = vpop.f32.mrf.mxu0
      %v1977 = vadd.f32 %v1888, %v1976
      %v1978 = vpop.f32.mrf.mxu0
      %v1979 = vadd.f32 %v1890, %v1978
      %1980 = vmatmul.bf16.gmra.mxu0 %v1024
      %v1981 = vpop.f32.mrf.mxu0
      %v1982 = vadd.f32 %v1893, %v1981
      %v1983 = vpop.f32.mrf.mxu0
      %v1984 = vadd.f32 %v1895, %v1983
      %1985 = vmatmul.bf16.gmra.mxu0 %v1033
      %v1986 = vpop.f32.mrf.mxu0
      %v1987 = vadd.f32 %v1898, %v1986
      %v1988 = vpop.f32.mrf.mxu0
      %v1989 = vadd.f32 %v1900, %v1988
      %1990 = vmatmul.bf16.gmra.mxu0 %v1042
      %v1991 = vpop.f32.mrf.mxu0
      %v1992 = vadd.f32 %v1903, %v1991
      %v1993 = vpop.f32.mrf.mxu0
      %v1994 = vadd.f32 %v1905, %v1993
      %1995 = vmatmul.bf16.gmra.mxu0 %v1051
      %v1996 = vpop.f32.mrf.mxu0
      %v1997 = vadd.f32 %v1908, %v1996
      %v1998 = vpop.f32.mrf.mxu0
      %v1999 = vadd.f32 %v1910, %v1998
      %2000 = vmatmul.bf16.gmra.mxu0 %v1060
      %v2001 = vpop.f32.mrf.mxu0
      %v2002 = vadd.f32 %v1913, %v2001
      %v2003 = vpop.f32.mrf.mxu0
      %v2004 = vadd.f32 %v1915, %v2003
      %2005 = vmatmul.bf16.gmra.mxu0 %v1069
      %v2006 = vpop.f32.mrf.mxu0
      %v2007 = vadd.f32 %v1918, %v2006
      %v2008 = vpop.f32.mrf.mxu0
      %v2009 = vadd.f32 %v1920, %v2008
      %2010 = vmatmul.bf16.gmra.mxu0 %v1078
      %v2011 = vpop.f32.mrf.mxu0
      %v2012 = vadd.f32 %v1923, %v2011
      %v2013 = vpop.f32.mrf.mxu0
      %v2014 = vadd.f32 %v1925, %v2013
      %2015 = vdwg.mxu0
      %2016 = vmatpush.bf16.msra.mxu0 %v1555
      %2017 = vmatpush.bf16.msra.mxu0 %v1554
      %2018 = vmatpush.bf16.msra.mxu0 %v1553
      %2019 = vmatpush.bf16.msra.mxu0 %v1552
      %2020 = vmatpush.bf16.msra.mxu0 %v1551
      %2021 = vmatpush.bf16.msra.mxu0 %v1550
      %2022 = vmatpush.bf16.msra.mxu0 %v1549
      %2023 = vmatpush.bf16.msra.mxu0 %v1548
      %2024 = vmatmul.bf16.gmra.mxu0 %v944
      %v2025 = vpop.f32.mrf.mxu0
      %v2026 = vadd.f32 %v1937, %v2025
      %v2027 = vpop.f32.mrf.mxu0
      %v2028 = vadd.f32 %v1939, %v2027
      %2029 = vmatmul.bf16.gmra.mxu0 %v953
      %v2030 = vpop.f32.mrf.mxu0
      %v2031 = vadd.f32 %v1942, %v2030
      %v2032 = vpop.f32.mrf.mxu0
      %v2033 = vadd.f32 %v1944, %v2032
      %2034 = vmatmul.bf16.gmra.mxu0 %v962
      %v2035 = vpop.f32.mrf.mxu0
      %v2036 = vadd.f32 %v1947, %v2035
      %v2037 = vpop.f32.mrf.mxu0
      %v2038 = vadd.f32 %v1949, %v2037
      %2039 = vmatmul.bf16.gmra.mxu0 %v971
      %v2040 = vpop.f32.mrf.mxu0
      %v2041 = vadd.f32 %v1952, %v2040
      %v2042 = vpop.f32.mrf.mxu0
      %v2043 = vadd.f32 %v1954, %v2042
      %2044 = vmatmul.bf16.gmra.mxu0 %v980
      %v2045 = vpop.f32.mrf.mxu0
      %v2046 = vadd.f32 %v1957, %v2045
      %v2047 = vpop.f32.mrf.mxu0
      %v2048 = vadd.f32 %v1959, %v2047
      %2049 = vmatmul.bf16.gmra.mxu0 %v989
      %v2050 = vpop.f32.mrf.mxu0
      %v2051 = vadd.f32 %v1962, %v2050
      %v2052 = vpop.f32.mrf.mxu0
      %v2053 = vadd.f32 %v1964, %v2052
      %2054 = vmatmul.bf16.gmra.mxu0 %v998
      %v2055 = vpop.f32.mrf.mxu0
      %v2056 = vadd.f32 %v1967, %v2055
      %v2057 = vpop.f32.mrf.mxu0
      %v2058 = vadd.f32 %v1969, %v2057
      %2059 = vmatmul.bf16.gmra.mxu0 %v1007
      %v2060 = vpop.f32.mrf.mxu0
      %v2061 = vadd.f32 %v1972, %v2060
      %v2062 = vpop.f32.mrf.mxu0
      %v2063 = vadd.f32 %v1974, %v2062
      %2064 = vmatmul.bf16.gmra.mxu0 %v1016
      %v2065 = vpop.f32.mrf.mxu0
      %v2066 = vadd.f32 %v1977, %v2065
      %v2067 = vpop.f32.mrf.mxu0
      %v2068 = vadd.f32 %v1979, %v2067
      %2069 = vmatmul.bf16.gmra.mxu0 %v1025
      %v2070 = vpop.f32.mrf.mxu0
      %v2071 = vadd.f32 %v1982, %v2070
      %v2072 = vpop.f32.mrf.mxu0
      %v2073 = vadd.f32 %v1984, %v2072
      %2074 = vmatmul.bf16.gmra.mxu0 %v1034
      %v2075 = vpop.f32.mrf.mxu0
      %v2076 = vadd.f32 %v1987, %v2075
      %v2077 = vpop.f32.mrf.mxu0
      %v2078 = vadd.f32 %v1989, %v2077
      %2079 = vmatmul.bf16.gmra.mxu0 %v1043
      %v2080 = vpop.f32.mrf.mxu0
      %v2081 = vadd.f32 %v1992, %v2080
      %v2082 = vpop.f32.mrf.mxu0
      %v2083 = vadd.f32 %v1994, %v2082
      %2084 = vmatmul.bf16.gmra.mxu0 %v1052
      %v2085 = vpop.f32.mrf.mxu0
      %v2086 = vadd.f32 %v1997, %v2085
      %v2087 = vpop.f32.mrf.mxu0
      %v2088 = vadd.f32 %v1999, %v2087
      %2089 = vmatmul.bf16.gmra.mxu0 %v1061
      %v2090 = vpop.f32.mrf.mxu0
      %v2091 = vadd.f32 %v2002, %v2090
      %v2092 = vpop.f32.mrf.mxu0
      %v2093 = vadd.f32 %v2004, %v2092
      %2094 = vmatmul.bf16.gmra.mxu0 %v1070
      %v2095 = vpop.f32.mrf.mxu0
      %v2096 = vadd.f32 %v2007, %v2095
      %v2097 = vpop.f32.mrf.mxu0
      %v2098 = vadd.f32 %v2009, %v2097
      %2099 = vmatmul.bf16.gmra.mxu0 %v1079
      %v2100 = vpop.f32.mrf.mxu0
      %v2101 = vadd.f32 %v2012, %v2100
      %v2102 = vpop.f32.mrf.mxu0
      %v2103 = vadd.f32 %v2014, %v2102
      %2104 = vdwg.mxu0
      %2105 = vmatpush.bf16.msra.mxu0 %v1563
      %2106 = vmatpush.bf16.msra.mxu0 %v1562
      %2107 = vmatpush.bf16.msra.mxu0 %v1561
      %2108 = vmatpush.bf16.msra.mxu0 %v1560
      %2109 = vmatpush.bf16.msra.mxu0 %v1559
      %2110 = vmatpush.bf16.msra.mxu0 %v1558
      %2111 = vmatpush.bf16.msra.mxu0 %v1557
      %2112 = vmatpush.bf16.msra.mxu0 %v1556
      %2113 = vmatmul.bf16.gmra.mxu0 %v945
      %v2114 = vpop.f32.mrf.mxu0
      %v2115 = vadd.f32 %v2026, %v2114
      %v2116 = vpop.f32.mrf.mxu0
      %v2117 = vadd.f32 %v2028, %v2116
      %2118 = vmatmul.bf16.gmra.mxu0 %v954
      %v2119 = vpop.f32.mrf.mxu0
      %v2120 = vadd.f32 %v2031, %v2119
      %v2121 = vpop.f32.mrf.mxu0
      %v2122 = vadd.f32 %v2033, %v2121
      %2123 = vmatmul.bf16.gmra.mxu0 %v963
      %v2124 = vpop.f32.mrf.mxu0
      %v2125 = vadd.f32 %v2036, %v2124
      %v2126 = vpop.f32.mrf.mxu0
      %v2127 = vadd.f32 %v2038, %v2126
      %2128 = vmatmul.bf16.gmra.mxu0 %v972
      %v2129 = vpop.f32.mrf.mxu0
      %v2130 = vadd.f32 %v2041, %v2129
      %v2131 = vpop.f32.mrf.mxu0
      %v2132 = vadd.f32 %v2043, %v2131
      %2133 = vmatmul.bf16.gmra.mxu0 %v981
      %v2134 = vpop.f32.mrf.mxu0
      %v2135 = vadd.f32 %v2046, %v2134
      %v2136 = vpop.f32.mrf.mxu0
      %v2137 = vadd.f32 %v2048, %v2136
      %2138 = vmatmul.bf16.gmra.mxu0 %v990
      %v2139 = vpop.f32.mrf.mxu0
      %v2140 = vadd.f32 %v2051, %v2139
      %v2141 = vpop.f32.mrf.mxu0
      %v2142 = vadd.f32 %v2053, %v2141
      %2143 = vmatmul.bf16.gmra.mxu0 %v999
      %v2144 = vpop.f32.mrf.mxu0
      %v2145 = vadd.f32 %v2056, %v2144
      %v2146 = vpop.f32.mrf.mxu0
      %v2147 = vadd.f32 %v2058, %v2146
      %2148 = vmatmul.bf16.gmra.mxu0 %v1008
      %v2149 = vpop.f32.mrf.mxu0
      %v2150 = vadd.f32 %v2061, %v2149
      %v2151 = vpop.f32.mrf.mxu0
      %v2152 = vadd.f32 %v2063, %v2151
      %2153 = vmatmul.bf16.gmra.mxu0 %v1017
      %v2154 = vpop.f32.mrf.mxu0
      %v2155 = vadd.f32 %v2066, %v2154
      %v2156 = vpop.f32.mrf.mxu0
      %v2157 = vadd.f32 %v2068, %v2156
      %2158 = vmatmul.bf16.gmra.mxu0 %v1026
      %v2159 = vpop.f32.mrf.mxu0
      %v2160 = vadd.f32 %v2071, %v2159
      %v2161 = vpop.f32.mrf.mxu0
      %v2162 = vadd.f32 %v2073, %v2161
      %2163 = vmatmul.bf16.gmra.mxu0 %v1035
      %v2164 = vpop.f32.mrf.mxu0
      %v2165 = vadd.f32 %v2076, %v2164
      %v2166 = vpop.f32.mrf.mxu0
      %v2167 = vadd.f32 %v2078, %v2166
      %2168 = vmatmul.bf16.gmra.mxu0 %v1044
      %v2169 = vpop.f32.mrf.mxu0
      %v2170 = vadd.f32 %v2081, %v2169
      %v2171 = vpop.f32.mrf.mxu0
      %v2172 = vadd.f32 %v2083, %v2171
      %2173 = vmatmul.bf16.gmra.mxu0 %v1053
      %v2174 = vpop.f32.mrf.mxu0
      %v2175 = vadd.f32 %v2086, %v2174
      %v2176 = vpop.f32.mrf.mxu0
      %v2177 = vadd.f32 %v2088, %v2176
      %2178 = vmatmul.bf16.gmra.mxu0 %v1062
      %v2179 = vpop.f32.mrf.mxu0
      %v2180 = vadd.f32 %v2091, %v2179
      %v2181 = vpop.f32.mrf.mxu0
      %v2182 = vadd.f32 %v2093, %v2181
      %2183 = vmatmul.bf16.gmra.mxu0 %v1071
      %v2184 = vpop.f32.mrf.mxu0
      %v2185 = vadd.f32 %v2096, %v2184
      %v2186 = vpop.f32.mrf.mxu0
      %v2187 = vadd.f32 %v2098, %v2186
      %2188 = vmatmul.bf16.gmra.mxu0 %v1080
      %v2189 = vpop.f32.mrf.mxu0
      %v2190 = vadd.f32 %v2101, %v2189
      %v2191 = vpop.f32.mrf.mxu0
      %v2192 = vadd.f32 %v2103, %v2191
      %2193 = vdwg.mxu0
      %2194 = vmatpush.bf16.msra.mxu0 %v1571
      %2195 = vmatpush.bf16.msra.mxu0 %v1570
      %2196 = vmatpush.bf16.msra.mxu0 %v1569
      %2197 = vmatpush.bf16.msra.mxu0 %v1568
      %2198 = vmatpush.bf16.msra.mxu0 %v1567
      %2199 = vmatpush.bf16.msra.mxu0 %v1566
      %2200 = vmatpush.bf16.msra.mxu0 %v1565
      %2201 = vmatpush.bf16.msra.mxu0 %v1564
      %2202 = vmatmul.bf16.gmra.mxu0 %v946
      %v2203 = vpop.f32.mrf.mxu0
      %v2204 = vadd.f32 %v2115, %v2203
      %v2205 = vpop.f32.mrf.mxu0
      %v2206 = vadd.f32 %v2117, %v2205
      %2207 = vmatmul.bf16.gmra.mxu0 %v955
      %v2208 = vpop.f32.mrf.mxu0
      %v2209 = vadd.f32 %v2120, %v2208
      %v2210 = vpop.f32.mrf.mxu0
      %v2211 = vadd.f32 %v2122, %v2210
      %2212 = vmatmul.bf16.gmra.mxu0 %v964
      %v2213 = vpop.f32.mrf.mxu0
      %v2214 = vadd.f32 %v2125, %v2213
      %v2215 = vpop.f32.mrf.mxu0
      %v2216 = vadd.f32 %v2127, %v2215
      %2217 = vmatmul.bf16.gmra.mxu0 %v973
      %v2218 = vpop.f32.mrf.mxu0
      %v2219 = vadd.f32 %v2130, %v2218
      %v2220 = vpop.f32.mrf.mxu0
      %v2221 = vadd.f32 %v2132, %v2220
      %2222 = vmatmul.bf16.gmra.mxu0 %v982
      %v2223 = vpop.f32.mrf.mxu0
      %v2224 = vadd.f32 %v2135, %v2223
      %v2225 = vpop.f32.mrf.mxu0
      %v2226 = vadd.f32 %v2137, %v2225
      %2227 = vmatmul.bf16.gmra.mxu0 %v991
      %v2228 = vpop.f32.mrf.mxu0
      %v2229 = vadd.f32 %v2140, %v2228
      %v2230 = vpop.f32.mrf.mxu0
      %v2231 = vadd.f32 %v2142, %v2230
      %2232 = vmatmul.bf16.gmra.mxu0 %v1000
      %v2233 = vpop.f32.mrf.mxu0
      %v2234 = vadd.f32 %v2145, %v2233
      %v2235 = vpop.f32.mrf.mxu0
      %v2236 = vadd.f32 %v2147, %v2235
      %2237 = vmatmul.bf16.gmra.mxu0 %v1009
      %v2238 = vpop.f32.mrf.mxu0
      %v2239 = vadd.f32 %v2150, %v2238
      %v2240 = vpop.f32.mrf.mxu0
      %v2241 = vadd.f32 %v2152, %v2240
      %2242 = vmatmul.bf16.gmra.mxu0 %v1018
      %v2243 = vpop.f32.mrf.mxu0
      %v2244 = vadd.f32 %v2155, %v2243
      %v2245 = vpop.f32.mrf.mxu0
      %v2246 = vadd.f32 %v2157, %v2245
      %2247 = vmatmul.bf16.gmra.mxu0 %v1027
      %v2248 = vpop.f32.mrf.mxu0
      %v2249 = vadd.f32 %v2160, %v2248
      %v2250 = vpop.f32.mrf.mxu0
      %v2251 = vadd.f32 %v2162, %v2250
      %2252 = vmatmul.bf16.gmra.mxu0 %v1036
      %v2253 = vpop.f32.mrf.mxu0
      %v2254 = vadd.f32 %v2165, %v2253
      %v2255 = vpop.f32.mrf.mxu0
      %v2256 = vadd.f32 %v2167, %v2255
      %2257 = vmatmul.bf16.gmra.mxu0 %v1045
      %v2258 = vpop.f32.mrf.mxu0
      %v2259 = vadd.f32 %v2170, %v2258
      %v2260 = vpop.f32.mrf.mxu0
      %v2261 = vadd.f32 %v2172, %v2260
      %2262 = vmatmul.bf16.gmra.mxu0 %v1054
      %v2263 = vpop.f32.mrf.mxu0
      %v2264 = vadd.f32 %v2175, %v2263
      %v2265 = vpop.f32.mrf.mxu0
      %v2266 = vadd.f32 %v2177, %v2265
      %2267 = vmatmul.bf16.gmra.mxu0 %v1063
      %v2268 = vpop.f32.mrf.mxu0
      %v2269 = vadd.f32 %v2180, %v2268
      %v2270 = vpop.f32.mrf.mxu0
      %v2271 = vadd.f32 %v2182, %v2270
      %2272 = vmatmul.bf16.gmra.mxu0 %v1072
      %v2273 = vpop.f32.mrf.mxu0
      %v2274 = vadd.f32 %v2185, %v2273
      %v2275 = vpop.f32.mrf.mxu0
      %v2276 = vadd.f32 %v2187, %v2275
      %2277 = vmatmul.bf16.gmra.mxu0 %v1081
      %v2278 = vpop.f32.mrf.mxu0
      %v2279 = vadd.f32 %v2190, %v2278
      %v2280 = vpop.f32.mrf.mxu0
      %v2281 = vadd.f32 %v2192, %v2280
      %2282 = vdwg.mxu0
      %2283 = vmatpush.bf16.msra.mxu0 %v1579
      %2284 = vmatpush.bf16.msra.mxu0 %v1578
      %2285 = vmatpush.bf16.msra.mxu0 %v1577
      %2286 = vmatpush.bf16.msra.mxu0 %v1576
      %2287 = vmatpush.bf16.msra.mxu0 %v1575
      %2288 = vmatpush.bf16.msra.mxu0 %v1574
      %2289 = vmatpush.bf16.msra.mxu0 %v1573
      %2290 = vmatpush.bf16.msra.mxu0 %v1572
      %2291 = vmatmul.bf16.gmra.mxu0 %v947
      %v2292 = vpop.f32.mrf.mxu0
      %v2293 = vadd.f32 %v2204, %v2292
      %v2294 = vpop.f32.mrf.mxu0
      %v2295 = vadd.f32 %v2206, %v2294
      %2296 = vmatmul.bf16.gmra.mxu0 %v956
      %v2297 = vpop.f32.mrf.mxu0
      %v2298 = vadd.f32 %v2209, %v2297
      %v2299 = vpop.f32.mrf.mxu0
      %v2300 = vadd.f32 %v2211, %v2299
      %2301 = vmatmul.bf16.gmra.mxu0 %v965
      %v2302 = vpop.f32.mrf.mxu0
      %v2303 = vadd.f32 %v2214, %v2302
      %v2304 = vpop.f32.mrf.mxu0
      %v2305 = vadd.f32 %v2216, %v2304
      %2306 = vmatmul.bf16.gmra.mxu0 %v974
      %v2307 = vpop.f32.mrf.mxu0
      %v2308 = vadd.f32 %v2219, %v2307
      %v2309 = vpop.f32.mrf.mxu0
      %v2310 = vadd.f32 %v2221, %v2309
      %2311 = vmatmul.bf16.gmra.mxu0 %v983
      %v2312 = vpop.f32.mrf.mxu0
      %v2313 = vadd.f32 %v2224, %v2312
      %v2314 = vpop.f32.mrf.mxu0
      %v2315 = vadd.f32 %v2226, %v2314
      %2316 = vmatmul.bf16.gmra.mxu0 %v992
      %v2317 = vpop.f32.mrf.mxu0
      %v2318 = vadd.f32 %v2229, %v2317
      %v2319 = vpop.f32.mrf.mxu0
      %v2320 = vadd.f32 %v2231, %v2319
      %2321 = vmatmul.bf16.gmra.mxu0 %v1001
      %v2322 = vpop.f32.mrf.mxu0
      %v2323 = vadd.f32 %v2234, %v2322
      %v2324 = vpop.f32.mrf.mxu0
      %v2325 = vadd.f32 %v2236, %v2324
      %2326 = vmatmul.bf16.gmra.mxu0 %v1010
      %v2327 = vpop.f32.mrf.mxu0
      %v2328 = vadd.f32 %v2239, %v2327
      %v2329 = vpop.f32.mrf.mxu0
      %v2330 = vadd.f32 %v2241, %v2329
      %2331 = vmatmul.bf16.gmra.mxu0 %v1019
      %v2332 = vpop.f32.mrf.mxu0
      %v2333 = vadd.f32 %v2244, %v2332
      %v2334 = vpop.f32.mrf.mxu0
      %v2335 = vadd.f32 %v2246, %v2334
      %2336 = vmatmul.bf16.gmra.mxu0 %v1028
      %v2337 = vpop.f32.mrf.mxu0
      %v2338 = vadd.f32 %v2249, %v2337
      %v2339 = vpop.f32.mrf.mxu0
      %v2340 = vadd.f32 %v2251, %v2339
      %2341 = vmatmul.bf16.gmra.mxu0 %v1037
      %v2342 = vpop.f32.mrf.mxu0
      %v2343 = vadd.f32 %v2254, %v2342
      %v2344 = vpop.f32.mrf.mxu0
      %v2345 = vadd.f32 %v2256, %v2344
      %2346 = vmatmul.bf16.gmra.mxu0 %v1046
      %v2347 = vpop.f32.mrf.mxu0
      %v2348 = vadd.f32 %v2259, %v2347
      %v2349 = vpop.f32.mrf.mxu0
      %v2350 = vadd.f32 %v2261, %v2349
      %2351 = vmatmul.bf16.gmra.mxu0 %v1055
      %v2352 = vpop.f32.mrf.mxu0
      %v2353 = vadd.f32 %v2264, %v2352
      %v2354 = vpop.f32.mrf.mxu0
      %v2355 = vadd.f32 %v2266, %v2354
      %2356 = vmatmul.bf16.gmra.mxu0 %v1064
      %v2357 = vpop.f32.mrf.mxu0
      %v2358 = vadd.f32 %v2269, %v2357
      %v2359 = vpop.f32.mrf.mxu0
      %v2360 = vadd.f32 %v2271, %v2359
      %2361 = vmatmul.bf16.gmra.mxu0 %v1073
      %v2362 = vpop.f32.mrf.mxu0
      %v2363 = vadd.f32 %v2274, %v2362
      %v2364 = vpop.f32.mrf.mxu0
      %v2365 = vadd.f32 %v2276, %v2364
      %2366 = vmatmul.bf16.gmra.mxu0 %v1082
      %v2367 = vpop.f32.mrf.mxu0
      %v2368 = vadd.f32 %v2279, %v2367
      %v2369 = vpop.f32.mrf.mxu0
      %v2370 = vadd.f32 %v2281, %v2369
      %2371 = vdwg.mxu0
      %2372 = vmatpush.bf16.msra.mxu0 %v1587
      %2373 = vmatpush.bf16.msra.mxu0 %v1586
      %2374 = vmatpush.bf16.msra.mxu0 %v1585
      %2375 = vmatpush.bf16.msra.mxu0 %v1584
      %2376 = vmatpush.bf16.msra.mxu0 %v1583
      %2377 = vmatpush.bf16.msra.mxu0 %v1582
      %2378 = vmatpush.bf16.msra.mxu0 %v1581
      %2379 = vmatpush.bf16.msra.mxu0 %v1580
      %2380 = vmatmul.bf16.gmra.mxu0 %v948
      %v2381 = vpop.f32.mrf.mxu0
      %v2382 = vadd.f32 %v2293, %v2381
      %v2383 = vpop.f32.mrf.mxu0
      %v2384 = vadd.f32 %v2295, %v2383
      %2385 = vmatmul.bf16.gmra.mxu0 %v957
      %v2386 = vpop.f32.mrf.mxu0
      %v2387 = vadd.f32 %v2298, %v2386
      %v2388 = vpop.f32.mrf.mxu0
      %v2389 = vadd.f32 %v2300, %v2388
      %2390 = vmatmul.bf16.gmra.mxu0 %v966
      %v2391 = vpop.f32.mrf.mxu0
      %v2392 = vadd.f32 %v2303, %v2391
      %v2393 = vpop.f32.mrf.mxu0
      %v2394 = vadd.f32 %v2305, %v2393
      %2395 = vmatmul.bf16.gmra.mxu0 %v975
      %v2396 = vpop.f32.mrf.mxu0
      %v2397 = vadd.f32 %v2308, %v2396
      %v2398 = vpop.f32.mrf.mxu0
      %v2399 = vadd.f32 %v2310, %v2398
      %2400 = vmatmul.bf16.gmra.mxu0 %v984
      %v2401 = vpop.f32.mrf.mxu0
      %v2402 = vadd.f32 %v2313, %v2401
      %v2403 = vpop.f32.mrf.mxu0
      %v2404 = vadd.f32 %v2315, %v2403
      %2405 = vmatmul.bf16.gmra.mxu0 %v993
      %v2406 = vpop.f32.mrf.mxu0
      %v2407 = vadd.f32 %v2318, %v2406
      %v2408 = vpop.f32.mrf.mxu0
      %v2409 = vadd.f32 %v2320, %v2408
      %2410 = vmatmul.bf16.gmra.mxu0 %v1002
      %v2411 = vpop.f32.mrf.mxu0
      %v2412 = vadd.f32 %v2323, %v2411
      %v2413 = vpop.f32.mrf.mxu0
      %v2414 = vadd.f32 %v2325, %v2413
      %2415 = vmatmul.bf16.gmra.mxu0 %v1011
      %v2416 = vpop.f32.mrf.mxu0
      %v2417 = vadd.f32 %v2328, %v2416
      %v2418 = vpop.f32.mrf.mxu0
      %v2419 = vadd.f32 %v2330, %v2418
      %2420 = vmatmul.bf16.gmra.mxu0 %v1020
      %v2421 = vpop.f32.mrf.mxu0
      %v2422 = vadd.f32 %v2333, %v2421
      %v2423 = vpop.f32.mrf.mxu0
      %v2424 = vadd.f32 %v2335, %v2423
      %2425 = vmatmul.bf16.gmra.mxu0 %v1029
      %v2426 = vpop.f32.mrf.mxu0
      %v2427 = vadd.f32 %v2338, %v2426
      %v2428 = vpop.f32.mrf.mxu0
      %v2429 = vadd.f32 %v2340, %v2428
      %2430 = vmatmul.bf16.gmra.mxu0 %v1038
      %v2431 = vpop.f32.mrf.mxu0
      %v2432 = vadd.f32 %v2343, %v2431
      %v2433 = vpop.f32.mrf.mxu0
      %v2434 = vadd.f32 %v2345, %v2433
      %2435 = vmatmul.bf16.gmra.mxu0 %v1047
      %v2436 = vpop.f32.mrf.mxu0
      %v2437 = vadd.f32 %v2348, %v2436
      %v2438 = vpop.f32.mrf.mxu0
      %v2439 = vadd.f32 %v2350, %v2438
      %2440 = vmatmul.bf16.gmra.mxu0 %v1056
      %v2441 = vpop.f32.mrf.mxu0
      %v2442 = vadd.f32 %v2353, %v2441
      %v2443 = vpop.f32.mrf.mxu0
      %v2444 = vadd.f32 %v2355, %v2443
      %2445 = vmatmul.bf16.gmra.mxu0 %v1065
      %v2446 = vpop.f32.mrf.mxu0
      %v2447 = vadd.f32 %v2358, %v2446
      %v2448 = vpop.f32.mrf.mxu0
      %v2449 = vadd.f32 %v2360, %v2448
      %2450 = vmatmul.bf16.gmra.mxu0 %v1074
      %v2451 = vpop.f32.mrf.mxu0
      %v2452 = vadd.f32 %v2363, %v2451
      %v2453 = vpop.f32.mrf.mxu0
      %v2454 = vadd.f32 %v2365, %v2453
      %2455 = vmatmul.bf16.gmra.mxu0 %v1083
      %v2456 = vpop.f32.mrf.mxu0
      %v2457 = vadd.f32 %v2368, %v2456
      %v2458 = vpop.f32.mrf.mxu0
      %v2459 = vadd.f32 %v2370, %v2458
      %2460 = vdwg.mxu0
      %2461 = vst [vmem:[%s182] sm:$0xff] %v2382
      %2462 = vst [vmem:[%s182 + $0x8] sm:$0xff] %v2384
      %2463 = vst [vmem:[%s182 + $0x10] sm:$0xff] %v2387
      %2464 = vst [vmem:[%s182 + $0x18] sm:$0xff] %v2389
      %2465 = vst [vmem:[%s182 + $0x20] sm:$0xff] %v2392
      %2466 = vst [vmem:[%s182 + $0x28] sm:$0xff] %v2394
      %2467 = vst [vmem:[%s182 + $0x30] sm:$0xff] %v2397
      %2468 = vst [vmem:[%s182 + $0x38] sm:$0xff] %v2399
      %2469 = vst [vmem:[%s182 + $0x40] sm:$0xff] %v2402
      %2470 = vst [vmem:[%s182 + $0x48] sm:$0xff] %v2404
      %2471 = vst [vmem:[%s182 + $0x50] sm:$0xff] %v2407
      %2472 = vst [vmem:[%s182 + $0x58] sm:$0xff] %v2409
      %2473 = vst [vmem:[%s182 + $0x60] sm:$0xff] %v2412
      %2474 = vst [vmem:[%s182 + $0x68] sm:$0xff] %v2414
      %2475 = vst [vmem:[%s182 + $0x70] sm:$0xff] %v2417
      %2476 = vst [vmem:[%s182 + $0x78] sm:$0xff] %v2419
      %2477 = vst [vmem:[%s182 + $0x80] sm:$0xff] %v2422
      %2478 = vst [vmem:[%s182 + $0x88] sm:$0xff] %v2424
      %2479 = vst [vmem:[%s182 + $0x90] sm:$0xff] %v2427
      %2480 = vst [vmem:[%s182 + $0x98] sm:$0xff] %v2429
      %2481 = vst [vmem:[%s182 + $0xa0] sm:$0xff] %v2432
      %2482 = vst [vmem:[%s182 + $0xa8] sm:$0xff] %v2434
      %2483 = vst [vmem:[%s182 + $0xb0] sm:$0xff] %v2437
      %2484 = vst [vmem:[%s182 + $0xb8] sm:$0xff] %v2439
      %2485 = vst [vmem:[%s182 + $0xc0] sm:$0xff] %v2442
      %2486 = vst [vmem:[%s182 + $0xc8] sm:$0xff] %v2444
      %2487 = vst [vmem:[%s182 + $0xd0] sm:$0xff] %v2447
      %2488 = vst [vmem:[%s182 + $0xd8] sm:$0xff] %v2449
      %2489 = vst [vmem:[%s182 + $0xe0] sm:$0xff] %v2452
      %2490 = vst [vmem:[%s182 + $0xe8] sm:$0xff] %v2454
      %2491 = vst [vmem:[%s182 + $0xf0] sm:$0xff] %v2457
      %2492 = vst [vmem:[%s182 + $0xf8] sm:$0xff] %v2459
      %v2493 = vadd.f32 %v2382, %v2384
      %v2494 = vadd.f32 %v2493, %v2387
      %v2495 = vadd.f32 %v2494, %v2389
      %v2496 = vadd.f32 %v2495, %v2392
      %v2497 = vadd.f32 %v2496, %v2394
      %v2498 = vadd.f32 %v2497, %v2397
      %v2499 = vadd.f32 %v2498, %v2399
      %v2500 = vadd.f32 %v2499, %v2402
      %v2501 = vadd.f32 %v2500, %v2404
      %v2502 = vadd.f32 %v2501, %v2407
      %v2503 = vadd.f32 %v2502, %v2409
      %v2504 = vadd.f32 %v2503, %v2412
      %v2505 = vadd.f32 %v2504, %v2414
      %v2506 = vadd.f32 %v2505, %v2417
      %v2507 = vadd.f32 %v2506, %v2419
      %v2508 = vadd.f32 %v2507, %v2422
      %v2509 = vadd.f32 %v2508, %v2424
      %v2510 = vadd.f32 %v2509, %v2427
      %v2511 = vadd.f32 %v2510, %v2429
      %v2512 = vadd.f32 %v2511, %v2432
      %v2513 = vadd.f32 %v2512, %v2434
      %v2514 = vadd.f32 %v2513, %v2437
      %v2515 = vadd.f32 %v2514, %v2439
      %v2516 = vadd.f32 %v2515, %v2442
      %v2517 = vadd.f32 %v2516, %v2444
      %v2518 = vadd.f32 %v2517, %v2447
      %v2519 = vadd.f32 %v2518, %v2449
      %v2520 = vadd.f32 %v2519, %v2452
      %v2521 = vadd.f32 %v2520, %v2454
      %v2522 = vadd.f32 %v2521, %v2457
      %v2523 = vadd.f32 %v2522, %v2459
      %v2524 = vrot.slane %v2523, 4
      %v2525 = vadd.f32 %v2523, %v2524
      %v2526 = vrot.slane %v2525, 2
      %v2527 = vadd.f32 %v2525, %v2526
      %v2528 = vrot.slane %v2527, 1
      %v2529 = vadd.f32 %v2527, %v2528
      %v2530 = vmul.f32 %v2382, %v2382
      %v2531 = vmul.f32 %v2384, %v2384
      %v2532 = vmul.f32 %v2387, %v2387
      %v2533 = vmul.f32 %v2389, %v2389
      %v2534 = vmul.f32 %v2392, %v2392
      %v2535 = vmul.f32 %v2394, %v2394
      %v2536 = vmul.f32 %v2397, %v2397
      %v2537 = vmul.f32 %v2399, %v2399
      %v2538 = vmul.f32 %v2402, %v2402
      %v2539 = vmul.f32 %v2404, %v2404
      %v2540 = vmul.f32 %v2407, %v2407
      %v2541 = vmul.f32 %v2409, %v2409
      %v2542 = vmul.f32 %v2412, %v2412
      %v2543 = vmul.f32 %v2414, %v2414
      %v2544 = vmul.f32 %v2417, %v2417
      %v2545 = vmul.f32 %v2419, %v2419
      %v2546 = vmul.f32 %v2422, %v2422
      %v2547 = vmul.f32 %v2424, %v2424
      %v2548 = vmul.f32 %v2427, %v2427
      %v2549 = vmul.f32 %v2429, %v2429
      %v2550 = vmul.f32 %v2432, %v2432
      %v2551 = vmul.f32 %v2434, %v2434
      %v2552 = vmul.f32 %v2437, %v2437
      %v2553 = vmul.f32 %v2439, %v2439
      %v2554 = vmul.f32 %v2442, %v2442
      %v2555 = vmul.f32 %v2444, %v2444
      %v2556 = vmul.f32 %v2447, %v2447
      %v2557 = vmul.f32 %v2449, %v2449
      %v2558 = vmul.f32 %v2452, %v2452
      %v2559 = vmul.f32 %v2454, %v2454
      %v2560 = vmul.f32 %v2457, %v2457
      %v2561 = vmul.f32 %v2459, %v2459
      %v2562 = vadd.f32 %v2530, %v2531
      %v2563 = vadd.f32 %v2562, %v2532
      %v2564 = vadd.f32 %v2563, %v2533
      %v2565 = vadd.f32 %v2564, %v2534
      %v2566 = vadd.f32 %v2565, %v2535
      %v2567 = vadd.f32 %v2566, %v2536
      %v2568 = vadd.f32 %v2567, %v2537
      %v2569 = vadd.f32 %v2568, %v2538
      %v2570 = vadd.f32 %v2569, %v2539
      %v2571 = vadd.f32 %v2570, %v2540
      %v2572 = vadd.f32 %v2571, %v2541
      %v2573 = vadd.f32 %v2572, %v2542
      %v2574 = vadd.f32 %v2573, %v2543
      %v2575 = vadd.f32 %v2574, %v2544
      %v2576 = vadd.f32 %v2575, %v2545
      %v2577 = vadd.f32 %v2576, %v2546
      %v2578 = vadd.f32 %v2577, %v2547
      %v2579 = vadd.f32 %v2578, %v2548
      %v2580 = vadd.f32 %v2579, %v2549
      %v2581 = vadd.f32 %v2580, %v2550
      %v2582 = vadd.f32 %v2581, %v2551
      %v2583 = vadd.f32 %v2582, %v2552
      %v2584 = vadd.f32 %v2583, %v2553
      %v2585 = vadd.f32 %v2584, %v2554
      %v2586 = vadd.f32 %v2585, %v2555
      %v2587 = vadd.f32 %v2586, %v2556
      %v2588 = vadd.f32 %v2587, %v2557
      %v2589 = vadd.f32 %v2588, %v2558
      %v2590 = vadd.f32 %v2589, %v2559
      %v2591 = vadd.f32 %v2590, %v2560
      %v2592 = vadd.f32 %v2591, %v2561
      %v2593 = vrot.slane %v2592, 4
      %v2594 = vadd.f32 %v2592, %v2593
      %v2595 = vrot.slane %v2594, 2
      %v2596 = vadd.f32 %v2594, %v2595
      %v2597 = vrot.slane %v2596, 1
      %v2598 = vadd.f32 %v2596, %v2597
      %vm2599 = vcmask 1040384
      %v2600 = vsel %vm2599, %v2529, %v2598
      %2601 = vst [vmem:[%s187] sm:$0x3] %v2600
      %s2602 = smul.u32 32, %s15
      %p2603 = scmp.lt.s32.totalorder %s2602, 63
      %s2604 = scalar_select %p2603, %s2602, 63
      %s2605 = smul.addr %s2604, 8
      %s2606 = scalar_lea.vmem %s2, %s2605
      %p2607 = scmp.lt.s32.totalorder %s15, 1
      %s2608 = scalar_select %p2607, %s15, 1
      %s2609 = smul.addr %s2608, 2
      %s2610 = scalar_lea.vmem %s3, %s2609
      // Predicated region
      $region29: #{residual_block_forward.4} parent=27 // pred_check
        %p2611 = pneg %p80
      $region30: #{residual_block_forward.4} parent=27 // pred_check_branch
        %2613 = sbr.rel (%p2611) target = $region32
      $region31: #{residual_block_forward.4} parent=27 // pred_region
        %s2614 = smul.u32 32, %s15
      $region32: #{residual_block_forward.4} parent=27 // pred_fallthru
        _
      // Predicated region
      $region33: #{residual_block_forward.4} parent=27 // pred_check
        %p2615 = pneg %p106
      $region34: #{residual_block_forward.4} parent=27 // pred_check_branch
        %2617 = sbr.rel (%p2615) target = $region36
      $region35: #{residual_block_forward.4} parent=27 // pred_region
        _
      $region36: #{residual_block_forward.4} parent=27 // pred_fallthru
        _
    $region28: #{residual_block_forward.4} parent=5 // pred_fallthru
      _
    %p2618 = scmp.le.s32.totalorder 2, %s10
    // Predicated region
    $region37: #{residual_block_forward.4} parent=5 // pred_check
      %p2619 = pneg %p2618
    $region38: #{residual_block_forward.4} parent=5 // pred_check_branch
      %2621 = sbr.rel (%p2619) target = $region40
    $region39: #{residual_block_forward.4} parent=5 // pred_region
      %s2622 = ssub.s32 %s10, 2
      // Predicated region
      $region41: #{residual_block_forward.4} parent=39 // pred_check
        %p2623 = pneg %p86
      $region42: #{residual_block_forward.4} parent=39 // pred_check_branch
        %2625 = sbr.rel (%p2623) target = $region44
      $region43: #{residual_block_forward.4} parent=39 // pred_region
        %s2626 = smul.u32 32, %s16
        %p2627 = scmp.lt.s32.totalorder %s2626, 63
        %s2628 = scalar_select %p2627, %s2626, 63
        %s2629 = smul.addr %s2628, 8
        %s2630 = scalar_lea.vmem %s2, %s2629
      $region44: #{residual_block_forward.4} parent=39 // pred_fallthru
        _
      // Predicated region
      $region45: #{residual_block_forward.4} parent=39 // pred_check
        %p2631 = pneg %p112
      $region46: #{residual_block_forward.4} parent=39 // pred_check_branch
        %2633 = sbr.rel (%p2631) target = $region48
      $region47: #{residual_block_forward.4} parent=39 // pred_region
        %p2634 = scmp.lt.s32.totalorder %s16, 1
        %s2635 = scalar_select %p2634, %s16, 1
        %s2636 = smul.addr %s2635, 2
        %s2637 = scalar_lea.vmem %s3, %s2636
      $region48: #{residual_block_forward.4} parent=39 // pred_fallthru
        _
    $region40: #{residual_block_forward.4} parent=5 // pred_fallthru
      _
  $region6: #{residual_block_forward.4} parent=0 // loop_footer
    %s14 = sadd.s32 1, %s10
  $region7: #{residual_block_forward.4} parent=0 // loop_footer_branch
    %9 = sbr.rel target = $region3
  $region8: #{residual_block_forward.4} parent=0 // loop_exit
    _

// kernel: residual_block_forward.7
$region0: #{residual_block_forward.7}
  #allocation0 [shape = 'u32[]', space=smem, size = 0x4, offset = 0x4, fixed_abs, tag = 'smem constant byte address 0x4 - core index']
  #allocation1 [shape = 'u32[72,128]{1,0:T(1,128)}', space=vmem, size = 0x9000, scoped, tag = 'internal scratch']
  %s0 = inlined_call_operand.vmem [shape: f32[512,128], index: 0, kind: input, shape index: {}]
  %s1 = inlined_call_operand.vmem [shape: f32[2,128], index: 1, kind: input, shape index: {}]
  %s2 = inlined_call_operand.vmem [shape: f32[1,128], index: 2, kind: input, shape index: {}]
  %s3 = inlined_call_operand.vmem [shape: f32[1,128], index: 3, kind: input, shape index: {}]
  %s4 = inlined_call_operand.vmem [shape: f32[512,128], index: 4, kind: input, shape index: {}]
  %s5 = inlined_call_operand.hbm [shape: f32[512,128], index: 5, kind: output, shape index: {}]
  %s6 = sld [smem:[#allocation0]]
  $region53: #{residual_block_forward.7} parent=0
    _
  %s8 = ssub.s32 1, %s6
  %s9 = scalar_select 0, %s8, %s6
  $region1: #{residual_block_forward.7} parent=0
    #allocation2 [shape = 'u8[262144]{0}', space=vmem, size = 0x40000, scoped, tag = 'output window, operand 0']
    #allocation3 [shape = 's32[2]{0}', space=sflag, size = 0x8, scoped, tag = 'scoped memory for residual_block_forward.7']
    %10 = vsyncpa [#allocation3], 0
    %s11 = scalar_lea.sflag [#allocation3], 1
    %12 = vsyncpa %s11, 0
    loop: start=0, step=1, limit=4
    $region2: #{residual_block_forward.7} parent=1 // loop_pre_header
      _
    $region3: #{residual_block_forward.7} parent=1 // loop_header
      %s14 = sphi 0, %s18
      %p15 = scmp.ge.s32.totalorder %s14, 4
      %s24 = sphi 0, %s26
      %s27 = sphi 0, %s24
      %s28 = sphi 0, %s27
      %s44 = sphi 0, %s28
      %s48 = sphi 0, %s48
      %s50 = sphi 0, %s48
      %s51 = sphi 0, %s50
      %s65 = sphi 0, %s51
      %s69 = sphi 0, %s69
      %s71 = sphi 0, %s69
      %s72 = sphi 0, %s71
      %s86 = sphi 0, %s72
      %s90 = sphi 0, %s90
      %s92 = sphi 0, %s90
      %s93 = sphi 0, %s92
      %s107 = sphi 0, %s93
      %s113 = sphi 0, %s115
      %s116 = sphi 0, %s113
      %s117 = sphi 0, %s116
      %s133 = sphi 0, %s117
      %s139 = sphi 0, %s141
      %s142 = sphi 0, %s139
      %s143 = sphi 0, %s142
      %s159 = sphi 0, %s143
    $region4: #{residual_block_forward.7} parent=1 // loop_header_branch
      %17 = sbr.rel (%p15) target = $region8
    $region5: #{residual_block_forward.7} parent=1 // loop_body
      %s19 = ssub.s32 %s14, 1
      %s20 = ssub.s32 %s14, 2
      %s21 = sadd.s32 %s14, 1
      %s22 = ssub.s32 %s14, %s21
      %p23 = scmp.eq.s32.totalorder %s22, 0
      %s25 = sadd.s32 %s24, 1
      %s26 = scalar_select %p23, %s24, %s25
      %p29 = pneg %p23
      %p30 = scmp.eq.s32.totalorder %s14, 1
      %p31 = por %p29, %p30
      %p32 = scmp.ne.s32.totalorder %s24, %s27
      %p33 = scmp.eq.s32.totalorder %s14, 0
      %p34 = por %p32, %p33
      %p35 = scmp.ne.s32.totalorder %s24, %s27
      %p36 = scmp.eq.s32.totalorder %s19, 1
      %p37 = por %p35, %p36
      %p38 = scmp.ne.s32.totalorder %s27, %s28
      %p39 = scmp.eq.s32.totalorder %s19, 0
      %p40 = por %p38, %p39
      %p41 = scmp.ne.s32.totalorder %s27, %s28
      %p42 = scmp.eq.s32.totalorder %s20, 1
      %p43 = por %p41, %p42
      %p45 = scmp.ne.s32.totalorder %s28, %s44
      %p46 = scmp.eq.s32.totalorder %s20, 0
      %p47 = por %p45, %p46
      %s49 = sadd.s32 %s48, 1
      %p52 = scmp.eq.s32.totalorder %s14, 1
      %p53 = scmp.ne.s32.totalorder %s48, %s50
      %p54 = scmp.eq.s32.totalorder %s14, 0
      %p55 = por %p53, %p54
      %p56 = scmp.ne.s32.totalorder %s48, %s50
      %p57 = scmp.eq.s32.totalorder %s19, 1
      %p58 = por %p56, %p57
      %p59 = scmp.ne.s32.totalorder %s50, %s51
      %p60 = scmp.eq.s32.totalorder %s19, 0
      %p61 = por %p59, %p60
      %p62 = scmp.ne.s32.totalorder %s50, %s51
      %p63 = scmp.eq.s32.totalorder %s20, 1
      %p64 = por %p62, %p63
      %p66 = scmp.ne.s32.totalorder %s51, %s65
      %p67 = scmp.eq.s32.totalorder %s20, 0
      %p68 = por %p66, %p67
      %s70 = sadd.s32 %s69, 1
      %p73 = scmp.eq.s32.totalorder %s14, 1
      %p74 = scmp.ne.s32.totalorder %s69, %s71
      %p75 = scmp.eq.s32.totalorder %s14, 0
      %p76 = por %p74, %p75
      %p77 = scmp.ne.s32.totalorder %s69, %s71
      %p78 = scmp.eq.s32.totalorder %s19, 1
      %p79 = por %p77, %p78
      %p80 = scmp.ne.s32.totalorder %s71, %s72
      %p81 = scmp.eq.s32.totalorder %s19, 0
      %p82 = por %p80, %p81
      %p83 = scmp.ne.s32.totalorder %s71, %s72
      %p84 = scmp.eq.s32.totalorder %s20, 1
      %p85 = por %p83, %p84
      %p87 = scmp.ne.s32.totalorder %s72, %s86
      %p88 = scmp.eq.s32.totalorder %s20, 0
      %p89 = por %p87, %p88
      %s91 = sadd.s32 %s90, 1
      %p94 = scmp.eq.s32.totalorder %s14, 1
      %p95 = scmp.ne.s32.totalorder %s90, %s92
      %p96 = scmp.eq.s32.totalorder %s14, 0
      %p97 = por %p95, %p96
      %p98 = scmp.ne.s32.totalorder %s90, %s92
      %p99 = scmp.eq.s32.totalorder %s19, 1
      %p100 = por %p98, %p99
      %p101 = scmp.ne.s32.totalorder %s92, %s93
      %p102 = scmp.eq.s32.totalorder %s19, 0
      %p103 = por %p101, %p102
      %p104 = scmp.ne.s32.totalorder %s92, %s93
      %p105 = scmp.eq.s32.totalorder %s20, 1
      %p106 = por %p104, %p105
      %p108 = scmp.ne.s32.totalorder %s93, %s107
      %p109 = scmp.eq.s32.totalorder %s20, 0
      %p110 = por %p108, %p109
      %s111 = ssub.s32 %s14, %s21
      %p112 = scmp.eq.s32.totalorder %s111, 0
      %s114 = sadd.s32 %s113, 1
      %s115 = scalar_select %p112, %s113, %s114
      %p118 = pneg %p112
      %p119 = scmp.eq.s32.totalorder %s14, 1
      %p120 = por %p118, %p119
      %p121 = scmp.ne.s32.totalorder %s113, %s116
      %p122 = scmp.eq.s32.totalorder %s14, 0
      %p123 = por %p121, %p122
      %p124 = scmp.ne.s32.totalorder %s113, %s116
      %p125 = scmp.eq.s32.totalorder %s19, 1
      %p126 = por %p124, %p125
      %p127 = scmp.ne.s32.totalorder %s116, %s117
      %p128 = scmp.eq.s32.totalorder %s19, 0
      %p129 = por %p127, %p128
      %p130 = scmp.ne.s32.totalorder %s116, %s117
      %p131 = scmp.eq.s32.totalorder %s20, 1
      %p132 = por %p130, %p131
      %p134 = scmp.ne.s32.totalorder %s117, %s133
      %p135 = scmp.eq.s32.totalorder %s20, 0
      %p136 = por %p134, %p135
      %s137 = ssub.s32 %s14, %s21
      %p138 = scmp.eq.s32.totalorder %s137, 0
      %s140 = sadd.s32 %s139, 1
      %s141 = scalar_select %p138, %s139, %s140
      %p144 = pneg %p138
      %p145 = scmp.eq.s32.totalorder %s14, 1
      %p146 = por %p144, %p145
      %p147 = scmp.ne.s32.totalorder %s139, %s142
      %p148 = scmp.eq.s32.totalorder %s14, 0
      %p149 = por %p147, %p148
      %p150 = scmp.ne.s32.totalorder %s139, %s142
      %p151 = scmp.eq.s32.totalorder %s19, 1
      %p152 = por %p150, %p151
      %p153 = scmp.ne.s32.totalorder %s142, %s143
      %p154 = scmp.eq.s32.totalorder %s19, 0
      %p155 = por %p153, %p154
      %p156 = scmp.ne.s32.totalorder %s142, %s143
      %p157 = scmp.eq.s32.totalorder %s20, 1
      %p158 = por %p156, %p157
      %p160 = scmp.ne.s32.totalorder %s143, %s159
      %p161 = scmp.eq.s32.totalorder %s20, 0
      %p162 = por %p160, %p161
      %p163 = scmp.le.s32.totalorder 1, %s14
      %p164 = scmp.lt.s32.totalorder %s14, 3
      %p165 = pnand %p163, %p164
      %p166 = pneg %p165
      // Predicated region
      $region9: #{residual_block_forward.7} parent=5 // pred_check
        _
      $region10: #{residual_block_forward.7} parent=5 // pred_check_branch
        %168 = sbr.rel (%p165) target = $region12
      $region11: #{residual_block_forward.7} parent=5 // pred_region
        %s169 = ssub.s32 %s14, 1
        // Predicated region
        $region13: #{residual_block_forward.7} parent=11 // pred_check
          %p170 = pneg %p61
        $region14: #{residual_block_forward.7} parent=11 // pred_check_branch
          %172 = sbr.rel (%p170) target = $region16
        $region15: #{residual_block_forward.7} parent=11 // pred_region
          _
        $region16: #{residual_block_forward.7} parent=11 // pred_fallthru
          _
        // Predicated region
        $region17: #{residual_block_forward.7} parent=11 // pred_check
          %p173 = pneg %p82
        $region18: #{residual_block_forward.7} parent=11 // pred_check_branch
          %175 = sbr.rel (%p173) target = $region20
        $region19: #{residual_block_forward.7} parent=11 // pred_region
          _
        $region20: #{residual_block_forward.7} parent=11 // pred_fallthru
          _
        // Predicated region
        $region21: #{residual_block_forward.7} parent=11 // pred_check
          %p176 = pneg %p103
        $region22: #{residual_block_forward.7} parent=11 // pred_check_branch
          %178 = sbr.rel (%p176) target = $region24
        $region23: #{residual_block_forward.7} parent=11 // pred_region
          _
        $region24: #{residual_block_forward.7} parent=11 // pred_fallthru
          _
      $region12: #{residual_block_forward.7} parent=5 // pred_fallthru
        _
      %p179 = scmp.lt.s32.totalorder %s14, 2
      // Predicated region
      $region25: #{residual_block_forward.7} parent=5 // pred_check
        %p180 = pneg %p179
      $region26: #{residual_block_forward.7} parent=5 // pred_check_branch
        %182 = sbr.rel (%p180) target = $region28
      $region27: #{residual_block_forward.7} parent=5 // pred_region
        // Predicated region
        $region29: #{residual_block_forward.7} parent=27 // pred_check
          %p183 = pneg %p34
        $region30: #{residual_block_forward.7} parent=27 // pred_check_branch
          %185 = sbr.rel (%p183) target = $region32
        $region31: #{residual_block_forward.7} parent=27 // pred_region
          %s186 = smul.u32 32, %s14
          %p187 = scmp.lt.s32.totalorder %s186, 63
          %s188 = scalar_select %p187, %s186, 63
          %s189 = smul.addr %s188, 8
          %s190 = scalar_lea.vmem %s0, %s189
          %s191 = smul.u32 32, %s14
        $region32: #{residual_block_forward.7} parent=27 // pred_fallthru
          _
        // Predicated region
        $region33: #{residual_block_forward.7} parent=27 // pred_check
          %p192 = pneg %p123
        $region34: #{residual_block_forward.7} parent=27 // pred_check_branch
          %194 = sbr.rel (%p192) target = $region36
        $region35: #{residual_block_forward.7} parent=27 // pred_region
          %s195 = smul.u32 32, %s14
          %p196 = scmp.lt.s32.totalorder %s195, 63
          %s197 = scalar_select %p196, %s195, 63
          %s198 = smul.addr %s197, 8
          %s199 = scalar_lea.vmem %s4, %s198
          %s200 = smul.u32 32, %s14
        $region36: #{residual_block_forward.7} parent=27 // pred_fallthru
          _
      $region28: #{residual_block_forward.7} parent=5 // pred_fallthru
        _
      %p201 = scmp.le.s32.totalorder 1, %s14
      %p202 = scmp.lt.s32.totalorder %s14, 3
      %p203 = pnand %p201, %p202
      %p204 = pneg %p203
      // Predicated region
      $region37: #{residual_block_forward.7} parent=5 // pred_check
        _
      $region38: #{residual_block_forward.7} parent=5 // pred_check_branch
        %206 = sbr.rel (%p203) target = $region40
      $region39: #{residual_block_forward.7} parent=5 // pred_region
        %s207 = ssub.s32 %s14, 1
        %s208 = smul.u32 32, %s19
        %p209 = scmp.lt.s32.totalorder %s208, 63
        %s210 = scalar_select %p209, %s208, 63
        %s211 = smul.addr %s210, 8
        %s212 = scalar_lea.vmem %s0, %s211
        %p213 = pneg %p40
        %p214 = pneg %p37
        %p215 = pneg %p61
        %p216 = pneg %p58
        %p217 = pneg %p82
        %p218 = pneg %p79
        %p219 = pneg %p103
        %p220 = pneg %p100
        %s221 = smul.u32 32, %s19
        %p222 = scmp.lt.s32.totalorder %s221, 63
        %s223 = scalar_select %p222, %s221, 63
        %s224 = smul.addr %s223, 8
        %s225 = scalar_lea.vmem %s4, %s224
        %p226 = pneg %p129
        %p227 = pneg %p126
        %p228 = pneg %p155
        %p229 = pneg %p152
        %s230 = sand.u32 %s142, 1
        %s231 = scalar_lea.sflag [#allocation3], %s230
        %s232 = sand.u32 %s142, 1
        %s233 = smul.addr %s232, 256
        %s234 = scalar_lea.vmem [#allocation2], %s233
        %s235 = smul.u32 32, %s19
        %p236 = scmp.lt.s32.totalorder %s235, 63
        %s237 = scalar_select %p236, %s235, 63
        %s238 = smul.addr %s237, 8
        %s239 = scalar_lea.vmem %s0, %s238
        %s240 = smul.u32 32, %s19
        %s241 = smul.u32 32, %s19
        %p242 = scmp.lt.s32.totalorder %s241, 63
        %s243 = scalar_select %p242, %s241, 63
        %s244 = smul.addr %s243, 8
        %s245 = scalar_lea.vmem %s4, %s244
        %s246 = smul.u32 32, %s19
        %s247 = smul.u32 32, %s19
        %v248 = vld [vmem:[%s1] sm:$0x1]
        %v249 = vmul.f32 %v248, 0.001953125
        %v250 = vld [vmem:[%s1 + $0x1] sm:$0x1]
        %v251 = vmul.f32 %v250, 0.001953125
        %v252 = vmul.f32 %v249, %v249
        %v253 = vsub.f32 %v251, %v252
        %v254 = vmax.f32 %v253, 0.0
        %v255 = vadd.f32 %v254, 1e-05
        %v256 = vrsqrt.pop %v255
        %v257 = vmul.f32 %v256, %v255
        %v258 = vmul.f32 %v257, %v256
        %v259 = vmul.f32 0.5, %v258
        %v260 = vsub.f32 1.5, %v259
        %v261 = vmul.f32 %v256, %v260
        %vm262 = vweird.f32 %v255
        %vm263 = vweird.f32 %v256
        %vm264 = vmor %vm262, %vm263
        %v265 = vsel %vm264, %v256, %v261
        %v266 = vld [vmem:[%s2] sm:$0x1]
        %v267 = vmul.f32 %v265, %v266
        %v268 = vld [vmem:[%s3] sm:$0x1]
        %v269 = vmul.f32 %v249, %v267
        %v270 = vsub.f32 %v268, %v269
        %v271 = vld [vmem:[%s239] sm:$0xff]
        %v272 = vld [vmem:[%s239 + $0x8] sm:$0xff]
        %v273 = vld [vmem:[%s239 + $0x10] sm:$0xff]
        %v274 = vld [vmem:[%s239 + $0x18] sm:$0xff]
        %v275 = vld [vmem:[%s239 + $0x20] sm:$0xff]
        %v276 = vld [vmem:[%s239 + $0x28] sm:$0xff]
        %v277 = vld [vmem:[%s239 + $0x30] sm:$0xff]
        %v278 = vld [vmem:[%s239 + $0x38] sm:$0xff]
        %v279 = vld [vmem:[%s239 + $0x40] sm:$0xff]
        %v280 = vld [vmem:[%s239 + $0x48] sm:$0xff]
        %v281 = vld [vmem:[%s239 + $0x50] sm:$0xff]
        %v282 = vld [vmem:[%s239 + $0x58] sm:$0xff]
        %v283 = vld [vmem:[%s239 + $0x60] sm:$0xff]
        %v284 = vld [vmem:[%s239 + $0x68] sm:$0xff]
        %v285 = vld [vmem:[%s239 + $0x70] sm:$0xff]
        %v286 = vld [vmem:[%s239 + $0x78] sm:$0xff]
        %v287 = vld [vmem:[%s239 + $0x80] sm:$0xff]
        %v288 = vld [vmem:[%s239 + $0x88] sm:$0xff]
        %v289 = vld [vmem:[%s239 + $0x90] sm:$0xff]
        %v290 = vld [vmem:[%s239 + $0x98] sm:$0xff]
        %v291 = vld [vmem:[%s239 + $0xa0] sm:$0xff]
        %v292 = vld [vmem:[%s239 + $0xa8] sm:$0xff]
        %v293 = vld [vmem:[%s239 + $0xb0] sm:$0xff]
        %v294 = vld [vmem:[%s239 + $0xb8] sm:$0xff]
        %v295 = vld [vmem:[%s239 + $0xc0] sm:$0xff]
        %v296 = vld [vmem:[%s239 + $0xc8] sm:$0xff]
        %v297 = vld [vmem:[%s239 + $0xd0] sm:$0xff]
        %v298 = vld [vmem:[%s239 + $0xd8] sm:$0xff]
        %v299 = vld [vmem:[%s239 + $0xe0] sm:$0xff]
        %v300 = vld [vmem:[%s239 + $0xe8] sm:$0xff]
        %v301 = vld [vmem:[%s239 + $0xf0] sm:$0xff]
        %v302 = vld [vmem:[%s239 + $0xf8] sm:$0xff]
        %v303 = vperm.slane %v267, 0
        %v304 = vmul.f32 %v271, %v303
        %v305 = vmul.f32 %v272, %v303
        %v306 = vmul.f32 %v273, %v303
        %v307 = vmul.f32 %v274, %v303
        %v308 = vmul.f32 %v275, %v303
        %v309 = vmul.f32 %v276, %v303
        %v310 = vmul.f32 %v277, %v303
        %v311 = vmul.f32 %v278, %v303
        %v312 = vmul.f32 %v279, %v303
        %v313 = vmul.f32 %v280, %v303
        %v314 = vmul.f32 %v281, %v303
        %v315 = vmul.f32 %v282, %v303
        %v316 = vmul.f32 %v283, %v303
        %v317 = vmul.f32 %v284, %v303
        %v318 = vmul.f32 %v285, %v303
        %v319 = vmul.f32 %v286, %v303
        %v320 = vmul.f32 %v287, %v303
        %v321 = vmul.f32 %v288, %v303
        %v322 = vmul.f32 %v289, %v303
        %v323 = vmul.f32 %v290, %v303
        %v324 = vmul.f32 %v291, %v303
        %v325 = vmul.f32 %v292, %v303
        %v326 = vmul.f32 %v293, %v303
        %v327 = vmul.f32 %v294, %v303
        %v328 = vmul.f32 %v295, %v303
        %v329 = vmul.f32 %v296, %v303
        %v330 = vmul.f32 %v297, %v303
        %v331 = vmul.f32 %v298, %v303
        %v332 = vmul.f32 %v299, %v303
        %v333 = vmul.f32 %v300, %v303
        %v334 = vmul.f32 %v301, %v303
        %v335 = vmul.f32 %v302, %v303
        %v337 = vperm.slane %v270, 0
        %v339 = vadd.f32 %v304, %v337
        %v340 = vadd.f32 %v305, %v337
        %v341 = vadd.f32 %v306, %v337
        %v342 = vadd.f32 %v307, %v337
        %v343 = vadd.f32 %v308, %v337
        %v344 = vadd.f32 %v309, %v337
        %v345 = vadd.f32 %v310, %v337
        %v346 = vadd.f32 %v311, %v337
        %v347 = vadd.f32 %v312, %v337
        %v348 = vadd.f32 %v313, %v337
        %v349 = vadd.f32 %v314, %v337
        %v350 = vadd.f32 %v315, %v337
        %v351 = vadd.f32 %v316, %v337
        %v352 = vadd.f32 %v317, %v337
        %v353 = vadd.f32 %v318, %v337
        %v354 = vadd.f32 %v319, %v337
        %v355 = vadd.f32 %v320, %v337
        %v356 = vadd.f32 %v321, %v337
        %v357 = vadd.f32 %v322, %v337
        %v358 = vadd.f32 %v323, %v337
        %v359 = vadd.f32 %v324, %v337
        %v360 = vadd.f32 %v325, %v337
        %v361 = vadd.f32 %v326, %v337
        %v362 = vadd.f32 %v327, %v337
        %v363 = vadd.f32 %v328, %v337
        %v364 = vadd.f32 %v329, %v337
        %v365 = vadd.f32 %v330, %v337
        %v366 = vadd.f32 %v331, %v337
        %v367 = vadd.f32 %v332, %v337
        %v368 = vadd.f32 %v333, %v337
        %v369 = vadd.f32 %v334, %v337
        %v370 = vadd.f32 %v335, %v337
        %v371 = vld [vmem:[%s245] sm:$0xff]
        %v372 = vld [vmem:[%s245 + $0x8] sm:$0xff]
        %v373 = vld [vmem:[%s245 + $0x10] sm:$0xff]
        %v374 = vld [vmem:[%s245 + $0x18] sm:$0xff]
        %v375 = vld [vmem:[%s245 + $0x20] sm:$0xff]
        %v376 = vld [vmem:[%s245 + $0x28] sm:$0xff]
        %v377 = vld [vmem:[%s245 + $0x30] sm:$0xff]
        %v378 = vld [vmem:[%s245 + $0x38] sm:$0xff]
        %v379 = vld [vmem:[%s245 + $0x40] sm:$0xff]
        %v380 = vld [vmem:[%s245 + $0x48] sm:$0xff]
        %v381 = vld [vmem:[%s245 + $0x50] sm:$0xff]
        %v382 = vld [vmem:[%s245 + $0x58] sm:$0xff]
        %v383 = vld [vmem:[%s245 + $0x60] sm:$0xff]
        %v384 = vld [vmem:[%s245 + $0x68] sm:$0xff]
        %v385 = vld [vmem:[%s245 + $0x70] sm:$0xff]
        %v386 = vld [vmem:[%s245 + $0x78] sm:$0xff]
        %v387 = vld [vmem:[%s245 + $0x80] sm:$0xff]
        %v388 = vld [vmem:[%s245 + $0x88] sm:$0xff]
        %v389 = vld [vmem:[%s245 + $0x90] sm:$0xff]
        %v390 = vld [vmem:[%s245 + $0x98] sm:$0xff]
        %v391 = vld [vmem:[%s245 + $0xa0] sm:$0xff]
        %v392 = vld [vmem:[%s245 + $0xa8] sm:$0xff]
        %v393 = vld [vmem:[%s245 + $0xb0] sm:$0xff]
        %v394 = vld [vmem:[%s245 + $0xb8] sm:$0xff]
        %v395 = vld [vmem:[%s245 + $0xc0] sm:$0xff]
        %v396 = vld [vmem:[%s245 + $0xc8] sm:$0xff]
        %v397 = vld [vmem:[%s245 + $0xd0] sm:$0xff]
        %v398 = vld [vmem:[%s245 + $0xd8] sm:$0xff]
        %v399 = vld [vmem:[%s245 + $0xe0] sm:$0xff]
        %v400 = vld [vmem:[%s245 + $0xe8] sm:$0xff]
        %v401 = vld [vmem:[%s245 + $0xf0] sm:$0xff]
        %v402 = vld [vmem:[%s245 + $0xf8] sm:$0xff]
        %v403 = vadd.f32 %v339, %v371
        %v404 = vadd.f32 %v340, %v372
        %v405 = vadd.f32 %v341, %v373
        %v406 = vadd.f32 %v342, %v374
        %v407 = vadd.f32 %v343, %v375
        %v408 = vadd.f32 %v344, %v376
        %v409 = vadd.f32 %v345, %v377
        %v410 = vadd.f32 %v346, %v378
        %v411 = vadd.f32 %v347, %v379
        %v412 = vadd.f32 %v348, %v380
        %v413 = vadd.f32 %v349, %v381
        %v414 = vadd.f32 %v350, %v382
        %v415 = vadd.f32 %v351, %v383
        %v416 = vadd.f32 %v352, %v384
        %v417 = vadd.f32 %v353, %v385
        %v418 = vadd.f32 %v354, %v386
        %v419 = vadd.f32 %v355, %v387
        %v420 = vadd.f32 %v356, %v388
        %v421 = vadd.f32 %v357, %v389
        %v422 = vadd.f32 %v358, %v390
        %v423 = vadd.f32 %v359, %v391
        %v424 = vadd.f32 %v360, %v392
        %v425 = vadd.f32 %v361, %v393
        %v426 = vadd.f32 %v362, %v394
        %v427 = vadd.f32 %v363, %v395
        %v428 = vadd.f32 %v364, %v396
        %v429 = vadd.f32 %v365, %v397
        %v430 = vadd.f32 %v366, %v398
        %v431 = vadd.f32 %v367, %v399
        %v432 = vadd.f32 %v368, %v400
        %v433 = vadd.f32 %v369, %v401
        %v434 = vadd.f32 %v370, %v402
        %435 = vst [vmem:[%s234] sm:$0xff] %v403
        %436 = vst [vmem:[%s234 + $0x8] sm:$0xff] %v404
        %437 = vst [vmem:[%s234 + $0x10] sm:$0xff] %v405
        %438 = vst [vmem:[%s234 + $0x18] sm:$0xff] %v406
        %439 = vst [vmem:[%s234 + $0x20] sm:$0xff] %v407
        %440 = vst [vmem:[%s234 + $0x28] sm:$0xff] %v408
        %441 = vst [vmem:[%s234 + $0x30] sm:$0xff] %v409
        %442 = vst [vmem:[%s234 + $0x38] sm:$0xff] %v410
        %443 = vst [vmem:[%s234 + $0x40] sm:$0xff] %v411
        %444 = vst [vmem:[%s234 + $0x48] sm:$0xff] %v412
        %445 = vst [vmem:[%s234 + $0x50] sm:$0xff] %v413
        %446 = vst [vmem:[%s234 + $0x58] sm:$0xff] %v414
        %447 = vst [vmem:[%s234 + $0x60] sm:$0xff] %v415
        %448 = vst [vmem:[%s234 + $0x68] sm:$0xff] %v416
        %449 = vst [vmem:[%s234 + $0x70] sm:$0xff] %v417
        %450 = vst [vmem:[%s234 + $0x78] sm:$0xff] %v418
        %451 = vst [vmem:[%s234 + $0x80] sm:$0xff] %v419
        %452 = vst [vmem:[%s234 + $0x88] sm:$0xff] %v420
        %453 = vst [vmem:[%s234 + $0x90] sm:$0xff] %v421
        %454 = vst [vmem:[%s234 + $0x98] sm:$0xff] %v422
        %455 = vst [vmem:[%s234 + $0xa0] sm:$0xff] %v423
        %456 = vst [vmem:[%s234 + $0xa8] sm:$0xff] %v424
        %457 = vst [vmem:[%s234 + $0xb0] sm:$0xff] %v425
        %458 = vst [vmem:[%s234 + $0xb8] sm:$0xff] %v426
        %459 = vst [vmem:[%s234 + $0xc0] sm:$0xff] %v427
        %460 = vst [vmem:[%s234 + $0xc8] sm:$0xff] %v428
        %461 = vst [vmem:[%s234 + $0xd0] sm:$0xff] %v429
        %462 = vst [vmem:[%s234 + $0xd8] sm:$0xff] %v430
        %463 = vst [vmem:[%s234 + $0xe0] sm:$0xff] %v431
        %464 = vst [vmem:[%s234 + $0xe8] sm:$0xff] %v432
        %465 = vst [vmem:[%s234 + $0xf0] sm:$0xff] %v433
        %466 = vst [vmem:[%s234 + $0xf8] sm:$0xff] %v434
        %s467 = sand.u32 %s142, 1
        %s468 = scalar_lea.sflag [#allocation3], %s467
        %s469 = sand.u32 %s142, 1
        %s470 = smul.addr %s469, 256
        %s471 = scalar_lea.vmem [#allocation2], %s470
        // Predicated region
        $region41: #{residual_block_forward.7} parent=39 // pred_check
          %p472 = pneg %p152
        $region42: #{residual_block_forward.7} parent=39 // pred_check_branch
          %474 = sbr.rel (%p472) target = $region44
        $region43: #{residual_block_forward.7} parent=39 // pred_region
          %s475 = smul.u32 32, %s19
          %477 = vsyncadd %s468, 0
          %s478 = smul.addr %s475, 8
          %s479 = scalar_lea.hbm %s5, %s478
          %s480 = sshll.u32 %s471, 4
          %s481 = int_to_ptr.vmem [resolvable:$true] %s480
          %s482 = sshll.u32 %s479, 4
          %s483 = int_to_ptr.hbm [resolvable:$true] %s482
          %488 = dma.vmem_to_hbm [thread:$0]  %s481, 4096, %s483, %s468, 128, 128, 8
        $region44: #{residual_block_forward.7} parent=39 // pred_fallthru
          _
      $region40: #{residual_block_forward.7} parent=5 // pred_fallthru
        _
      %p489 = scmp.le.s32.totalorder 2, %s14
      // Predicated region
      $region45: #{residual_block_forward.7} parent=5 // pred_check
        %p490 = pneg %p489
      $region46: #{residual_block_forward.7} parent=5 // pred_check_branch
        %492 = sbr.rel (%p490) target = $region48
      $region47: #{residual_block_forward.7} parent=5 // pred_region
        %s493 = ssub.s32 %s14, 2
        // Predicated region
        $region49: #{residual_block_forward.7} parent=47 // pred_check
          %p494 = pneg %p158
        $region50: #{residual_block_forward.7} parent=47 // pred_check_branch
          %496 = sbr.rel (%p494) target = $region52
        $region51: #{residual_block_forward.7} parent=47 // pred_region
          %s497 = sand.u32 %s143, 1
          %s498 = scalar_lea.sflag [#allocation3], %s497
          %s499 = sand.u32 %s143, 1
          %s500 = smul.addr %s499, 256
          %s501 = scalar_lea.vmem [#allocation2], %s500
          %503 = dma.done %s498, 4096
        $region52: #{residual_block_forward.7} parent=47 // pred_fallthru
          _
      $region48: #{residual_block_forward.7} parent=5 // pred_fallthru
        _
    $region6: #{residual_block_forward.7} parent=1 // loop_footer
      %s18 = sadd.s32 1, %s14
    $region7: #{residual_block_forward.7} parent=1 // loop_footer_branch
      %13 = sbr.rel target = $region3
    $region8: #{residual_block_forward.7} parent=1 // loop_exit
      _
    %504 = vsyncpa [#allocation3], 1
    %s505 = scalar_lea.sflag [#allocation3], 1
    %506 = vsyncpa %s505, 1

</llo_original>
